<compile_context>
chip_gen: v6e
topology: v6e:2x2x1
jax: 0.10.0
libtpu: 0.0.40
codegen_flags: <defaults>
</compile_context>

<pallas_src>
import functools

import jax
import jax.numpy as jnp
from jax.experimental import pallas as pl
from jax.experimental.pallas import tpu as pltpu


def _round_up(n, m):
    return ((n + m - 1) // m) * m


def _pad_to(x, shape):
    pads = [(0, t - s) for s, t in zip(x.shape, shape)]
    return jnp.pad(x, pads)


def _vae_kernel(max_action, l_p,
                sa_ref, s_ref, noise_ref,
                we1_ref, be1_ref, we2_ref, be2_ref,
                wh_ref, bh_ref,
                wd1s_ref, wd1z_ref, bd1_ref,
                wd2_ref, bd2_ref, wd3_ref, bd3_ref,
                u_ref, mean_ref, std_ref):
    f32 = jnp.float32
    bf16 = jnp.bfloat16

    def mm(x_f32, w_ref):
        # bf16 x bf16 MXU matmul with f32 accumulation.
        return jnp.dot(x_f32.astype(bf16), w_ref[...],
                       preferred_element_type=f32)

    # ---- encoder ----
    h1 = jnp.maximum(mm(sa_ref[...], we1_ref) + be1_ref[...], 0.0)
    h2 = jnp.maximum(mm(h1, we2_ref) + be2_ref[...], 0.0)

    # fused mean / log_std heads: one K=768 matmul, lane-aligned slices.
    heads = mm(h2, wh_ref) + bh_ref[...]
    mean = heads[:, :l_p]
    log_std = jnp.clip(heads[:, l_p:], -4.0, 15.0)
    std = jnp.exp(log_std)

    # ---- reparameterize ----
    z = mean + std * noise_ref[...]

    # ---- decoder: d1([state, z]) expressed as split matmuls (no concat) ----
    a1 = jnp.maximum(
        mm(s_ref[...], wd1s_ref) + mm(z, wd1z_ref) + bd1_ref[...], 0.0)
    a2 = jnp.maximum(mm(a1, wd2_ref) + bd2_ref[...], 0.0)
    u = max_action * jnp.tanh(mm(a2, wd3_ref) + bd3_ref[...])

    u_ref[...] = u
    mean_ref[...] = mean
    std_ref[...] = std


class VAEPallas:
    """Deterministically-initialized Pallas implementation of BEAR's VAE.forward."""

    HIDDEN = 750
    # Batch tile cap: weights (~3.4 MB bf16, double-buffered allocation) +
    # 2x I/O tiles + f32 activations stays well under 32 MiB for TILE_B=512,
    # which also fits v7x's 64 MiB physical VMEM comfortably.
    TILE_B_CAP = 512

    def __init__(self, state_dim, action_dim, latent_dim, max_action, key):
        self.state_dim = state_dim
        self.action_dim = action_dim
        self.latent_dim = latent_dim
        self.max_action = float(max_action)

        H = self.HIDDEN
        dims = [
            ("e1", state_dim + action_dim, H),
            ("e2", H, H),
            ("mean", H, latent_dim),
            ("log_std", H, latent_dim),
            ("d1", state_dim + latent_dim, H),
            ("d2", H, H),
            ("d3", H, action_dim),
        ]
        self.params = {}
        for name, fan_in, fan_out in dims:
            key, kw, kb = jax.random.split(key, 3)
            bound = 1.0 / jnp.sqrt(jnp.float32(fan_in))
            w = jax.random.uniform(kw, (fan_out, fan_in), jnp.float32, -bound, bound)
            b = jax.random.uniform(kb, (fan_out,), jnp.float32, -bound, bound)
            self.params[name] = (w, b)

        # padded sizes
        self.SA_P = _round_up(state_dim + action_dim, 128)
        self.S_P = _round_up(state_dim, 128)
        self.L_P = _round_up(latent_dim, 128)
        self.A_P = _round_up(action_dim, 128)
        self.H_P = _round_up(H, 128)

        # Padded / transposed / bf16-cast weights cached ONCE (hot-path saving).
        self._weights = self._build_padded_weights()

    def _build_padded_weights(self):
        p = self.params
        bf16 = jnp.bfloat16
        H_P, SA_P, S_P, L_P, A_P = self.H_P, self.SA_P, self.S_P, self.L_P, self.A_P

        def wt(name, in_p, out_p):
            w, b = p[name]
            return (_pad_to(w.T, (in_p, out_p)).astype(bf16),
                    _pad_to(b[None, :], (1, out_p)))

        we1, be1 = wt("e1", SA_P, H_P)
        we2, be2 = wt("e2", H_P, H_P)

        # fused heads: columns [0:L_P] -> mean, [L_P:2*L_P] -> log_std
        wm, bm = p["mean"]
        wls, bls = p["log_std"]
        wh = jnp.concatenate([_pad_to(wm.T, (H_P, L_P)),
                              _pad_to(wls.T, (H_P, L_P))], axis=1).astype(bf16)
        bh = jnp.concatenate([_pad_to(bm[None, :], (1, L_P)),
                              _pad_to(bls[None, :], (1, L_P))], axis=1)

        # split d1 weight into state-part and latent-part (columns of original W)
        wd1, bd1v = p["d1"]
        wd1s = _pad_to(wd1[:, :self.state_dim].T, (S_P, H_P)).astype(bf16)
        wd1z = _pad_to(wd1[:, self.state_dim:].T, (L_P, H_P)).astype(bf16)
        bd1 = _pad_to(bd1v[None, :], (1, H_P))

        wd2, bd2 = wt("d2", H_P, H_P)
        wd3, bd3 = wt("d3", H_P, A_P)
        return tuple(jax.device_put(x) for x in
                     (we1, be1, we2, be2, wh, bh,
                      wd1s, wd1z, bd1, wd2, bd2, wd3, bd3))

    def forward(self, state, action, noise):
        B = state.shape[0]
        B8 = _round_up(max(B, 1), 8)
        tile_b = min(self.TILE_B_CAP, B8)
        B_pad = _round_up(B8, tile_b)
        n_tiles = B_pad // tile_b

        sa = jnp.concatenate([state, action], axis=1).astype(jnp.float32)
        sa_p = _pad_to(sa, (B_pad, self.SA_P))
        s_p = _pad_to(state.astype(jnp.float32), (B_pad, self.S_P))
        n_p = _pad_to(noise.astype(jnp.float32), (B_pad, self.L_P))

        (we1, be1, we2, be2, wh, bh,
         wd1s, wd1z, bd1, wd2, bd2, wd3, bd3) = self._weights

        def row_spec(cols):
            # batch-tiled, pipelined across grid steps
            return pl.BlockSpec((tile_b, cols), lambda i: (i, 0))

        def w_spec(arr):
            # constant block index -> DMA'd once, VMEM-resident across the grid
            return pl.BlockSpec(arr.shape, lambda i: (0, 0))

        in_specs = [
            row_spec(self.SA_P), row_spec(self.S_P), row_spec(self.L_P),
            w_spec(we1), w_spec(be1), w_spec(we2), w_spec(be2),
            w_spec(wh), w_spec(bh),
            w_spec(wd1s), w_spec(wd1z), w_spec(bd1),
            w_spec(wd2), w_spec(bd2), w_spec(wd3), w_spec(bd3),
        ]
        out_specs = (row_spec(self.A_P), row_spec(self.L_P), row_spec(self.L_P))
        out_shapes = (
            jax.ShapeDtypeStruct((B_pad, self.A_P), jnp.float32),  # u
            jax.ShapeDtypeStruct((B_pad, self.L_P), jnp.float32),  # mean
            jax.ShapeDtypeStruct((B_pad, self.L_P), jnp.float32),  # std
        )

        kernel = functools.partial(_vae_kernel, self.max_action, self.L_P)
        u_p, mean_p, std_p = pl.pallas_call(
            kernel,
            grid=(n_tiles,),
            in_specs=in_specs,
            out_specs=out_specs,
            out_shape=out_shapes,
            compiler_params=pltpu.CompilerParams(
                dimension_semantics=("parallel",),
                vmem_limit_bytes=32 << 20),
        )(sa_p, s_p, n_p, we1, be1, we2, be2, wh, bh,
          wd1s, wd1z, bd1, wd2, bd2, wd3, bd3)

        u = u_p[:B, :self.action_dim]
        mean = mean_p[:B, :self.latent_dim]
        std = std_p[:B, :self.latent_dim]
        return u, mean, std

    # ---- references for verification ----
    def forward_ref_f32(self, state, action, noise):
        """Exact f32 reference (original torch semantics)."""
        def lin(name, x):
            w, b = self.params[name]
            return x @ w.T + b

        z = jax.nn.relu(lin("e1", jnp.concatenate([state, action], 1)))
        z = jax.nn.relu(lin("e2", z))
        mean = lin("mean", z)
        log_std = jnp.clip(lin("log_std", z), -4.0, 15.0)
        std = jnp.exp(log_std)
        zl = mean + std * noise
        a = jax.nn.relu(lin("d1", jnp.concatenate([state, zl], 1)))
        a = jax.nn.relu(lin("d2", a))
        u = self.max_action * jnp.tanh(lin("d3", a))
        return u, mean, std

    def forward_ref_bf16(self, state, action, noise):
        """Emulates the kernel's bf16-operand / f32-accumulate math."""
        bf = jnp.bfloat16
        f32 = jnp.float32

        def lin(name, x):
            w, b = self.params[name]
            return jnp.dot(x.astype(bf), w.T.astype(bf),
                           preferred_element_type=f32) + b

        z = jax.nn.relu(lin("e1", jnp.concatenate([state, action], 1)))
        z = jax.nn.relu(lin("e2", z))
        mean = lin("mean", z)
        log_std = jnp.clip(lin("log_std", z), -4.0, 15.0)
        std = jnp.exp(log_std)
        zl = mean + std * noise
        wd1, bd1 = self.params["d1"]
        ws, wz = wd1[:, :self.state_dim], wd1[:, self.state_dim:]
        a = jax.nn.relu(
            jnp.dot(state.astype(bf), ws.T.astype(bf), preferred_element_type=f32)
            + jnp.dot(zl.astype(bf), wz.T.astype(bf), preferred_element_type=f32)
            + bd1)
        a = jax.nn.relu(lin("d2", a))
        u = self.max_action * jnp.tanh(lin("d3", a))
        return u, mean, std


if __name__ == "__main__":
    state_dim, action_dim, latent_dim = 8, 4, 6
    max_action = 1.0
    batch = 2

    key = jax.random.PRNGKey(0)
    k_param, k_s, k_a, k_n = jax.random.split(key, 4)

    vae = VAEPallas(state_dim, action_dim, latent_dim, max_action, k_param)

    state = jax.random.normal(k_s, (batch, state_dim), jnp.float32)
    action = jax.random.normal(k_a, (batch, action_dim), jnp.float32)
    # noise corresponds to np.random.normal(0, 1, size=std.size()) in the torch
    # code; generated deterministically here and fed into the kernel.
    noise = jax.random.normal(k_n, (batch, latent_dim), jnp.float32)

    u, mean, std = vae.forward(state, action, noise)
    jax.block_until_ready((u, mean, std))

    assert u.shape == (batch, action_dim)
    assert mean.shape == (batch, latent_dim)
    assert std.shape == (batch, latent_dim)

    # tight check against a bf16-weight emulation of the kernel math
    u_b, m_b, s_b = vae.forward_ref_bf16(state, action, noise)
    assert jnp.allclose(u, u_b, atol=1e-3, rtol=1e-3)
    assert jnp.allclose(mean, m_b, atol=1e-3, rtol=1e-3)
    assert jnp.allclose(std, s_b, atol=1e-3, rtol=1e-3)

    # looser semantic check against the exact f32 reference (bf16 weight rounding)
    u_r, m_r, s_r = vae.forward_ref_f32(state, action, noise)
    assert jnp.allclose(u, u_r, atol=2e-2, rtol=2e-2)
    assert jnp.allclose(mean, m_r, atol=2e-2, rtol=2e-2)
    assert jnp.allclose(std, s_r, atol=2e-2, rtol=2e-2)

    print("KERNEL_OK")
</pallas_src>

<mosaic_0001>
module attributes {stable_mosaic.version = 11 : i64} {
  func.func @_vae_kernel(%arg0: i32, %arg1: memref<8x128xf32, #tpu.memory_space<vmem>>, %arg2: memref<8x128xf32, #tpu.memory_space<vmem>>, %arg3: memref<8x128xf32, #tpu.memory_space<vmem>>, %arg4: memref<128x768xbf16, #tpu.memory_space<vmem>>, %arg5: memref<1x768xf32, #tpu.memory_space<vmem>>, %arg6: memref<768x768xbf16, #tpu.memory_space<vmem>>, %arg7: memref<1x768xf32, #tpu.memory_space<vmem>>, %arg8: memref<768x256xbf16, #tpu.memory_space<vmem>>, %arg9: memref<1x256xf32, #tpu.memory_space<vmem>>, %arg10: memref<128x768xbf16, #tpu.memory_space<vmem>>, %arg11: memref<128x768xbf16, #tpu.memory_space<vmem>>, %arg12: memref<1x768xf32, #tpu.memory_space<vmem>>, %arg13: memref<768x768xbf16, #tpu.memory_space<vmem>>, %arg14: memref<1x768xf32, #tpu.memory_space<vmem>>, %arg15: memref<768x128xbf16, #tpu.memory_space<vmem>>, %arg16: memref<1x128xf32, #tpu.memory_space<vmem>>, %arg17: memref<8x128xf32, #tpu.memory_space<vmem>>, %arg18: memref<8x128xf32, #tpu.memory_space<vmem>>, %arg19: memref<8x128xf32, #tpu.memory_space<vmem>>) attributes {dimension_semantics = [#tpu.dimension_semantics<parallel>], iteration_bounds = array<i64: 1>, scalar_prefetch = 0 : i64, scratch_operands = 0 : i64, tpu.core_type = #tpu.core_type<tc>, window_params = [{transform_indices = @transform_0, window_bounds = array<i64: 8, 128>}, {transform_indices = @transform_1, window_bounds = array<i64: 8, 128>}, {transform_indices = @transform_2, window_bounds = array<i64: 8, 128>}, {pipeline_mode = #tpu.pipeline_mode<synchronous>, transform_indices = @transform_3, window_bounds = array<i64: 128, 768>}, {pipeline_mode = #tpu.pipeline_mode<synchronous>, transform_indices = @transform_4, window_bounds = array<i64: 1, 768>}, {pipeline_mode = #tpu.pipeline_mode<synchronous>, transform_indices = @transform_5, window_bounds = array<i64: 768, 768>}, {pipeline_mode = #tpu.pipeline_mode<synchronous>, transform_indices = @transform_6, window_bounds = array<i64: 1, 768>}, {pipeline_mode = #tpu.pipeline_mode<synchronous>, transform_indices = @transform_7, window_bounds = array<i64: 768, 256>}, {pipeline_mode = #tpu.pipeline_mode<synchronous>, transform_indices = @transform_8, window_bounds = array<i64: 1, 256>}, {pipeline_mode = #tpu.pipeline_mode<synchronous>, transform_indices = @transform_9, window_bounds = array<i64: 128, 768>}, {pipeline_mode = #tpu.pipeline_mode<synchronous>, transform_indices = @transform_10, window_bounds = array<i64: 128, 768>}, {pipeline_mode = #tpu.pipeline_mode<synchronous>, transform_indices = @transform_11, window_bounds = array<i64: 1, 768>}, {pipeline_mode = #tpu.pipeline_mode<synchronous>, transform_indices = @transform_12, window_bounds = array<i64: 768, 768>}, {pipeline_mode = #tpu.pipeline_mode<synchronous>, transform_indices = @transform_13, window_bounds = array<i64: 1, 768>}, {pipeline_mode = #tpu.pipeline_mode<synchronous>, transform_indices = @transform_14, window_bounds = array<i64: 768, 128>}, {pipeline_mode = #tpu.pipeline_mode<synchronous>, transform_indices = @transform_15, window_bounds = array<i64: 1, 128>}, {transform_indices = @transform_16, window_bounds = array<i64: 8, 128>}, {transform_indices = @transform_17, window_bounds = array<i64: 8, 128>}, {transform_indices = @transform_18, window_bounds = array<i64: 8, 128>}]} {
    %c0 = arith.constant 0 : index
    %c0_0 = arith.constant 0 : index
    %0 = vector.load %arg1[%c0, %c0_0] : memref<8x128xf32, #tpu.memory_space<vmem>>, vector<8x128xf32>
    %1 = arith.truncf %0 : vector<8x128xf32> to vector<8x128xbf16>
    %c0_1 = arith.constant 0 : index
    %c0_2 = arith.constant 0 : index
    %2 = vector.load %arg4[%c0_1, %c0_2] : memref<128x768xbf16, #tpu.memory_space<vmem>>, vector<128x768xbf16>
    %cst = arith.constant dense<0.000000e+00> : vector<8x768xf32>
    %3 = tpu.matmul %1, %2, %cst {dimension_numbers = #tpu.dot_dimension_numbers<[1], [0], [0], [1], [0, 0, 1, 1], [], []>} : vector<8x128xbf16>, vector<128x768xbf16>, vector<8x768xf32> -> vector<8x768xf32>
    %c0_3 = arith.constant 0 : index
    %c0_4 = arith.constant 0 : index
    %4 = vector.load %arg5[%c0_3, %c0_4] : memref<1x768xf32, #tpu.memory_space<vmem>>, vector<1x768xf32>
    %5 = vector.broadcast %4 : vector<1x768xf32> to vector<8x768xf32>
    %6 = arith.addf %3, %5 : vector<8x768xf32>
    %cst_5 = arith.constant 0.000000e+00 : f32
    %7 = vector.broadcast %cst_5 : f32 to vector<8x768xf32>
    %8 = arith.maximumf %6, %7 : vector<8x768xf32>
    %9 = arith.truncf %8 : vector<8x768xf32> to vector<8x768xbf16>
    %c0_6 = arith.constant 0 : index
    %c0_7 = arith.constant 0 : index
    %10 = vector.load %arg6[%c0_6, %c0_7] : memref<768x768xbf16, #tpu.memory_space<vmem>>, vector<768x768xbf16>
    %cst_8 = arith.constant dense<0.000000e+00> : vector<8x768xf32>
    %11 = tpu.matmul %9, %10, %cst_8 {dimension_numbers = #tpu.dot_dimension_numbers<[1], [0], [0], [1], [0, 0, 1, 1], [], []>} : vector<8x768xbf16>, vector<768x768xbf16>, vector<8x768xf32> -> vector<8x768xf32>
    %c0_9 = arith.constant 0 : index
    %c0_10 = arith.constant 0 : index
    %12 = vector.load %arg7[%c0_9, %c0_10] : memref<1x768xf32, #tpu.memory_space<vmem>>, vector<1x768xf32>
    %13 = vector.broadcast %12 : vector<1x768xf32> to vector<8x768xf32>
    %14 = arith.addf %11, %13 : vector<8x768xf32>
    %cst_11 = arith.constant 0.000000e+00 : f32
    %15 = vector.broadcast %cst_11 : f32 to vector<8x768xf32>
    %16 = arith.maximumf %14, %15 : vector<8x768xf32>
    %17 = arith.truncf %16 : vector<8x768xf32> to vector<8x768xbf16>
    %c0_12 = arith.constant 0 : index
    %c0_13 = arith.constant 0 : index
    %18 = vector.load %arg8[%c0_12, %c0_13] : memref<768x256xbf16, #tpu.memory_space<vmem>>, vector<768x256xbf16>
    %cst_14 = arith.constant dense<0.000000e+00> : vector<8x256xf32>
    %19 = tpu.matmul %17, %18, %cst_14 {dimension_numbers = #tpu.dot_dimension_numbers<[1], [0], [0], [1], [0, 0, 1, 1], [], []>} : vector<8x768xbf16>, vector<768x256xbf16>, vector<8x256xf32> -> vector<8x256xf32>
    %c0_15 = arith.constant 0 : index
    %c0_16 = arith.constant 0 : index
    %20 = vector.load %arg9[%c0_15, %c0_16] : memref<1x256xf32, #tpu.memory_space<vmem>>, vector<1x256xf32>
    %21 = vector.broadcast %20 : vector<1x256xf32> to vector<8x256xf32>
    %22 = arith.addf %19, %21 : vector<8x256xf32>
    %23 = vector.extract_strided_slice %22 {offsets = [0, 0], sizes = [8, 128], strides = [1, 1]} : vector<8x256xf32> to vector<8x128xf32>
    %24 = vector.extract_strided_slice %22 {offsets = [0, 128], sizes = [8, 128], strides = [1, 1]} : vector<8x256xf32> to vector<8x128xf32>
    %cst_17 = arith.constant -4.000000e+00 : f32
    %cst_18 = arith.constant 1.500000e+01 : f32
    %25 = vector.broadcast %cst_17 : f32 to vector<8x128xf32>
    %26 = arith.maximumf %25, %24 : vector<8x128xf32>
    %27 = vector.broadcast %cst_18 : f32 to vector<8x128xf32>
    %28 = arith.minimumf %27, %26 : vector<8x128xf32>
    %29 = math.exp %28 : vector<8x128xf32>
    %c0_19 = arith.constant 0 : index
    %c0_20 = arith.constant 0 : index
    %30 = vector.load %arg3[%c0_19, %c0_20] : memref<8x128xf32, #tpu.memory_space<vmem>>, vector<8x128xf32>
    %31 = arith.mulf %29, %30 : vector<8x128xf32>
    %32 = arith.addf %23, %31 : vector<8x128xf32>
    %c0_21 = arith.constant 0 : index
    %c0_22 = arith.constant 0 : index
    %33 = vector.load %arg2[%c0_21, %c0_22] : memref<8x128xf32, #tpu.memory_space<vmem>>, vector<8x128xf32>
    %34 = arith.truncf %33 : vector<8x128xf32> to vector<8x128xbf16>
    %c0_23 = arith.constant 0 : index
    %c0_24 = arith.constant 0 : index
    %35 = vector.load %arg10[%c0_23, %c0_24] : memref<128x768xbf16, #tpu.memory_space<vmem>>, vector<128x768xbf16>
    %cst_25 = arith.constant dense<0.000000e+00> : vector<8x768xf32>
    %36 = tpu.matmul %34, %35, %cst_25 {dimension_numbers = #tpu.dot_dimension_numbers<[1], [0], [0], [1], [0, 0, 1, 1], [], []>} : vector<8x128xbf16>, vector<128x768xbf16>, vector<8x768xf32> -> vector<8x768xf32>
    %37 = arith.truncf %32 : vector<8x128xf32> to vector<8x128xbf16>
    %c0_26 = arith.constant 0 : index
    %c0_27 = arith.constant 0 : index
    %38 = vector.load %arg11[%c0_26, %c0_27] : memref<128x768xbf16, #tpu.memory_space<vmem>>, vector<128x768xbf16>
    %cst_28 = arith.constant dense<0.000000e+00> : vector<8x768xf32>
    %39 = tpu.matmul %37, %38, %cst_28 {dimension_numbers = #tpu.dot_dimension_numbers<[1], [0], [0], [1], [0, 0, 1, 1], [], []>} : vector<8x128xbf16>, vector<128x768xbf16>, vector<8x768xf32> -> vector<8x768xf32>
    %40 = arith.addf %36, %39 : vector<8x768xf32>
    %c0_29 = arith.constant 0 : index
    %c0_30 = arith.constant 0 : index
    %41 = vector.load %arg12[%c0_29, %c0_30] : memref<1x768xf32, #tpu.memory_space<vmem>>, vector<1x768xf32>
    %42 = vector.broadcast %41 : vector<1x768xf32> to vector<8x768xf32>
    %43 = arith.addf %40, %42 : vector<8x768xf32>
    %cst_31 = arith.constant 0.000000e+00 : f32
    %44 = vector.broadcast %cst_31 : f32 to vector<8x768xf32>
    %45 = arith.maximumf %43, %44 : vector<8x768xf32>
    %46 = arith.truncf %45 : vector<8x768xf32> to vector<8x768xbf16>
    %c0_32 = arith.constant 0 : index
    %c0_33 = arith.constant 0 : index
    %47 = vector.load %arg13[%c0_32, %c0_33] : memref<768x768xbf16, #tpu.memory_space<vmem>>, vector<768x768xbf16>
    %cst_34 = arith.constant dense<0.000000e+00> : vector<8x768xf32>
    %48 = tpu.matmul %46, %47, %cst_34 {dimension_numbers = #tpu.dot_dimension_numbers<[1], [0], [0], [1], [0, 0, 1, 1], [], []>} : vector<8x768xbf16>, vector<768x768xbf16>, vector<8x768xf32> -> vector<8x768xf32>
    %c0_35 = arith.constant 0 : index
    %c0_36 = arith.constant 0 : index
    %49 = vector.load %arg14[%c0_35, %c0_36] : memref<1x768xf32, #tpu.memory_space<vmem>>, vector<1x768xf32>
    %50 = vector.broadcast %49 : vector<1x768xf32> to vector<8x768xf32>
    %51 = arith.addf %48, %50 : vector<8x768xf32>
    %cst_37 = arith.constant 0.000000e+00 : f32
    %52 = vector.broadcast %cst_37 : f32 to vector<8x768xf32>
    %53 = arith.maximumf %51, %52 : vector<8x768xf32>
    %54 = arith.truncf %53 : vector<8x768xf32> to vector<8x768xbf16>
    %c0_38 = arith.constant 0 : index
    %c0_39 = arith.constant 0 : index
    %55 = vector.load %arg15[%c0_38, %c0_39] : memref<768x128xbf16, #tpu.memory_space<vmem>>, vector<768x128xbf16>
    %cst_40 = arith.constant dense<0.000000e+00> : vector<8x128xf32>
    %56 = tpu.matmul %54, %55, %cst_40 {dimension_numbers = #tpu.dot_dimension_numbers<[1], [0], [0], [1], [0, 0, 1, 1], [], []>} : vector<8x768xbf16>, vector<768x128xbf16>, vector<8x128xf32> -> vector<8x128xf32>
    %c0_41 = arith.constant 0 : index
    %c0_42 = arith.constant 0 : index
    %57 = vector.load %arg16[%c0_41, %c0_42] : memref<1x128xf32, #tpu.memory_space<vmem>>, vector<1x128xf32>
    %58 = vector.broadcast %57 : vector<1x128xf32> to vector<8x128xf32>
    %59 = arith.addf %56, %58 : vector<8x128xf32>
    %60 = math.tanh %59 : vector<8x128xf32>
    %cst_43 = arith.constant 1.000000e+00 : f32
    %61 = vector.broadcast %cst_43 : f32 to vector<8x128xf32>
    %62 = arith.mulf %61, %60 : vector<8x128xf32>
    %c0_44 = arith.constant 0 : index
    %c0_45 = arith.constant 0 : index
    %63 = vector.load %arg17[%c0_44, %c0_45] : memref<8x128xf32, #tpu.memory_space<vmem>>, vector<8x128xf32>
    tpu.vector_store %arg17[%c0_44, %c0_45], %62 {strides = array<i32>} : memref<8x128xf32, #tpu.memory_space<vmem>>, vector<8x128xf32>,
    %c0_46 = arith.constant 0 : index
    %c0_47 = arith.constant 0 : index
    %64 = vector.load %arg18[%c0_46, %c0_47] : memref<8x128xf32, #tpu.memory_space<vmem>>, vector<8x128xf32>
    tpu.vector_store %arg18[%c0_46, %c0_47], %23 {strides = array<i32>} : memref<8x128xf32, #tpu.memory_space<vmem>>, vector<8x128xf32>,
    %c0_48 = arith.constant 0 : index
    %c0_49 = arith.constant 0 : index
    %65 = vector.load %arg19[%c0_48, %c0_49] : memref<8x128xf32, #tpu.memory_space<vmem>>, vector<8x128xf32>
    tpu.vector_store %arg19[%c0_48, %c0_49], %29 {strides = array<i32>} : memref<8x128xf32, #tpu.memory_space<vmem>>, vector<8x128xf32>,
    return
  }
  func.func @transform_0(%arg0: i32) -> (i32, i32) {
    %c0_i32 = arith.constant 0 : i32
    %c0_i32_0 = arith.constant 0 : i32
    return %arg0, %c0_i32 : i32, i32
  }
  func.func @transform_1(%arg0: i32) -> (i32, i32) {
    %c0_i32 = arith.constant 0 : i32
    %c0_i32_0 = arith.constant 0 : i32
    return %arg0, %c0_i32 : i32, i32
  }
  func.func @transform_2(%arg0: i32) -> (i32, i32) {
    %c0_i32 = arith.constant 0 : i32
    %c0_i32_0 = arith.constant 0 : i32
    return %arg0, %c0_i32 : i32, i32
  }
  func.func @transform_3(%arg0: i32) -> (i32, i32) {
    %c0_i32 = arith.constant 0 : i32
    %c0_i32_0 = arith.constant 0 : i32
    %c0_i32_1 = arith.constant 0 : i32
    return %c0_i32, %c0_i32_0 : i32, i32
  }
  func.func @transform_4(%arg0: i32) -> (i32, i32) {
    %c0_i32 = arith.constant 0 : i32
    %c0_i32_0 = arith.constant 0 : i32
    %c0_i32_1 = arith.constant 0 : i32
    return %c0_i32, %c0_i32_0 : i32, i32
  }
  func.func @transform_5(%arg0: i32) -> (i32, i32) {
    %c0_i32 = arith.constant 0 : i32
    %c0_i32_0 = arith.constant 0 : i32
    %c0_i32_1 = arith.constant 0 : i32
    return %c0_i32, %c0_i32_0 : i32, i32
  }
  func.func @transform_6(%arg0: i32) -> (i32, i32) {
    %c0_i32 = arith.constant 0 : i32
    %c0_i32_0 = arith.constant 0 : i32
    %c0_i32_1 = arith.constant 0 : i32
    return %c0_i32, %c0_i32_0 : i32, i32
  }
  func.func @transform_7(%arg0: i32) -> (i32, i32) {
    %c0_i32 = arith.constant 0 : i32
    %c0_i32_0 = arith.constant 0 : i32
    %c0_i32_1 = arith.constant 0 : i32
    return %c0_i32, %c0_i32_0 : i32, i32
  }
  func.func @transform_8(%arg0: i32) -> (i32, i32) {
    %c0_i32 = arith.constant 0 : i32
    %c0_i32_0 = arith.constant 0 : i32
    %c0_i32_1 = arith.constant 0 : i32
    return %c0_i32, %c0_i32_0 : i32, i32
  }
  func.func @transform_9(%arg0: i32) -> (i32, i32) {
    %c0_i32 = arith.constant 0 : i32
    %c0_i32_0 = arith.constant 0 : i32
    %c0_i32_1 = arith.constant 0 : i32
    return %c0_i32, %c0_i32_0 : i32, i32
  }
  func.func @transform_10(%arg0: i32) -> (i32, i32) {
    %c0_i32 = arith.constant 0 : i32
    %c0_i32_0 = arith.constant 0 : i32
    %c0_i32_1 = arith.constant 0 : i32
    return %c0_i32, %c0_i32_0 : i32, i32
  }
  func.func @transform_11(%arg0: i32) -> (i32, i32) {
    %c0_i32 = arith.constant 0 : i32
    %c0_i32_0 = arith.constant 0 : i32
    %c0_i32_1 = arith.constant 0 : i32
    return %c0_i32, %c0_i32_0 : i32, i32
  }
  func.func @transform_12(%arg0: i32) -> (i32, i32) {
    %c0_i32 = arith.constant 0 : i32
    %c0_i32_0 = arith.constant 0 : i32
    %c0_i32_1 = arith.constant 0 : i32
    return %c0_i32, %c0_i32_0 : i32, i32
  }
  func.func @transform_13(%arg0: i32) -> (i32, i32) {
    %c0_i32 = arith.constant 0 : i32
    %c0_i32_0 = arith.constant 0 : i32
    %c0_i32_1 = arith.constant 0 : i32
    return %c0_i32, %c0_i32_0 : i32, i32
  }
  func.func @transform_14(%arg0: i32) -> (i32, i32) {
    %c0_i32 = arith.constant 0 : i32
    %c0_i32_0 = arith.constant 0 : i32
    %c0_i32_1 = arith.constant 0 : i32
    return %c0_i32, %c0_i32_0 : i32, i32
  }
  func.func @transform_15(%arg0: i32) -> (i32, i32) {
    %c0_i32 = arith.constant 0 : i32
    %c0_i32_0 = arith.constant 0 : i32
    %c0_i32_1 = arith.constant 0 : i32
    return %c0_i32, %c0_i32_0 : i32, i32
  }
  func.func @transform_16(%arg0: i32) -> (i32, i32) {
    %c0_i32 = arith.constant 0 : i32
    %c0_i32_0 = arith.constant 0 : i32
    return %arg0, %c0_i32 : i32, i32
  }
  func.func @transform_17(%arg0: i32) -> (i32, i32) {
    %c0_i32 = arith.constant 0 : i32
    %c0_i32_0 = arith.constant 0 : i32
    return %arg0, %c0_i32 : i32, i32
  }
  func.func @transform_18(%arg0: i32) -> (i32, i32) {
    %c0_i32 = arith.constant 0 : i32
    %c0_i32_0 = arith.constant 0 : i32
    return %arg0, %c0_i32 : i32, i32
  }
}

</mosaic_0001>

<llo_original>
// kernel: tpu_custom_call.1
$region0: #{tpu_custom_call.1}
  #allocation0 [shape = 'u32[]', space=smem, size = 0x4, offset = 0x4, fixed_abs, tag = 'smem constant byte address 0x4 - core index']
  #allocation1 [shape = 'u32[144,128]{1,0:T(1,128)}', space=vmem, size = 0x12000, scoped, tag = 'internal scratch']
  %s0 = inlined_call_operand.hbm [shape: f32[8,128], index: 0, kind: input, shape index: {}]
  %s1 = inlined_call_operand.hbm [shape: f32[8,128], index: 1, kind: input, shape index: {}]
  %s2 = inlined_call_operand.hbm [shape: f32[8,128], index: 2, kind: input, shape index: {}]
  %s3 = inlined_call_operand.hbm [shape: bf16[128,768], index: 3, kind: input, shape index: {}]
  %s4 = inlined_call_operand.hbm [shape: f32[1,768], index: 4, kind: input, shape index: {}]
  %s5 = inlined_call_operand.hbm [shape: bf16[768,768], index: 5, kind: input, shape index: {}]
  %s6 = inlined_call_operand.hbm [shape: f32[1,768], index: 6, kind: input, shape index: {}]
  %s7 = inlined_call_operand.hbm [shape: bf16[768,256], index: 7, kind: input, shape index: {}]
  %s8 = inlined_call_operand.hbm [shape: f32[1,256], index: 8, kind: input, shape index: {}]
  %s9 = inlined_call_operand.hbm [shape: bf16[128,768], index: 9, kind: input, shape index: {}]
  %s10 = inlined_call_operand.hbm [shape: bf16[128,768], index: 10, kind: input, shape index: {}]
  %s11 = inlined_call_operand.hbm [shape: f32[1,768], index: 11, kind: input, shape index: {}]
  %s12 = inlined_call_operand.hbm [shape: bf16[768,768], index: 12, kind: input, shape index: {}]
  %s13 = inlined_call_operand.hbm [shape: f32[1,768], index: 13, kind: input, shape index: {}]
  %s14 = inlined_call_operand.hbm [shape: bf16[768,128], index: 14, kind: input, shape index: {}]
  %s15 = inlined_call_operand.hbm [shape: f32[1,128], index: 15, kind: input, shape index: {}]
  %s16 = inlined_call_operand.hbm [shape: f32[8,128], index: 16, kind: output, shape index: {0}]
  %s17 = inlined_call_operand.hbm [shape: f32[8,128], index: 17, kind: output, shape index: {1}]
  %s18 = inlined_call_operand.hbm [shape: f32[8,128], index: 18, kind: output, shape index: {2}]
  %19 = xla_tuple %s16, %s17, %s18
  %s20 = sld [smem:[#allocation0]]
  $region154: #{tpu_custom_call.1} parent=0
    _
  %s22 = ssub.s32 1, %s20
  %s23 = scalar_select 0, %s22, %s20
  $region1: #{tpu_custom_call.1} parent=0
    #allocation2 [shape = 'u8[4096]{0}', space=vmem, size = 0x1000, scoped, tag = 'input window, operand 0, single buffered']
    #allocation3 [shape = 's32[1]{0}', space=sflag, size = 0x4, scoped, tag = 'scoped memory for tpu_custom_call.1']
    #allocation4 [shape = 's32[1]{0}', space=sflag, size = 0x4, scoped, tag = 'scoped memory for tpu_custom_call.1']
    #allocation5 [shape = 'u8[4096]{0}', space=vmem, size = 0x1000, scoped, tag = 'input window, operand 1, single buffered']
    #allocation6 [shape = 's32[1]{0}', space=sflag, size = 0x4, scoped, tag = 'scoped memory for tpu_custom_call.1']
    #allocation7 [shape = 'u8[4096]{0}', space=vmem, size = 0x1000, scoped, tag = 'input window, operand 2, single buffered']
    #allocation8 [shape = 'u8[196608]{0}', space=vmem, size = 0x30000, scoped, tag = 'input window, operand 3, single buffered']
    #allocation9 [shape = 's32[1]{0}', space=sflag, size = 0x4, scoped, tag = 'scoped memory for tpu_custom_call.1']
    #allocation10 [shape = 'u8[3072]{0}', space=vmem, size = 0xc00, scoped, tag = 'input window, operand 4, single buffered']
    #allocation11 [shape = 'u8[1179648]{0}', space=vmem, size = 0x120000, scoped, tag = 'input window, operand 5, single buffered']
    #allocation12 [shape = 's32[1]{0}', space=sflag, size = 0x4, scoped, tag = 'scoped memory for tpu_custom_call.1']
    #allocation13 [shape = 'u8[3072]{0}', space=vmem, size = 0xc00, scoped, tag = 'input window, operand 6, single buffered']
    #allocation14 [shape = 'u8[393216]{0}', space=vmem, size = 0x60000, scoped, tag = 'input window, operand 7, single buffered']
    #allocation15 [shape = 's32[1]{0}', space=sflag, size = 0x4, scoped, tag = 'scoped memory for tpu_custom_call.1']
    #allocation16 [shape = 'u8[1024]{0}', space=vmem, size = 0x400, scoped, tag = 'input window, operand 8, single buffered']
    #allocation17 [shape = 'u8[196608]{0}', space=vmem, size = 0x30000, scoped, tag = 'input window, operand 9, single buffered']
    #allocation18 [shape = 's32[1]{0}', space=sflag, size = 0x4, scoped, tag = 'scoped memory for tpu_custom_call.1']
    #allocation19 [shape = 'u8[196608]{0}', space=vmem, size = 0x30000, scoped, tag = 'input window, operand 10, single buffered']
    #allocation20 [shape = 'u8[3072]{0}', space=vmem, size = 0xc00, scoped, tag = 'input window, operand 11, single buffered']
    #allocation21 [shape = 's32[1]{0}', space=sflag, size = 0x4, scoped, tag = 'scoped memory for tpu_custom_call.1']
    #allocation22 [shape = 'u8[1179648]{0}', space=vmem, size = 0x120000, scoped, tag = 'input window, operand 12, single buffered']
    #allocation23 [shape = 'u8[3072]{0}', space=vmem, size = 0xc00, scoped, tag = 'input window, operand 13, single buffered']
    #allocation24 [shape = 's32[1]{0}', space=sflag, size = 0x4, scoped, tag = 'scoped memory for tpu_custom_call.1']
    #allocation25 [shape = 'u8[196608]{0}', space=vmem, size = 0x30000, scoped, tag = 'input window, operand 14, single buffered']
    #allocation26 [shape = 'u8[512]{0}', space=vmem, size = 0x400, scoped, tag = 'input window, operand 15, single buffered']
    #allocation27 [shape = 's32[1]{0}', space=sflag, size = 0x4, scoped, tag = 'scoped memory for tpu_custom_call.1']
    #allocation28 [shape = 'u8[4096]{0}', space=vmem, size = 0x1000, scoped, tag = 'output window, operand 0, single buffered']
    #allocation29 [shape = 'u8[4096]{0}', space=vmem, size = 0x1000, scoped, tag = 'output window, operand 1, single buffered']
    #allocation30 [shape = 's32[1]{0}', space=sflag, size = 0x4, scoped, tag = 'scoped memory for tpu_custom_call.1']
    #allocation31 [shape = 'u8[4096]{0}', space=vmem, size = 0x1000, scoped, tag = 'output window, operand 2, single buffered']
    %24 = vsyncpa [#allocation3], 0
    %25 = vsyncpa [#allocation6], 0
    %26 = vsyncpa [#allocation9], 0
    %27 = vsyncpa [#allocation12], 0
    %28 = vsyncpa [#allocation15], 0
    %29 = vsyncpa [#allocation18], 0
    %30 = vsyncpa [#allocation21], 0
    %31 = vsyncpa [#allocation24], 0
    %32 = vsyncpa [#allocation27], 0
    %33 = vsyncpa [#allocation4], 0
    %34 = vsyncpa [#allocation30], 0
    // Predicated region
    $region2: #{tpu_custom_call.1} parent=1 // pred_check
      _
    $region3: #{tpu_custom_call.1} parent=1 // pred_check_branch
      %36 = sbr.rel (0) target = $region5
    $region4: #{tpu_custom_call.1} parent=1 // pred_region
      %s38 = ssub.s32 128, 128
      %39 = vsyncadd [#allocation3], %s38
      %s41 = sshll.u32 [#allocation2], 4
      %s42 = int_to_ptr.vmem [resolvable:$true] %s41
      %44 = dma.hbm_to_vmem [thread:$0]  %s0, 128, %s42, [#allocation3]
    $region5: #{tpu_custom_call.1} parent=1 // pred_fallthru
      _
    // Predicated region
    $region6: #{tpu_custom_call.1} parent=1 // pred_check
      _
    $region7: #{tpu_custom_call.1} parent=1 // pred_check_branch
      %46 = sbr.rel (0) target = $region9
    $region8: #{tpu_custom_call.1} parent=1 // pred_region
      %s48 = ssub.s32 128, 128
      %49 = vsyncadd [#allocation6], %s48
      %s51 = sshll.u32 [#allocation5], 4
      %s52 = int_to_ptr.vmem [resolvable:$true] %s51
      %54 = dma.hbm_to_vmem [thread:$0]  %s1, 128, %s52, [#allocation6]
    $region9: #{tpu_custom_call.1} parent=1 // pred_fallthru
      _
    // Predicated region
    $region10: #{tpu_custom_call.1} parent=1 // pred_check
      _
    $region11: #{tpu_custom_call.1} parent=1 // pred_check_branch
      %56 = sbr.rel (0) target = $region13
    $region12: #{tpu_custom_call.1} parent=1 // pred_region
      %s58 = ssub.s32 128, 128
      %59 = vsyncadd [#allocation6], %s58
      %s61 = sshll.u32 [#allocation7], 4
      %s62 = int_to_ptr.vmem [resolvable:$true] %s61
      %64 = dma.hbm_to_vmem [thread:$0]  %s2, 128, %s62, [#allocation6]
    $region13: #{tpu_custom_call.1} parent=1 // pred_fallthru
      _
    // Predicated region
    $region14: #{tpu_custom_call.1} parent=1 // pred_check
      _
    $region15: #{tpu_custom_call.1} parent=1 // pred_check_branch
      %66 = sbr.rel (0) target = $region17
    $region16: #{tpu_custom_call.1} parent=1 // pred_region
      %s68 = ssub.s32 6144, 6144
      %69 = vsyncadd [#allocation9], %s68
      %s70 = sshll.u32 [#allocation8], 4
      %s71 = int_to_ptr.vmem [resolvable:$true] %s70
      %76 = dma.hbm_to_vmem [thread:$0]  %s3, 6144, %s71, [#allocation9], 384, 384, 24
    $region17: #{tpu_custom_call.1} parent=1 // pred_fallthru
      _
    // Predicated region
    $region18: #{tpu_custom_call.1} parent=1 // pred_check
      _
    $region19: #{tpu_custom_call.1} parent=1 // pred_check_branch
      %78 = sbr.rel (0) target = $region21
    $region20: #{tpu_custom_call.1} parent=1 // pred_region
      %s80 = ssub.s32 96, 96
      %81 = vsyncadd [#allocation9], %s80
      %s83 = sshll.u32 [#allocation10], 4
      %s84 = int_to_ptr.vmem [resolvable:$true] %s83
      %86 = dma.hbm_to_vmem [thread:$0]  %s4, 96, %s84, [#allocation9]
    $region21: #{tpu_custom_call.1} parent=1 // pred_fallthru
      _
    // Predicated region
    $region22: #{tpu_custom_call.1} parent=1 // pred_check
      _
    $region23: #{tpu_custom_call.1} parent=1 // pred_check_branch
      %88 = sbr.rel (0) target = $region25
    $region24: #{tpu_custom_call.1} parent=1 // pred_region
      %s90 = ssub.s32 36864, 36864
      %91 = vsyncadd [#allocation12], %s90
      %s92 = sshll.u32 [#allocation11], 4
      %s93 = int_to_ptr.vmem [resolvable:$true] %s92
      %98 = dma.hbm_to_vmem [thread:$0]  %s5, 36864, %s93, [#allocation12], 384, 384, 24
    $region25: #{tpu_custom_call.1} parent=1 // pred_fallthru
      _
    // Predicated region
    $region26: #{tpu_custom_call.1} parent=1 // pred_check
      _
    $region27: #{tpu_custom_call.1} parent=1 // pred_check_branch
      %100 = sbr.rel (0) target = $region29
    $region28: #{tpu_custom_call.1} parent=1 // pred_region
      %s102 = ssub.s32 96, 96
      %103 = vsyncadd [#allocation12], %s102
      %s105 = sshll.u32 [#allocation13], 4
      %s106 = int_to_ptr.vmem [resolvable:$true] %s105
      %108 = dma.hbm_to_vmem [thread:$0]  %s6, 96, %s106, [#allocation12]
    $region29: #{tpu_custom_call.1} parent=1 // pred_fallthru
      _
    // Predicated region
    $region30: #{tpu_custom_call.1} parent=1 // pred_check
      _
    $region31: #{tpu_custom_call.1} parent=1 // pred_check_branch
      %110 = sbr.rel (0) target = $region33
    $region32: #{tpu_custom_call.1} parent=1 // pred_region
      %s112 = ssub.s32 12288, 12288
      %113 = vsyncadd [#allocation15], %s112
      %s114 = sshll.u32 [#allocation14], 4
      %s115 = int_to_ptr.vmem [resolvable:$true] %s114
      %120 = dma.hbm_to_vmem [thread:$0]  %s7, 12288, %s115, [#allocation15], 128, 128, 8
    $region33: #{tpu_custom_call.1} parent=1 // pred_fallthru
      _
    // Predicated region
    $region34: #{tpu_custom_call.1} parent=1 // pred_check
      _
    $region35: #{tpu_custom_call.1} parent=1 // pred_check_branch
      %122 = sbr.rel (0) target = $region37
    $region36: #{tpu_custom_call.1} parent=1 // pred_region
      %s124 = ssub.s32 32, 32
      %125 = vsyncadd [#allocation15], %s124
      %s127 = sshll.u32 [#allocation16], 4
      %s128 = int_to_ptr.vmem [resolvable:$true] %s127
      %130 = dma.hbm_to_vmem [thread:$0]  %s8, 32, %s128, [#allocation15]
    $region37: #{tpu_custom_call.1} parent=1 // pred_fallthru
      _
    // Predicated region
    $region38: #{tpu_custom_call.1} parent=1 // pred_check
      _
    $region39: #{tpu_custom_call.1} parent=1 // pred_check_branch
      %132 = sbr.rel (0) target = $region41
    $region40: #{tpu_custom_call.1} parent=1 // pred_region
      %s134 = ssub.s32 6144, 6144
      %135 = vsyncadd [#allocation18], %s134
      %s136 = sshll.u32 [#allocation17], 4
      %s137 = int_to_ptr.vmem [resolvable:$true] %s136
      %142 = dma.hbm_to_vmem [thread:$0]  %s9, 6144, %s137, [#allocation18], 384, 384, 24
    $region41: #{tpu_custom_call.1} parent=1 // pred_fallthru
      _
    // Predicated region
    $region42: #{tpu_custom_call.1} parent=1 // pred_check
      _
    $region43: #{tpu_custom_call.1} parent=1 // pred_check_branch
      %144 = sbr.rel (0) target = $region45
    $region44: #{tpu_custom_call.1} parent=1 // pred_region
      %s146 = ssub.s32 6144, 6144
      %147 = vsyncadd [#allocation18], %s146
      %s148 = sshll.u32 [#allocation19], 4
      %s149 = int_to_ptr.vmem [resolvable:$true] %s148
      %154 = dma.hbm_to_vmem [thread:$0]  %s10, 6144, %s149, [#allocation18], 384, 384, 24
    $region45: #{tpu_custom_call.1} parent=1 // pred_fallthru
      _
    // Predicated region
    $region46: #{tpu_custom_call.1} parent=1 // pred_check
      _
    $region47: #{tpu_custom_call.1} parent=1 // pred_check_branch
      %156 = sbr.rel (0) target = $region49
    $region48: #{tpu_custom_call.1} parent=1 // pred_region
      %s158 = ssub.s32 96, 96
      %159 = vsyncadd [#allocation21], %s158
      %s161 = sshll.u32 [#allocation20], 4
      %s162 = int_to_ptr.vmem [resolvable:$true] %s161
      %164 = dma.hbm_to_vmem [thread:$0]  %s11, 96, %s162, [#allocation21]
    $region49: #{tpu_custom_call.1} parent=1 // pred_fallthru
      _
    // Predicated region
    $region50: #{tpu_custom_call.1} parent=1 // pred_check
      _
    $region51: #{tpu_custom_call.1} parent=1 // pred_check_branch
      %166 = sbr.rel (0) target = $region53
    $region52: #{tpu_custom_call.1} parent=1 // pred_region
      %s168 = ssub.s32 36864, 36864
      %169 = vsyncadd [#allocation21], %s168
      %s170 = sshll.u32 [#allocation22], 4
      %s171 = int_to_ptr.vmem [resolvable:$true] %s170
      %176 = dma.hbm_to_vmem [thread:$0]  %s12, 36864, %s171, [#allocation21], 384, 384, 24
    $region53: #{tpu_custom_call.1} parent=1 // pred_fallthru
      _
    // Predicated region
    $region54: #{tpu_custom_call.1} parent=1 // pred_check
      _
    $region55: #{tpu_custom_call.1} parent=1 // pred_check_branch
      %178 = sbr.rel (0) target = $region57
    $region56: #{tpu_custom_call.1} parent=1 // pred_region
      %s180 = ssub.s32 96, 96
      %181 = vsyncadd [#allocation24], %s180
      %s183 = sshll.u32 [#allocation23], 4
      %s184 = int_to_ptr.vmem [resolvable:$true] %s183
      %186 = dma.hbm_to_vmem [thread:$0]  %s13, 96, %s184, [#allocation24]
    $region57: #{tpu_custom_call.1} parent=1 // pred_fallthru
      _
    // Predicated region
    $region58: #{tpu_custom_call.1} parent=1 // pred_check
      _
    $region59: #{tpu_custom_call.1} parent=1 // pred_check_branch
      %188 = sbr.rel (0) target = $region61
    $region60: #{tpu_custom_call.1} parent=1 // pred_region
      %s190 = ssub.s32 6144, 6144
      %191 = vsyncadd [#allocation24], %s190
      %s192 = sshll.u32 [#allocation25], 4
      %s193 = int_to_ptr.vmem [resolvable:$true] %s192
      %198 = dma.hbm_to_vmem [thread:$0]  %s14, 6144, %s193, [#allocation24], 64, 64, 4
    $region61: #{tpu_custom_call.1} parent=1 // pred_fallthru
      _
    // Predicated region
    $region62: #{tpu_custom_call.1} parent=1 // pred_check
      _
    $region63: #{tpu_custom_call.1} parent=1 // pred_check_branch
      %200 = sbr.rel (0) target = $region65
    $region64: #{tpu_custom_call.1} parent=1 // pred_region
      %s202 = ssub.s32 16, 16
      %203 = vsyncadd [#allocation27], %s202
      %s205 = sshll.u32 [#allocation26], 4
      %s206 = int_to_ptr.vmem [resolvable:$true] %s205
      %208 = dma.hbm_to_vmem [thread:$0]  %s15, 16, %s206, [#allocation27]
    $region65: #{tpu_custom_call.1} parent=1 // pred_fallthru
      _
    // Predicated region
    $region66: #{tpu_custom_call.1} parent=1 // pred_check
      _
    $region67: #{tpu_custom_call.1} parent=1 // pred_check_branch
      %210 = sbr.rel (0) target = $region69
    $region68: #{tpu_custom_call.1} parent=1 // pred_region
      %211 = dma.done [#allocation3], 128
    $region69: #{tpu_custom_call.1} parent=1 // pred_fallthru
      _
    // Predicated region
    $region70: #{tpu_custom_call.1} parent=1 // pred_check
      _
    $region71: #{tpu_custom_call.1} parent=1 // pred_check_branch
      %213 = sbr.rel (0) target = $region73
    $region72: #{tpu_custom_call.1} parent=1 // pred_region
      %214 = dma.done [#allocation6], 128
    $region73: #{tpu_custom_call.1} parent=1 // pred_fallthru
      _
    // Predicated region
    $region74: #{tpu_custom_call.1} parent=1 // pred_check
      _
    $region75: #{tpu_custom_call.1} parent=1 // pred_check_branch
      %216 = sbr.rel (0) target = $region77
    $region76: #{tpu_custom_call.1} parent=1 // pred_region
      %217 = dma.done [#allocation6], 128
    $region77: #{tpu_custom_call.1} parent=1 // pred_fallthru
      _
    // Predicated region
    $region78: #{tpu_custom_call.1} parent=1 // pred_check
      _
    $region79: #{tpu_custom_call.1} parent=1 // pred_check_branch
      %219 = sbr.rel (0) target = $region81
    $region80: #{tpu_custom_call.1} parent=1 // pred_region
      %220 = dma.done [#allocation9], 6144
    $region81: #{tpu_custom_call.1} parent=1 // pred_fallthru
      _
    // Predicated region
    $region82: #{tpu_custom_call.1} parent=1 // pred_check
      _
    $region83: #{tpu_custom_call.1} parent=1 // pred_check_branch
      %222 = sbr.rel (0) target = $region85
    $region84: #{tpu_custom_call.1} parent=1 // pred_region
      %223 = dma.done [#allocation9], 96
    $region85: #{tpu_custom_call.1} parent=1 // pred_fallthru
      _
    // Predicated region
    $region86: #{tpu_custom_call.1} parent=1 // pred_check
      _
    $region87: #{tpu_custom_call.1} parent=1 // pred_check_branch
      %225 = sbr.rel (0) target = $region89
    $region88: #{tpu_custom_call.1} parent=1 // pred_region
      %226 = dma.done [#allocation12], 36864
    $region89: #{tpu_custom_call.1} parent=1 // pred_fallthru
      _
    // Predicated region
    $region90: #{tpu_custom_call.1} parent=1 // pred_check
      _
    $region91: #{tpu_custom_call.1} parent=1 // pred_check_branch
      %228 = sbr.rel (0) target = $region93
    $region92: #{tpu_custom_call.1} parent=1 // pred_region
      %229 = dma.done [#allocation12], 96
    $region93: #{tpu_custom_call.1} parent=1 // pred_fallthru
      _
    // Predicated region
    $region94: #{tpu_custom_call.1} parent=1 // pred_check
      _
    $region95: #{tpu_custom_call.1} parent=1 // pred_check_branch
      %231 = sbr.rel (0) target = $region97
    $region96: #{tpu_custom_call.1} parent=1 // pred_region
      %232 = dma.done [#allocation15], 12288
    $region97: #{tpu_custom_call.1} parent=1 // pred_fallthru
      _
    // Predicated region
    $region98: #{tpu_custom_call.1} parent=1 // pred_check
      _
    $region99: #{tpu_custom_call.1} parent=1 // pred_check_branch
      %234 = sbr.rel (0) target = $region101
    $region100: #{tpu_custom_call.1} parent=1 // pred_region
      %235 = dma.done [#allocation15], 32
    $region101: #{tpu_custom_call.1} parent=1 // pred_fallthru
      _
    // Predicated region
    $region102: #{tpu_custom_call.1} parent=1 // pred_check
      _
    $region103: #{tpu_custom_call.1} parent=1 // pred_check_branch
      %237 = sbr.rel (0) target = $region105
    $region104: #{tpu_custom_call.1} parent=1 // pred_region
      %238 = dma.done [#allocation18], 6144
    $region105: #{tpu_custom_call.1} parent=1 // pred_fallthru
      _
    // Predicated region
    $region106: #{tpu_custom_call.1} parent=1 // pred_check
      _
    $region107: #{tpu_custom_call.1} parent=1 // pred_check_branch
      %240 = sbr.rel (0) target = $region109
    $region108: #{tpu_custom_call.1} parent=1 // pred_region
      %241 = dma.done [#allocation18], 6144
    $region109: #{tpu_custom_call.1} parent=1 // pred_fallthru
      _
    // Predicated region
    $region110: #{tpu_custom_call.1} parent=1 // pred_check
      _
    $region111: #{tpu_custom_call.1} parent=1 // pred_check_branch
      %243 = sbr.rel (0) target = $region113
    $region112: #{tpu_custom_call.1} parent=1 // pred_region
      %244 = dma.done [#allocation21], 96
    $region113: #{tpu_custom_call.1} parent=1 // pred_fallthru
      _
    // Predicated region
    $region114: #{tpu_custom_call.1} parent=1 // pred_check
      _
    $region115: #{tpu_custom_call.1} parent=1 // pred_check_branch
      %246 = sbr.rel (0) target = $region117
    $region116: #{tpu_custom_call.1} parent=1 // pred_region
      %247 = dma.done [#allocation21], 36864
    $region117: #{tpu_custom_call.1} parent=1 // pred_fallthru
      _
    // Predicated region
    $region118: #{tpu_custom_call.1} parent=1 // pred_check
      _
    $region119: #{tpu_custom_call.1} parent=1 // pred_check_branch
      %249 = sbr.rel (0) target = $region121
    $region120: #{tpu_custom_call.1} parent=1 // pred_region
      %250 = dma.done [#allocation24], 96
    $region121: #{tpu_custom_call.1} parent=1 // pred_fallthru
      _
    // Predicated region
    $region122: #{tpu_custom_call.1} parent=1 // pred_check
      _
    $region123: #{tpu_custom_call.1} parent=1 // pred_check_branch
      %252 = sbr.rel (0) target = $region125
    $region124: #{tpu_custom_call.1} parent=1 // pred_region
      %253 = dma.done [#allocation24], 6144
    $region125: #{tpu_custom_call.1} parent=1 // pred_fallthru
      _
    // Predicated region
    $region126: #{tpu_custom_call.1} parent=1 // pred_check
      _
    $region127: #{tpu_custom_call.1} parent=1 // pred_check_branch
      %255 = sbr.rel (0) target = $region129
    $region128: #{tpu_custom_call.1} parent=1 // pred_region
      %256 = dma.done [#allocation27], 16
    $region129: #{tpu_custom_call.1} parent=1 // pred_fallthru
      _
    %v258 = vld [vmem:[#allocation2] sm:$0xff]
    %v259 = vpack.c.bf16 %v258, %v258
    %v260 = vld [vmem:[#allocation8] sm:$0xff]
    %v261 = vld [vmem:[#allocation8 + $0x8] sm:$0xff]
    %v262 = vld [vmem:[#allocation8 + $0x10] sm:$0xff]
    %v263 = vld [vmem:[#allocation8 + $0x18] sm:$0xff]
    %v264 = vld [vmem:[#allocation8 + $0x20] sm:$0xff]
    %v265 = vld [vmem:[#allocation8 + $0x28] sm:$0xff]
    %v266 = vld [vmem:[#allocation8 + $0x30] sm:$0xff]
    %v267 = vld [vmem:[#allocation8 + $0x38] sm:$0xff]
    %v268 = vld [vmem:[#allocation8 + $0x40] sm:$0xff]
    %v269 = vld [vmem:[#allocation8 + $0x48] sm:$0xff]
    %v270 = vld [vmem:[#allocation8 + $0x50] sm:$0xff]
    %v271 = vld [vmem:[#allocation8 + $0x58] sm:$0xff]
    %v272 = vld [vmem:[#allocation8 + $0x60] sm:$0xff]
    %v273 = vld [vmem:[#allocation8 + $0x68] sm:$0xff]
    %v274 = vld [vmem:[#allocation8 + $0x70] sm:$0xff]
    %v275 = vld [vmem:[#allocation8 + $0x78] sm:$0xff]
    %v276 = vld [vmem:[#allocation8 + $0x80] sm:$0xff]
    %v277 = vld [vmem:[#allocation8 + $0x88] sm:$0xff]
    %v278 = vld [vmem:[#allocation8 + $0x90] sm:$0xff]
    %v279 = vld [vmem:[#allocation8 + $0x98] sm:$0xff]
    %v280 = vld [vmem:[#allocation8 + $0xa0] sm:$0xff]
    %v281 = vld [vmem:[#allocation8 + $0xa8] sm:$0xff]
    %v282 = vld [vmem:[#allocation8 + $0xb0] sm:$0xff]
    %v283 = vld [vmem:[#allocation8 + $0xb8] sm:$0xff]
    %v284 = vld [vmem:[#allocation8 + $0xc0] sm:$0xff]
    %v285 = vld [vmem:[#allocation8 + $0xc8] sm:$0xff]
    %v286 = vld [vmem:[#allocation8 + $0xd0] sm:$0xff]
    %v287 = vld [vmem:[#allocation8 + $0xd8] sm:$0xff]
    %v288 = vld [vmem:[#allocation8 + $0xe0] sm:$0xff]
    %v289 = vld [vmem:[#allocation8 + $0xe8] sm:$0xff]
    %v290 = vld [vmem:[#allocation8 + $0xf0] sm:$0xff]
    %v291 = vld [vmem:[#allocation8 + $0xf8] sm:$0xff]
    %v292 = vld [vmem:[#allocation8 + $0x100] sm:$0xff]
    %v293 = vld [vmem:[#allocation8 + $0x108] sm:$0xff]
    %v294 = vld [vmem:[#allocation8 + $0x110] sm:$0xff]
    %v295 = vld [vmem:[#allocation8 + $0x118] sm:$0xff]
    %v296 = vld [vmem:[#allocation8 + $0x120] sm:$0xff]
    %v297 = vld [vmem:[#allocation8 + $0x128] sm:$0xff]
    %v298 = vld [vmem:[#allocation8 + $0x130] sm:$0xff]
    %v299 = vld [vmem:[#allocation8 + $0x138] sm:$0xff]
    %v300 = vld [vmem:[#allocation8 + $0x140] sm:$0xff]
    %v301 = vld [vmem:[#allocation8 + $0x148] sm:$0xff]
    %v302 = vld [vmem:[#allocation8 + $0x150] sm:$0xff]
    %v303 = vld [vmem:[#allocation8 + $0x158] sm:$0xff]
    %v304 = vld [vmem:[#allocation8 + $0x160] sm:$0xff]
    %v305 = vld [vmem:[#allocation8 + $0x168] sm:$0xff]
    %v306 = vld [vmem:[#allocation8 + $0x170] sm:$0xff]
    %v307 = vld [vmem:[#allocation8 + $0x178] sm:$0xff]
    %v308 = vld [vmem:[#allocation10] sm:$0x3f]
    %v310 = vlaneseq
    %v311 = vshrl.u32 %v310, 7
    %v312 = vsub.s32 0, %v311
    %v313 = vrot.slane %v308, %v312
    %v314 = vlaneseq
    %v315 = vshrl.u32 %v314, 7
    %v316 = vsub.s32 1, %v315
    %v317 = vrot.slane %v308, %v316
    %v318 = vlaneseq
    %v319 = vshrl.u32 %v318, 7
    %v320 = vsub.s32 2, %v319
    %v321 = vrot.slane %v308, %v320
    %v322 = vlaneseq
    %v323 = vshrl.u32 %v322, 7
    %v324 = vsub.s32 3, %v323
    %v325 = vrot.slane %v308, %v324
    %v326 = vlaneseq
    %v327 = vshrl.u32 %v326, 7
    %v328 = vsub.s32 4, %v327
    %v329 = vrot.slane %v308, %v328
    %v330 = vlaneseq
    %v331 = vshrl.u32 %v330, 7
    %v332 = vsub.s32 5, %v331
    %v333 = vrot.slane %v308, %v332
    %v388 = vunpack.c.l.b16 %v260
    %v389 = vunpack.c.h.b16 %v260
    %v390 = vunpack.c.l.b16 %v261
    %v391 = vunpack.c.h.b16 %v261
    %v392 = vunpack.c.l.b16 %v262
    %v393 = vunpack.c.h.b16 %v262
    %v394 = vunpack.c.l.b16 %v263
    %v395 = vunpack.c.h.b16 %v263
    %v396 = vunpack.c.l.b16 %v264
    %v397 = vunpack.c.h.b16 %v264
    %v398 = vunpack.c.l.b16 %v265
    %v399 = vunpack.c.h.b16 %v265
    %v400 = vunpack.c.l.b16 %v266
    %v401 = vunpack.c.h.b16 %v266
    %v402 = vunpack.c.l.b16 %v267
    %v403 = vunpack.c.h.b16 %v267
    %v404 = vunpack.c.l.b16 %v268
    %v405 = vunpack.c.h.b16 %v268
    %v406 = vunpack.c.l.b16 %v269
    %v407 = vunpack.c.h.b16 %v269
    %v408 = vunpack.c.l.b16 %v270
    %v409 = vunpack.c.h.b16 %v270
    %v410 = vunpack.c.l.b16 %v271
    %v411 = vunpack.c.h.b16 %v271
    %v412 = vunpack.c.l.b16 %v272
    %v413 = vunpack.c.h.b16 %v272
    %v414 = vunpack.c.l.b16 %v273
    %v415 = vunpack.c.h.b16 %v273
    %v416 = vunpack.c.l.b16 %v274
    %v417 = vunpack.c.h.b16 %v274
    %v418 = vunpack.c.l.b16 %v275
    %v419 = vunpack.c.h.b16 %v275
    %v420 = vunpack.c.l.b16 %v276
    %v421 = vunpack.c.h.b16 %v276
    %v422 = vunpack.c.l.b16 %v277
    %v423 = vunpack.c.h.b16 %v277
    %v424 = vunpack.c.l.b16 %v278
    %v425 = vunpack.c.h.b16 %v278
    %v426 = vunpack.c.l.b16 %v279
    %v427 = vunpack.c.h.b16 %v279
    %v428 = vunpack.c.l.b16 %v280
    %v429 = vunpack.c.h.b16 %v280
    %v430 = vunpack.c.l.b16 %v281
    %v431 = vunpack.c.h.b16 %v281
    %v432 = vunpack.c.l.b16 %v282
    %v433 = vunpack.c.h.b16 %v282
    %v434 = vunpack.c.l.b16 %v283
    %v435 = vunpack.c.h.b16 %v283
    %v436 = vunpack.c.l.b16 %v284
    %v437 = vunpack.c.h.b16 %v284
    %v438 = vunpack.c.l.b16 %v285
    %v439 = vunpack.c.h.b16 %v285
    %v440 = vunpack.c.l.b16 %v286
    %v441 = vunpack.c.h.b16 %v286
    %v442 = vunpack.c.l.b16 %v287
    %v443 = vunpack.c.h.b16 %v287
    %v444 = vunpack.c.l.b16 %v288
    %v445 = vunpack.c.h.b16 %v288
    %v446 = vunpack.c.l.b16 %v289
    %v447 = vunpack.c.h.b16 %v289
    %v448 = vunpack.c.l.b16 %v290
    %v449 = vunpack.c.h.b16 %v290
    %v450 = vunpack.c.l.b16 %v291
    %v451 = vunpack.c.h.b16 %v291
    %v452 = vunpack.c.l.b16 %v292
    %v453 = vunpack.c.h.b16 %v292
    %v454 = vunpack.c.l.b16 %v293
    %v455 = vunpack.c.h.b16 %v293
    %v456 = vunpack.c.l.b16 %v294
    %v457 = vunpack.c.h.b16 %v294
    %v458 = vunpack.c.l.b16 %v295
    %v459 = vunpack.c.h.b16 %v295
    %v460 = vunpack.c.l.b16 %v296
    %v461 = vunpack.c.h.b16 %v296
    %v462 = vunpack.c.l.b16 %v297
    %v463 = vunpack.c.h.b16 %v297
    %v464 = vunpack.c.l.b16 %v298
    %v465 = vunpack.c.h.b16 %v298
    %v466 = vunpack.c.l.b16 %v299
    %v467 = vunpack.c.h.b16 %v299
    %v468 = vunpack.c.l.b16 %v300
    %v469 = vunpack.c.h.b16 %v300
    %v470 = vunpack.c.l.b16 %v301
    %v471 = vunpack.c.h.b16 %v301
    %v472 = vunpack.c.l.b16 %v302
    %v473 = vunpack.c.h.b16 %v302
    %v474 = vunpack.c.l.b16 %v303
    %v475 = vunpack.c.h.b16 %v303
    %v476 = vunpack.c.l.b16 %v304
    %v477 = vunpack.c.h.b16 %v304
    %v478 = vunpack.c.l.b16 %v305
    %v479 = vunpack.c.h.b16 %v305
    %v480 = vunpack.c.l.b16 %v306
    %v481 = vunpack.c.h.b16 %v306
    %v482 = vunpack.c.l.b16 %v307
    %v483 = vunpack.c.h.b16 %v307
    %v484 = vpack.c.b16 %v394, %v388
    %v485 = vpack.c.b16 %v395, %v389
    %v486 = vpack.c.b16 %v396, %v390
    %v487 = vpack.c.b16 %v397, %v391
    %v488 = vpack.c.b16 %v398, %v392
    %v489 = vpack.c.b16 %v399, %v393
    %v490 = vpack.c.b16 %v406, %v400
    %v491 = vpack.c.b16 %v407, %v401
    %v492 = vpack.c.b16 %v408, %v402
    %v493 = vpack.c.b16 %v409, %v403
    %v494 = vpack.c.b16 %v410, %v404
    %v495 = vpack.c.b16 %v411, %v405
    %v496 = vpack.c.b16 %v418, %v412
    %v497 = vpack.c.b16 %v419, %v413
    %v498 = vpack.c.b16 %v420, %v414
    %v499 = vpack.c.b16 %v421, %v415
    %v500 = vpack.c.b16 %v422, %v416
    %v501 = vpack.c.b16 %v423, %v417
    %v502 = vpack.c.b16 %v430, %v424
    %v503 = vpack.c.b16 %v431, %v425
    %v504 = vpack.c.b16 %v432, %v426
    %v505 = vpack.c.b16 %v433, %v427
    %v506 = vpack.c.b16 %v434, %v428
    %v507 = vpack.c.b16 %v435, %v429
    %v508 = vpack.c.b16 %v442, %v436
    %v509 = vpack.c.b16 %v443, %v437
    %v510 = vpack.c.b16 %v444, %v438
    %v511 = vpack.c.b16 %v445, %v439
    %v512 = vpack.c.b16 %v446, %v440
    %v513 = vpack.c.b16 %v447, %v441
    %v514 = vpack.c.b16 %v454, %v448
    %v515 = vpack.c.b16 %v455, %v449
    %v516 = vpack.c.b16 %v456, %v450
    %v517 = vpack.c.b16 %v457, %v451
    %v518 = vpack.c.b16 %v458, %v452
    %v519 = vpack.c.b16 %v459, %v453
    %v520 = vpack.c.b16 %v466, %v460
    %v521 = vpack.c.b16 %v467, %v461
    %v522 = vpack.c.b16 %v468, %v462
    %v523 = vpack.c.b16 %v469, %v463
    %v524 = vpack.c.b16 %v470, %v464
    %v525 = vpack.c.b16 %v471, %v465
    %v526 = vpack.c.b16 %v478, %v472
    %v527 = vpack.c.b16 %v479, %v473
    %v528 = vpack.c.b16 %v480, %v474
    %v529 = vpack.c.b16 %v481, %v475
    %v530 = vpack.c.b16 %v482, %v476
    %v531 = vpack.c.b16 %v483, %v477
    %580 = vmatprep.subr.bf16.mxu0 %v527
    %581 = vmatpush1.bf16.msra.mxu0 %v526
    %582 = vmatprep.subr.bf16.mxu0 %v521
    %583 = vmatpush1.bf16.msra.mxu0 %v520
    %584 = vmatprep.subr.bf16.mxu0 %v515
    %585 = vmatpush1.bf16.msra.mxu0 %v514
    %586 = vmatprep.subr.bf16.mxu0 %v509
    %587 = vmatpush1.bf16.msra.mxu0 %v508
    %588 = vmatprep.subr.bf16.mxu0 %v503
    %589 = vmatpush1.bf16.msra.mxu0 %v502
    %590 = vmatprep.subr.bf16.mxu0 %v497
    %591 = vmatpush1.bf16.msra.mxu0 %v496
    %592 = vmatprep.subr.bf16.mxu0 %v491
    %593 = vmatpush1.bf16.msra.mxu0 %v490
    %594 = vmatprep.subr.bf16.mxu0 %v485
    %595 = vmatpush1.bf16.msra.mxu0 %v484
    %596 = vmatprep.subr.bf16.mxu0 0
    %597 = vmatpush2.bf16.msra.mxu0 0
    %598 = vmatprep.subr.bf16.mxu0 0
    %599 = vmatpush2.bf16.msra.mxu0 0
    %600 = vmatprep.subr.bf16.mxu0 0
    %601 = vmatpush2.bf16.msra.mxu0 0
    %602 = vmatprep.subr.bf16.mxu0 0
    %603 = vmatpush2.bf16.msra.mxu0 0
    %604 = vmatprep.subr.bf16.mxu0 0
    %605 = vmatpush2.bf16.msra.mxu0 0
    %606 = vmatprep.subr.bf16.mxu0 0
    %607 = vmatpush2.bf16.msra.mxu0 0
    %608 = vmatprep.subr.bf16.mxu0 0
    %609 = vmatpush2.bf16.msra.mxu0 0
    %610 = vmatprep.subr.bf16.mxu0 0
    %611 = vmatpush2.bf16.msra.mxu0 0
    %612 = vmatprep.mubr.bf16.mxu0 0
    %613 = vmatmul.mubr.bf16.gmra.mxu0 %v259
    %v614 = vpop.f32.mrf.mxu0
    %v615 = vadd.f32 %v313, %v614
    %v616 = vpop.f32.mrf.mxu0
    %v617 = vadd.f32 %v317, %v616
    %v618 = vpop.f32.mrf.mxu0
    %v619 = vpop.f32.mrf.mxu0
    %620 = vdwg.mxu0
    %621 = vmatprep.subr.bf16.mxu0 %v529
    %622 = vmatpush1.bf16.msra.mxu0 %v528
    %623 = vmatprep.subr.bf16.mxu0 %v523
    %624 = vmatpush1.bf16.msra.mxu0 %v522
    %625 = vmatprep.subr.bf16.mxu0 %v517
    %626 = vmatpush1.bf16.msra.mxu0 %v516
    %627 = vmatprep.subr.bf16.mxu0 %v511
    %628 = vmatpush1.bf16.msra.mxu0 %v510
    %629 = vmatprep.subr.bf16.mxu0 %v505
    %630 = vmatpush1.bf16.msra.mxu0 %v504
    %631 = vmatprep.subr.bf16.mxu0 %v499
    %632 = vmatpush1.bf16.msra.mxu0 %v498
    %633 = vmatprep.subr.bf16.mxu0 %v493
    %634 = vmatpush1.bf16.msra.mxu0 %v492
    %635 = vmatprep.subr.bf16.mxu0 %v487
    %636 = vmatpush1.bf16.msra.mxu0 %v486
    %637 = vmatprep.subr.bf16.mxu0 0
    %638 = vmatpush2.bf16.msra.mxu0 0
    %639 = vmatprep.subr.bf16.mxu0 0
    %640 = vmatpush2.bf16.msra.mxu0 0
    %641 = vmatprep.subr.bf16.mxu0 0
    %642 = vmatpush2.bf16.msra.mxu0 0
    %643 = vmatprep.subr.bf16.mxu0 0
    %644 = vmatpush2.bf16.msra.mxu0 0
    %645 = vmatprep.subr.bf16.mxu0 0
    %646 = vmatpush2.bf16.msra.mxu0 0
    %647 = vmatprep.subr.bf16.mxu0 0
    %648 = vmatpush2.bf16.msra.mxu0 0
    %649 = vmatprep.subr.bf16.mxu0 0
    %650 = vmatpush2.bf16.msra.mxu0 0
    %651 = vmatprep.subr.bf16.mxu0 0
    %652 = vmatpush2.bf16.msra.mxu0 0
    %653 = vmatprep.mubr.bf16.mxu0 0
    %654 = vmatmul.mubr.bf16.gmra.mxu0 %v259
    %v655 = vpop.f32.mrf.mxu0
    %v656 = vadd.f32 %v321, %v655
    %v657 = vpop.f32.mrf.mxu0
    %v658 = vadd.f32 %v325, %v657
    %v659 = vpop.f32.mrf.mxu0
    %v660 = vpop.f32.mrf.mxu0
    %661 = vdwg.mxu0
    %662 = vmatprep.subr.bf16.mxu0 %v531
    %663 = vmatpush1.bf16.msra.mxu0 %v530
    %664 = vmatprep.subr.bf16.mxu0 %v525
    %665 = vmatpush1.bf16.msra.mxu0 %v524
    %666 = vmatprep.subr.bf16.mxu0 %v519
    %667 = vmatpush1.bf16.msra.mxu0 %v518
    %668 = vmatprep.subr.bf16.mxu0 %v513
    %669 = vmatpush1.bf16.msra.mxu0 %v512
    %670 = vmatprep.subr.bf16.mxu0 %v507
    %671 = vmatpush1.bf16.msra.mxu0 %v506
    %672 = vmatprep.subr.bf16.mxu0 %v501
    %673 = vmatpush1.bf16.msra.mxu0 %v500
    %674 = vmatprep.subr.bf16.mxu0 %v495
    %675 = vmatpush1.bf16.msra.mxu0 %v494
    %676 = vmatprep.subr.bf16.mxu0 %v489
    %677 = vmatpush1.bf16.msra.mxu0 %v488
    %678 = vmatprep.subr.bf16.mxu0 0
    %679 = vmatpush2.bf16.msra.mxu0 0
    %680 = vmatprep.subr.bf16.mxu0 0
    %681 = vmatpush2.bf16.msra.mxu0 0
    %682 = vmatprep.subr.bf16.mxu0 0
    %683 = vmatpush2.bf16.msra.mxu0 0
    %684 = vmatprep.subr.bf16.mxu0 0
    %685 = vmatpush2.bf16.msra.mxu0 0
    %686 = vmatprep.subr.bf16.mxu0 0
    %687 = vmatpush2.bf16.msra.mxu0 0
    %688 = vmatprep.subr.bf16.mxu0 0
    %689 = vmatpush2.bf16.msra.mxu0 0
    %690 = vmatprep.subr.bf16.mxu0 0
    %691 = vmatpush2.bf16.msra.mxu0 0
    %692 = vmatprep.subr.bf16.mxu0 0
    %693 = vmatpush2.bf16.msra.mxu0 0
    %694 = vmatprep.mubr.bf16.mxu0 0
    %695 = vmatmul.mubr.bf16.gmra.mxu0 %v259
    %v696 = vpop.f32.mrf.mxu0
    %v697 = vadd.f32 %v329, %v696
    %v698 = vpop.f32.mrf.mxu0
    %v699 = vadd.f32 %v333, %v698
    %v700 = vpop.f32.mrf.mxu0
    %v701 = vpop.f32.mrf.mxu0
    %702 = vdwg.mxu0
    %v703 = vmax.f32 %v615, 0.0
    %v704 = vmax.f32 %v617, 0.0
    %v705 = vmax.f32 %v656, 0.0
    %v706 = vmax.f32 %v658, 0.0
    %v707 = vmax.f32 %v697, 0.0
    %v708 = vmax.f32 %v699, 0.0
    %v709 = vpack.c.bf16 %v703, %v703
    %v710 = vpack.c.bf16 %v704, %v704
    %v711 = vpack.c.bf16 %v705, %v705
    %v712 = vpack.c.bf16 %v706, %v706
    %v713 = vpack.c.bf16 %v707, %v707
    %v714 = vpack.c.bf16 %v708, %v708
    %v715 = vld [vmem:[#allocation11] sm:$0xff]
    %v716 = vld [vmem:[#allocation11 + $0x8] sm:$0xff]
    %v717 = vld [vmem:[#allocation11 + $0x10] sm:$0xff]
    %v718 = vld [vmem:[#allocation11 + $0x18] sm:$0xff]
    %v719 = vld [vmem:[#allocation11 + $0x20] sm:$0xff]
    %v720 = vld [vmem:[#allocation11 + $0x28] sm:$0xff]
    %v721 = vld [vmem:[#allocation11 + $0x30] sm:$0xff]
    %v722 = vld [vmem:[#allocation11 + $0x38] sm:$0xff]
    %v723 = vld [vmem:[#allocation11 + $0x40] sm:$0xff]
    %v724 = vld [vmem:[#allocation11 + $0x48] sm:$0xff]
    %v725 = vld [vmem:[#allocation11 + $0x50] sm:$0xff]
    %v726 = vld [vmem:[#allocation11 + $0x58] sm:$0xff]
    %v727 = vld [vmem:[#allocation11 + $0x60] sm:$0xff]
    %v728 = vld [vmem:[#allocation11 + $0x68] sm:$0xff]
    %v729 = vld [vmem:[#allocation11 + $0x70] sm:$0xff]
    %v730 = vld [vmem:[#allocation11 + $0x78] sm:$0xff]
    %v731 = vld [vmem:[#allocation11 + $0x80] sm:$0xff]
    %v732 = vld [vmem:[#allocation11 + $0x88] sm:$0xff]
    %v733 = vld [vmem:[#allocation11 + $0x90] sm:$0xff]
    %v734 = vld [vmem:[#allocation11 + $0x98] sm:$0xff]
    %v735 = vld [vmem:[#allocation11 + $0xa0] sm:$0xff]
    %v736 = vld [vmem:[#allocation11 + $0xa8] sm:$0xff]
    %v737 = vld [vmem:[#allocation11 + $0xb0] sm:$0xff]
    %v738 = vld [vmem:[#allocation11 + $0xb8] sm:$0xff]
    %v739 = vld [vmem:[#allocation11 + $0xc0] sm:$0xff]
    %v740 = vld [vmem:[#allocation11 + $0xc8] sm:$0xff]
    %v741 = vld [vmem:[#allocation11 + $0xd0] sm:$0xff]
    %v742 = vld [vmem:[#allocation11 + $0xd8] sm:$0xff]
    %v743 = vld [vmem:[#allocation11 + $0xe0] sm:$0xff]
    %v744 = vld [vmem:[#allocation11 + $0xe8] sm:$0xff]
    %v745 = vld [vmem:[#allocation11 + $0xf0] sm:$0xff]
    %v746 = vld [vmem:[#allocation11 + $0xf8] sm:$0xff]
    %v747 = vld [vmem:[#allocation11 + $0x100] sm:$0xff]
    %v748 = vld [vmem:[#allocation11 + $0x108] sm:$0xff]
    %v749 = vld [vmem:[#allocation11 + $0x110] sm:$0xff]
    %v750 = vld [vmem:[#allocation11 + $0x118] sm:$0xff]
    %v751 = vld [vmem:[#allocation11 + $0x120] sm:$0xff]
    %v752 = vld [vmem:[#allocation11 + $0x128] sm:$0xff]
    %v753 = vld [vmem:[#allocation11 + $0x130] sm:$0xff]
    %v754 = vld [vmem:[#allocation11 + $0x138] sm:$0xff]
    %v755 = vld [vmem:[#allocation11 + $0x140] sm:$0xff]
    %v756 = vld [vmem:[#allocation11 + $0x148] sm:$0xff]
    %v757 = vld [vmem:[#allocation11 + $0x150] sm:$0xff]
    %v758 = vld [vmem:[#allocation11 + $0x158] sm:$0xff]
    %v759 = vld [vmem:[#allocation11 + $0x160] sm:$0xff]
    %v760 = vld [vmem:[#allocation11 + $0x168] sm:$0xff]
    %v761 = vld [vmem:[#allocation11 + $0x170] sm:$0xff]
    %v762 = vld [vmem:[#allocation11 + $0x178] sm:$0xff]
    %v763 = vld [vmem:[#allocation11 + $0x180] sm:$0xff]
    %v764 = vld [vmem:[#allocation11 + $0x188] sm:$0xff]
    %v765 = vld [vmem:[#allocation11 + $0x190] sm:$0xff]
    %v766 = vld [vmem:[#allocation11 + $0x198] sm:$0xff]
    %v767 = vld [vmem:[#allocation11 + $0x1a0] sm:$0xff]
    %v768 = vld [vmem:[#allocation11 + $0x1a8] sm:$0xff]
    %v769 = vld [vmem:[#allocation11 + $0x1b0] sm:$0xff]
    %v770 = vld [vmem:[#allocation11 + $0x1b8] sm:$0xff]
    %v771 = vld [vmem:[#allocation11 + $0x1c0] sm:$0xff]
    %v772 = vld [vmem:[#allocation11 + $0x1c8] sm:$0xff]
    %v773 = vld [vmem:[#allocation11 + $0x1d0] sm:$0xff]
    %v774 = vld [vmem:[#allocation11 + $0x1d8] sm:$0xff]
    %v775 = vld [vmem:[#allocation11 + $0x1e0] sm:$0xff]
    %v776 = vld [vmem:[#allocation11 + $0x1e8] sm:$0xff]
    %v777 = vld [vmem:[#allocation11 + $0x1f0] sm:$0xff]
    %v778 = vld [vmem:[#allocation11 + $0x1f8] sm:$0xff]
    %v779 = vld [vmem:[#allocation11 + $0x200] sm:$0xff]
    %v780 = vld [vmem:[#allocation11 + $0x208] sm:$0xff]
    %v781 = vld [vmem:[#allocation11 + $0x210] sm:$0xff]
    %v782 = vld [vmem:[#allocation11 + $0x218] sm:$0xff]
    %v783 = vld [vmem:[#allocation11 + $0x220] sm:$0xff]
    %v784 = vld [vmem:[#allocation11 + $0x228] sm:$0xff]
    %v785 = vld [vmem:[#allocation11 + $0x230] sm:$0xff]
    %v786 = vld [vmem:[#allocation11 + $0x238] sm:$0xff]
    %v787 = vld [vmem:[#allocation11 + $0x240] sm:$0xff]
    %v788 = vld [vmem:[#allocation11 + $0x248] sm:$0xff]
    %v789 = vld [vmem:[#allocation11 + $0x250] sm:$0xff]
    %v790 = vld [vmem:[#allocation11 + $0x258] sm:$0xff]
    %v791 = vld [vmem:[#allocation11 + $0x260] sm:$0xff]
    %v792 = vld [vmem:[#allocation11 + $0x268] sm:$0xff]
    %v793 = vld [vmem:[#allocation11 + $0x270] sm:$0xff]
    %v794 = vld [vmem:[#allocation11 + $0x278] sm:$0xff]
    %v795 = vld [vmem:[#allocation11 + $0x280] sm:$0xff]
    %v796 = vld [vmem:[#allocation11 + $0x288] sm:$0xff]
    %v797 = vld [vmem:[#allocation11 + $0x290] sm:$0xff]
    %v798 = vld [vmem:[#allocation11 + $0x298] sm:$0xff]
    %v799 = vld [vmem:[#allocation11 + $0x2a0] sm:$0xff]
    %v800 = vld [vmem:[#allocation11 + $0x2a8] sm:$0xff]
    %v801 = vld [vmem:[#allocation11 + $0x2b0] sm:$0xff]
    %v802 = vld [vmem:[#allocation11 + $0x2b8] sm:$0xff]
    %v803 = vld [vmem:[#allocation11 + $0x2c0] sm:$0xff]
    %v804 = vld [vmem:[#allocation11 + $0x2c8] sm:$0xff]
    %v805 = vld [vmem:[#allocation11 + $0x2d0] sm:$0xff]
    %v806 = vld [vmem:[#allocation11 + $0x2d8] sm:$0xff]
    %v807 = vld [vmem:[#allocation11 + $0x2e0] sm:$0xff]
    %v808 = vld [vmem:[#allocation11 + $0x2e8] sm:$0xff]
    %v809 = vld [vmem:[#allocation11 + $0x2f0] sm:$0xff]
    %v810 = vld [vmem:[#allocation11 + $0x2f8] sm:$0xff]
    %v811 = vld [vmem:[#allocation11 + $0x300] sm:$0xff]
    %v812 = vld [vmem:[#allocation11 + $0x308] sm:$0xff]
    %v813 = vld [vmem:[#allocation11 + $0x310] sm:$0xff]
    %v814 = vld [vmem:[#allocation11 + $0x318] sm:$0xff]
    %v815 = vld [vmem:[#allocation11 + $0x320] sm:$0xff]
    %v816 = vld [vmem:[#allocation11 + $0x328] sm:$0xff]
    %v817 = vld [vmem:[#allocation11 + $0x330] sm:$0xff]
    %v818 = vld [vmem:[#allocation11 + $0x338] sm:$0xff]
    %v819 = vld [vmem:[#allocation11 + $0x340] sm:$0xff]
    %v820 = vld [vmem:[#allocation11 + $0x348] sm:$0xff]
    %v821 = vld [vmem:[#allocation11 + $0x350] sm:$0xff]
    %v822 = vld [vmem:[#allocation11 + $0x358] sm:$0xff]
    %v823 = vld [vmem:[#allocation11 + $0x360] sm:$0xff]
    %v824 = vld [vmem:[#allocation11 + $0x368] sm:$0xff]
    %v825 = vld [vmem:[#allocation11 + $0x370] sm:$0xff]
    %v826 = vld [vmem:[#allocation11 + $0x378] sm:$0xff]
    %v827 = vld [vmem:[#allocation11 + $0x380] sm:$0xff]
    %v828 = vld [vmem:[#allocation11 + $0x388] sm:$0xff]
    %v829 = vld [vmem:[#allocation11 + $0x390] sm:$0xff]
    %v830 = vld [vmem:[#allocation11 + $0x398] sm:$0xff]
    %v831 = vld [vmem:[#allocation11 + $0x3a0] sm:$0xff]
    %v832 = vld [vmem:[#allocation11 + $0x3a8] sm:$0xff]
    %v833 = vld [vmem:[#allocation11 + $0x3b0] sm:$0xff]
    %v834 = vld [vmem:[#allocation11 + $0x3b8] sm:$0xff]
    %v835 = vld [vmem:[#allocation11 + $0x3c0] sm:$0xff]
    %v836 = vld [vmem:[#allocation11 + $0x3c8] sm:$0xff]
    %v837 = vld [vmem:[#allocation11 + $0x3d0] sm:$0xff]
    %v838 = vld [vmem:[#allocation11 + $0x3d8] sm:$0xff]
    %v839 = vld [vmem:[#allocation11 + $0x3e0] sm:$0xff]
    %v840 = vld [vmem:[#allocation11 + $0x3e8] sm:$0xff]
    %v841 = vld [vmem:[#allocation11 + $0x3f0] sm:$0xff]
    %v842 = vld [vmem:[#allocation11 + $0x3f8] sm:$0xff]
    %v843 = vld [vmem:[#allocation11 + $0x400] sm:$0xff]
    %v844 = vld [vmem:[#allocation11 + $0x408] sm:$0xff]
    %v845 = vld [vmem:[#allocation11 + $0x410] sm:$0xff]
    %v846 = vld [vmem:[#allocation11 + $0x418] sm:$0xff]
    %v847 = vld [vmem:[#allocation11 + $0x420] sm:$0xff]
    %v848 = vld [vmem:[#allocation11 + $0x428] sm:$0xff]
    %v849 = vld [vmem:[#allocation11 + $0x430] sm:$0xff]
    %v850 = vld [vmem:[#allocation11 + $0x438] sm:$0xff]
    %v851 = vld [vmem:[#allocation11 + $0x440] sm:$0xff]
    %v852 = vld [vmem:[#allocation11 + $0x448] sm:$0xff]
    %v853 = vld [vmem:[#allocation11 + $0x450] sm:$0xff]
    %v854 = vld [vmem:[#allocation11 + $0x458] sm:$0xff]
    %v855 = vld [vmem:[#allocation11 + $0x460] sm:$0xff]
    %v856 = vld [vmem:[#allocation11 + $0x468] sm:$0xff]
    %v857 = vld [vmem:[#allocation11 + $0x470] sm:$0xff]
    %v858 = vld [vmem:[#allocation11 + $0x478] sm:$0xff]
    %v859 = vld [vmem:[#allocation11 + $0x480] sm:$0xff]
    %v860 = vld [vmem:[#allocation11 + $0x488] sm:$0xff]
    %v861 = vld [vmem:[#allocation11 + $0x490] sm:$0xff]
    %v862 = vld [vmem:[#allocation11 + $0x498] sm:$0xff]
    %v863 = vld [vmem:[#allocation11 + $0x4a0] sm:$0xff]
    %v864 = vld [vmem:[#allocation11 + $0x4a8] sm:$0xff]
    %v865 = vld [vmem:[#allocation11 + $0x4b0] sm:$0xff]
    %v866 = vld [vmem:[#allocation11 + $0x4b8] sm:$0xff]
    %v867 = vld [vmem:[#allocation11 + $0x4c0] sm:$0xff]
    %v868 = vld [vmem:[#allocation11 + $0x4c8] sm:$0xff]
    %v869 = vld [vmem:[#allocation11 + $0x4d0] sm:$0xff]
    %v870 = vld [vmem:[#allocation11 + $0x4d8] sm:$0xff]
    %v871 = vld [vmem:[#allocation11 + $0x4e0] sm:$0xff]
    %v872 = vld [vmem:[#allocation11 + $0x4e8] sm:$0xff]
    %v873 = vld [vmem:[#allocation11 + $0x4f0] sm:$0xff]
    %v874 = vld [vmem:[#allocation11 + $0x4f8] sm:$0xff]
    %v875 = vld [vmem:[#allocation11 + $0x500] sm:$0xff]
    %v876 = vld [vmem:[#allocation11 + $0x508] sm:$0xff]
    %v877 = vld [vmem:[#allocation11 + $0x510] sm:$0xff]
    %v878 = vld [vmem:[#allocation11 + $0x518] sm:$0xff]
    %v879 = vld [vmem:[#allocation11 + $0x520] sm:$0xff]
    %v880 = vld [vmem:[#allocation11 + $0x528] sm:$0xff]
    %v881 = vld [vmem:[#allocation11 + $0x530] sm:$0xff]
    %v882 = vld [vmem:[#allocation11 + $0x538] sm:$0xff]
    %v883 = vld [vmem:[#allocation11 + $0x540] sm:$0xff]
    %v884 = vld [vmem:[#allocation11 + $0x548] sm:$0xff]
    %v885 = vld [vmem:[#allocation11 + $0x550] sm:$0xff]
    %v886 = vld [vmem:[#allocation11 + $0x558] sm:$0xff]
    %v887 = vld [vmem:[#allocation11 + $0x560] sm:$0xff]
    %v888 = vld [vmem:[#allocation11 + $0x568] sm:$0xff]
    %v889 = vld [vmem:[#allocation11 + $0x570] sm:$0xff]
    %v890 = vld [vmem:[#allocation11 + $0x578] sm:$0xff]
    %v891 = vld [vmem:[#allocation11 + $0x580] sm:$0xff]
    %v892 = vld [vmem:[#allocation11 + $0x588] sm:$0xff]
    %v893 = vld [vmem:[#allocation11 + $0x590] sm:$0xff]
    %v894 = vld [vmem:[#allocation11 + $0x598] sm:$0xff]
    %v895 = vld [vmem:[#allocation11 + $0x5a0] sm:$0xff]
    %v896 = vld [vmem:[#allocation11 + $0x5a8] sm:$0xff]
    %v897 = vld [vmem:[#allocation11 + $0x5b0] sm:$0xff]
    %v898 = vld [vmem:[#allocation11 + $0x5b8] sm:$0xff]
    %v899 = vld [vmem:[#allocation11 + $0x5c0] sm:$0xff]
    %v900 = vld [vmem:[#allocation11 + $0x5c8] sm:$0xff]
    %v901 = vld [vmem:[#allocation11 + $0x5d0] sm:$0xff]
    %v902 = vld [vmem:[#allocation11 + $0x5d8] sm:$0xff]
    %v903 = vld [vmem:[#allocation11 + $0x5e0] sm:$0xff]
    %v904 = vld [vmem:[#allocation11 + $0x5e8] sm:$0xff]
    %v905 = vld [vmem:[#allocation11 + $0x5f0] sm:$0xff]
    %v906 = vld [vmem:[#allocation11 + $0x5f8] sm:$0xff]
    %v907 = vld [vmem:[#allocation11 + $0x600] sm:$0xff]
    %v908 = vld [vmem:[#allocation11 + $0x608] sm:$0xff]
    %v909 = vld [vmem:[#allocation11 + $0x610] sm:$0xff]
    %v910 = vld [vmem:[#allocation11 + $0x618] sm:$0xff]
    %v911 = vld [vmem:[#allocation11 + $0x620] sm:$0xff]
    %v912 = vld [vmem:[#allocation11 + $0x628] sm:$0xff]
    %v913 = vld [vmem:[#allocation11 + $0x630] sm:$0xff]
    %v914 = vld [vmem:[#allocation11 + $0x638] sm:$0xff]
    %v915 = vld [vmem:[#allocation11 + $0x640] sm:$0xff]
    %v916 = vld [vmem:[#allocation11 + $0x648] sm:$0xff]
    %v917 = vld [vmem:[#allocation11 + $0x650] sm:$0xff]
    %v918 = vld [vmem:[#allocation11 + $0x658] sm:$0xff]
    %v919 = vld [vmem:[#allocation11 + $0x660] sm:$0xff]
    %v920 = vld [vmem:[#allocation11 + $0x668] sm:$0xff]
    %v921 = vld [vmem:[#allocation11 + $0x670] sm:$0xff]
    %v922 = vld [vmem:[#allocation11 + $0x678] sm:$0xff]
    %v923 = vld [vmem:[#allocation11 + $0x680] sm:$0xff]
    %v924 = vld [vmem:[#allocation11 + $0x688] sm:$0xff]
    %v925 = vld [vmem:[#allocation11 + $0x690] sm:$0xff]
    %v926 = vld [vmem:[#allocation11 + $0x698] sm:$0xff]
    %v927 = vld [vmem:[#allocation11 + $0x6a0] sm:$0xff]
    %v928 = vld [vmem:[#allocation11 + $0x6a8] sm:$0xff]
    %v929 = vld [vmem:[#allocation11 + $0x6b0] sm:$0xff]
    %v930 = vld [vmem:[#allocation11 + $0x6b8] sm:$0xff]
    %v931 = vld [vmem:[#allocation11 + $0x6c0] sm:$0xff]
    %v932 = vld [vmem:[#allocation11 + $0x6c8] sm:$0xff]
    %v933 = vld [vmem:[#allocation11 + $0x6d0] sm:$0xff]
    %v934 = vld [vmem:[#allocation11 + $0x6d8] sm:$0xff]
    %v935 = vld [vmem:[#allocation11 + $0x6e0] sm:$0xff]
    %v936 = vld [vmem:[#allocation11 + $0x6e8] sm:$0xff]
    %v937 = vld [vmem:[#allocation11 + $0x6f0] sm:$0xff]
    %v938 = vld [vmem:[#allocation11 + $0x6f8] sm:$0xff]
    %v939 = vld [vmem:[#allocation11 + $0x700] sm:$0xff]
    %v940 = vld [vmem:[#allocation11 + $0x708] sm:$0xff]
    %v941 = vld [vmem:[#allocation11 + $0x710] sm:$0xff]
    %v942 = vld [vmem:[#allocation11 + $0x718] sm:$0xff]
    %v943 = vld [vmem:[#allocation11 + $0x720] sm:$0xff]
    %v944 = vld [vmem:[#allocation11 + $0x728] sm:$0xff]
    %v945 = vld [vmem:[#allocation11 + $0x730] sm:$0xff]
    %v946 = vld [vmem:[#allocation11 + $0x738] sm:$0xff]
    %v947 = vld [vmem:[#allocation11 + $0x740] sm:$0xff]
    %v948 = vld [vmem:[#allocation11 + $0x748] sm:$0xff]
    %v949 = vld [vmem:[#allocation11 + $0x750] sm:$0xff]
    %v950 = vld [vmem:[#allocation11 + $0x758] sm:$0xff]
    %v951 = vld [vmem:[#allocation11 + $0x760] sm:$0xff]
    %v952 = vld [vmem:[#allocation11 + $0x768] sm:$0xff]
    %v953 = vld [vmem:[#allocation11 + $0x770] sm:$0xff]
    %v954 = vld [vmem:[#allocation11 + $0x778] sm:$0xff]
    %v955 = vld [vmem:[#allocation11 + $0x780] sm:$0xff]
    %v956 = vld [vmem:[#allocation11 + $0x788] sm:$0xff]
    %v957 = vld [vmem:[#allocation11 + $0x790] sm:$0xff]
    %v958 = vld [vmem:[#allocation11 + $0x798] sm:$0xff]
    %v959 = vld [vmem:[#allocation11 + $0x7a0] sm:$0xff]
    %v960 = vld [vmem:[#allocation11 + $0x7a8] sm:$0xff]
    %v961 = vld [vmem:[#allocation11 + $0x7b0] sm:$0xff]
    %v962 = vld [vmem:[#allocation11 + $0x7b8] sm:$0xff]
    %v963 = vld [vmem:[#allocation11 + $0x7c0] sm:$0xff]
    %v964 = vld [vmem:[#allocation11 + $0x7c8] sm:$0xff]
    %v965 = vld [vmem:[#allocation11 + $0x7d0] sm:$0xff]
    %v966 = vld [vmem:[#allocation11 + $0x7d8] sm:$0xff]
    %v967 = vld [vmem:[#allocation11 + $0x7e0] sm:$0xff]
    %v968 = vld [vmem:[#allocation11 + $0x7e8] sm:$0xff]
    %v969 = vld [vmem:[#allocation11 + $0x7f0] sm:$0xff]
    %v970 = vld [vmem:[#allocation11 + $0x7f8] sm:$0xff]
    %v971 = vld [vmem:[#allocation11 + $0x800] sm:$0xff]
    %v972 = vld [vmem:[#allocation11 + $0x808] sm:$0xff]
    %v973 = vld [vmem:[#allocation11 + $0x810] sm:$0xff]
    %v974 = vld [vmem:[#allocation11 + $0x818] sm:$0xff]
    %v975 = vld [vmem:[#allocation11 + $0x820] sm:$0xff]
    %v976 = vld [vmem:[#allocation11 + $0x828] sm:$0xff]
    %v977 = vld [vmem:[#allocation11 + $0x830] sm:$0xff]
    %v978 = vld [vmem:[#allocation11 + $0x838] sm:$0xff]
    %v979 = vld [vmem:[#allocation11 + $0x840] sm:$0xff]
    %v980 = vld [vmem:[#allocation11 + $0x848] sm:$0xff]
    %v981 = vld [vmem:[#allocation11 + $0x850] sm:$0xff]
    %v982 = vld [vmem:[#allocation11 + $0x858] sm:$0xff]
    %v983 = vld [vmem:[#allocation11 + $0x860] sm:$0xff]
    %v984 = vld [vmem:[#allocation11 + $0x868] sm:$0xff]
    %v985 = vld [vmem:[#allocation11 + $0x870] sm:$0xff]
    %v986 = vld [vmem:[#allocation11 + $0x878] sm:$0xff]
    %v987 = vld [vmem:[#allocation11 + $0x880] sm:$0xff]
    %v988 = vld [vmem:[#allocation11 + $0x888] sm:$0xff]
    %v989 = vld [vmem:[#allocation11 + $0x890] sm:$0xff]
    %v990 = vld [vmem:[#allocation11 + $0x898] sm:$0xff]
    %v991 = vld [vmem:[#allocation11 + $0x8a0] sm:$0xff]
    %v992 = vld [vmem:[#allocation11 + $0x8a8] sm:$0xff]
    %v993 = vld [vmem:[#allocation11 + $0x8b0] sm:$0xff]
    %v994 = vld [vmem:[#allocation11 + $0x8b8] sm:$0xff]
    %v995 = vld [vmem:[#allocation11 + $0x8c0] sm:$0xff]
    %v996 = vld [vmem:[#allocation11 + $0x8c8] sm:$0xff]
    %v997 = vld [vmem:[#allocation11 + $0x8d0] sm:$0xff]
    %v998 = vld [vmem:[#allocation11 + $0x8d8] sm:$0xff]
    %v999 = vld [vmem:[#allocation11 + $0x8e0] sm:$0xff]
    %v1000 = vld [vmem:[#allocation11 + $0x8e8] sm:$0xff]
    %v1001 = vld [vmem:[#allocation11 + $0x8f0] sm:$0xff]
    %v1002 = vld [vmem:[#allocation11 + $0x8f8] sm:$0xff]
    %v1003 = vld [vmem:[#allocation13] sm:$0x3f]
    %v1005 = vlaneseq
    %v1006 = vshrl.u32 %v1005, 7
    %v1007 = vsub.s32 0, %v1006
    %v1008 = vrot.slane %v1003, %v1007
    %v1009 = vlaneseq
    %v1010 = vshrl.u32 %v1009, 7
    %v1011 = vsub.s32 1, %v1010
    %v1012 = vrot.slane %v1003, %v1011
    %v1013 = vlaneseq
    %v1014 = vshrl.u32 %v1013, 7
    %v1015 = vsub.s32 2, %v1014
    %v1016 = vrot.slane %v1003, %v1015
    %v1017 = vlaneseq
    %v1018 = vshrl.u32 %v1017, 7
    %v1019 = vsub.s32 3, %v1018
    %v1020 = vrot.slane %v1003, %v1019
    %v1021 = vlaneseq
    %v1022 = vshrl.u32 %v1021, 7
    %v1023 = vsub.s32 4, %v1022
    %v1024 = vrot.slane %v1003, %v1023
    %v1025 = vlaneseq
    %v1026 = vshrl.u32 %v1025, 7
    %v1027 = vsub.s32 5, %v1026
    %v1028 = vrot.slane %v1003, %v1027
    %v1323 = vunpack.c.l.b16 %v715
    %v1324 = vunpack.c.h.b16 %v715
    %v1325 = vunpack.c.l.b16 %v716
    %v1326 = vunpack.c.h.b16 %v716
    %v1327 = vunpack.c.l.b16 %v717
    %v1328 = vunpack.c.h.b16 %v717
    %v1329 = vunpack.c.l.b16 %v718
    %v1330 = vunpack.c.h.b16 %v718
    %v1331 = vunpack.c.l.b16 %v719
    %v1332 = vunpack.c.h.b16 %v719
    %v1333 = vunpack.c.l.b16 %v720
    %v1334 = vunpack.c.h.b16 %v720
    %v1335 = vunpack.c.l.b16 %v721
    %v1336 = vunpack.c.h.b16 %v721
    %v1337 = vunpack.c.l.b16 %v722
    %v1338 = vunpack.c.h.b16 %v722
    %v1339 = vunpack.c.l.b16 %v723
    %v1340 = vunpack.c.h.b16 %v723
    %v1341 = vunpack.c.l.b16 %v724
    %v1342 = vunpack.c.h.b16 %v724
    %v1343 = vunpack.c.l.b16 %v725
    %v1344 = vunpack.c.h.b16 %v725
    %v1345 = vunpack.c.l.b16 %v726
    %v1346 = vunpack.c.h.b16 %v726
    %v1347 = vunpack.c.l.b16 %v727
    %v1348 = vunpack.c.h.b16 %v727
    %v1349 = vunpack.c.l.b16 %v728
    %v1350 = vunpack.c.h.b16 %v728
    %v1351 = vunpack.c.l.b16 %v729
    %v1352 = vunpack.c.h.b16 %v729
    %v1353 = vunpack.c.l.b16 %v730
    %v1354 = vunpack.c.h.b16 %v730
    %v1355 = vunpack.c.l.b16 %v731
    %v1356 = vunpack.c.h.b16 %v731
    %v1357 = vunpack.c.l.b16 %v732
    %v1358 = vunpack.c.h.b16 %v732
    %v1359 = vunpack.c.l.b16 %v733
    %v1360 = vunpack.c.h.b16 %v733
    %v1361 = vunpack.c.l.b16 %v734
    %v1362 = vunpack.c.h.b16 %v734
    %v1363 = vunpack.c.l.b16 %v735
    %v1364 = vunpack.c.h.b16 %v735
    %v1365 = vunpack.c.l.b16 %v736
    %v1366 = vunpack.c.h.b16 %v736
    %v1367 = vunpack.c.l.b16 %v737
    %v1368 = vunpack.c.h.b16 %v737
    %v1369 = vunpack.c.l.b16 %v738
    %v1370 = vunpack.c.h.b16 %v738
    %v1371 = vunpack.c.l.b16 %v739
    %v1372 = vunpack.c.h.b16 %v739
    %v1373 = vunpack.c.l.b16 %v740
    %v1374 = vunpack.c.h.b16 %v740
    %v1375 = vunpack.c.l.b16 %v741
    %v1376 = vunpack.c.h.b16 %v741
    %v1377 = vunpack.c.l.b16 %v742
    %v1378 = vunpack.c.h.b16 %v742
    %v1379 = vunpack.c.l.b16 %v743
    %v1380 = vunpack.c.h.b16 %v743
    %v1381 = vunpack.c.l.b16 %v744
    %v1382 = vunpack.c.h.b16 %v744
    %v1383 = vunpack.c.l.b16 %v745
    %v1384 = vunpack.c.h.b16 %v745
    %v1385 = vunpack.c.l.b16 %v746
    %v1386 = vunpack.c.h.b16 %v746
    %v1387 = vunpack.c.l.b16 %v747
    %v1388 = vunpack.c.h.b16 %v747
    %v1389 = vunpack.c.l.b16 %v748
    %v1390 = vunpack.c.h.b16 %v748
    %v1391 = vunpack.c.l.b16 %v749
    %v1392 = vunpack.c.h.b16 %v749
    %v1393 = vunpack.c.l.b16 %v750
    %v1394 = vunpack.c.h.b16 %v750
    %v1395 = vunpack.c.l.b16 %v751
    %v1396 = vunpack.c.h.b16 %v751
    %v1397 = vunpack.c.l.b16 %v752
    %v1398 = vunpack.c.h.b16 %v752
    %v1399 = vunpack.c.l.b16 %v753
    %v1400 = vunpack.c.h.b16 %v753
    %v1401 = vunpack.c.l.b16 %v754
    %v1402 = vunpack.c.h.b16 %v754
    %v1403 = vunpack.c.l.b16 %v755
    %v1404 = vunpack.c.h.b16 %v755
    %v1405 = vunpack.c.l.b16 %v756
    %v1406 = vunpack.c.h.b16 %v756
    %v1407 = vunpack.c.l.b16 %v757
    %v1408 = vunpack.c.h.b16 %v757
    %v1409 = vunpack.c.l.b16 %v758
    %v1410 = vunpack.c.h.b16 %v758
    %v1411 = vunpack.c.l.b16 %v759
    %v1412 = vunpack.c.h.b16 %v759
    %v1413 = vunpack.c.l.b16 %v760
    %v1414 = vunpack.c.h.b16 %v760
    %v1415 = vunpack.c.l.b16 %v761
    %v1416 = vunpack.c.h.b16 %v761
    %v1417 = vunpack.c.l.b16 %v762
    %v1418 = vunpack.c.h.b16 %v762
    %v1419 = vunpack.c.l.b16 %v763
    %v1420 = vunpack.c.h.b16 %v763
    %v1421 = vunpack.c.l.b16 %v764
    %v1422 = vunpack.c.h.b16 %v764
    %v1423 = vunpack.c.l.b16 %v765
    %v1424 = vunpack.c.h.b16 %v765
    %v1425 = vunpack.c.l.b16 %v766
    %v1426 = vunpack.c.h.b16 %v766
    %v1427 = vunpack.c.l.b16 %v767
    %v1428 = vunpack.c.h.b16 %v767
    %v1429 = vunpack.c.l.b16 %v768
    %v1430 = vunpack.c.h.b16 %v768
    %v1431 = vunpack.c.l.b16 %v769
    %v1432 = vunpack.c.h.b16 %v769
    %v1433 = vunpack.c.l.b16 %v770
    %v1434 = vunpack.c.h.b16 %v770
    %v1435 = vunpack.c.l.b16 %v771
    %v1436 = vunpack.c.h.b16 %v771
    %v1437 = vunpack.c.l.b16 %v772
    %v1438 = vunpack.c.h.b16 %v772
    %v1439 = vunpack.c.l.b16 %v773
    %v1440 = vunpack.c.h.b16 %v773
    %v1441 = vunpack.c.l.b16 %v774
    %v1442 = vunpack.c.h.b16 %v774
    %v1443 = vunpack.c.l.b16 %v775
    %v1444 = vunpack.c.h.b16 %v775
    %v1445 = vunpack.c.l.b16 %v776
    %v1446 = vunpack.c.h.b16 %v776
    %v1447 = vunpack.c.l.b16 %v777
    %v1448 = vunpack.c.h.b16 %v777
    %v1449 = vunpack.c.l.b16 %v778
    %v1450 = vunpack.c.h.b16 %v778
    %v1451 = vunpack.c.l.b16 %v779
    %v1452 = vunpack.c.h.b16 %v779
    %v1453 = vunpack.c.l.b16 %v780
    %v1454 = vunpack.c.h.b16 %v780
    %v1455 = vunpack.c.l.b16 %v781
    %v1456 = vunpack.c.h.b16 %v781
    %v1457 = vunpack.c.l.b16 %v782
    %v1458 = vunpack.c.h.b16 %v782
    %v1459 = vunpack.c.l.b16 %v783
    %v1460 = vunpack.c.h.b16 %v783
    %v1461 = vunpack.c.l.b16 %v784
    %v1462 = vunpack.c.h.b16 %v784
    %v1463 = vunpack.c.l.b16 %v785
    %v1464 = vunpack.c.h.b16 %v785
    %v1465 = vunpack.c.l.b16 %v786
    %v1466 = vunpack.c.h.b16 %v786
    %v1467 = vunpack.c.l.b16 %v787
    %v1468 = vunpack.c.h.b16 %v787
    %v1469 = vunpack.c.l.b16 %v788
    %v1470 = vunpack.c.h.b16 %v788
    %v1471 = vunpack.c.l.b16 %v789
    %v1472 = vunpack.c.h.b16 %v789
    %v1473 = vunpack.c.l.b16 %v790
    %v1474 = vunpack.c.h.b16 %v790
    %v1475 = vunpack.c.l.b16 %v791
    %v1476 = vunpack.c.h.b16 %v791
    %v1477 = vunpack.c.l.b16 %v792
    %v1478 = vunpack.c.h.b16 %v792
    %v1479 = vunpack.c.l.b16 %v793
    %v1480 = vunpack.c.h.b16 %v793
    %v1481 = vunpack.c.l.b16 %v794
    %v1482 = vunpack.c.h.b16 %v794
    %v1483 = vunpack.c.l.b16 %v795
    %v1484 = vunpack.c.h.b16 %v795
    %v1485 = vunpack.c.l.b16 %v796
    %v1486 = vunpack.c.h.b16 %v796
    %v1487 = vunpack.c.l.b16 %v797
    %v1488 = vunpack.c.h.b16 %v797
    %v1489 = vunpack.c.l.b16 %v798
    %v1490 = vunpack.c.h.b16 %v798
    %v1491 = vunpack.c.l.b16 %v799
    %v1492 = vunpack.c.h.b16 %v799
    %v1493 = vunpack.c.l.b16 %v800
    %v1494 = vunpack.c.h.b16 %v800
    %v1495 = vunpack.c.l.b16 %v801
    %v1496 = vunpack.c.h.b16 %v801
    %v1497 = vunpack.c.l.b16 %v802
    %v1498 = vunpack.c.h.b16 %v802
    %v1499 = vunpack.c.l.b16 %v803
    %v1500 = vunpack.c.h.b16 %v803
    %v1501 = vunpack.c.l.b16 %v804
    %v1502 = vunpack.c.h.b16 %v804
    %v1503 = vunpack.c.l.b16 %v805
    %v1504 = vunpack.c.h.b16 %v805
    %v1505 = vunpack.c.l.b16 %v806
    %v1506 = vunpack.c.h.b16 %v806
    %v1507 = vunpack.c.l.b16 %v807
    %v1508 = vunpack.c.h.b16 %v807
    %v1509 = vunpack.c.l.b16 %v808
    %v1510 = vunpack.c.h.b16 %v808
    %v1511 = vunpack.c.l.b16 %v809
    %v1512 = vunpack.c.h.b16 %v809
    %v1513 = vunpack.c.l.b16 %v810
    %v1514 = vunpack.c.h.b16 %v810
    %v1515 = vunpack.c.l.b16 %v811
    %v1516 = vunpack.c.h.b16 %v811
    %v1517 = vunpack.c.l.b16 %v812
    %v1518 = vunpack.c.h.b16 %v812
    %v1519 = vunpack.c.l.b16 %v813
    %v1520 = vunpack.c.h.b16 %v813
    %v1521 = vunpack.c.l.b16 %v814
    %v1522 = vunpack.c.h.b16 %v814
    %v1523 = vunpack.c.l.b16 %v815
    %v1524 = vunpack.c.h.b16 %v815
    %v1525 = vunpack.c.l.b16 %v816
    %v1526 = vunpack.c.h.b16 %v816
    %v1527 = vunpack.c.l.b16 %v817
    %v1528 = vunpack.c.h.b16 %v817
    %v1529 = vunpack.c.l.b16 %v818
    %v1530 = vunpack.c.h.b16 %v818
    %v1531 = vunpack.c.l.b16 %v819
    %v1532 = vunpack.c.h.b16 %v819
    %v1533 = vunpack.c.l.b16 %v820
    %v1534 = vunpack.c.h.b16 %v820
    %v1535 = vunpack.c.l.b16 %v821
    %v1536 = vunpack.c.h.b16 %v821
    %v1537 = vunpack.c.l.b16 %v822
    %v1538 = vunpack.c.h.b16 %v822
    %v1539 = vunpack.c.l.b16 %v823
    %v1540 = vunpack.c.h.b16 %v823
    %v1541 = vunpack.c.l.b16 %v824
    %v1542 = vunpack.c.h.b16 %v824
    %v1543 = vunpack.c.l.b16 %v825
    %v1544 = vunpack.c.h.b16 %v825
    %v1545 = vunpack.c.l.b16 %v826
    %v1546 = vunpack.c.h.b16 %v826
    %v1547 = vunpack.c.l.b16 %v827
    %v1548 = vunpack.c.h.b16 %v827
    %v1549 = vunpack.c.l.b16 %v828
    %v1550 = vunpack.c.h.b16 %v828
    %v1551 = vunpack.c.l.b16 %v829
    %v1552 = vunpack.c.h.b16 %v829
    %v1553 = vunpack.c.l.b16 %v830
    %v1554 = vunpack.c.h.b16 %v830
    %v1555 = vunpack.c.l.b16 %v831
    %v1556 = vunpack.c.h.b16 %v831
    %v1557 = vunpack.c.l.b16 %v832
    %v1558 = vunpack.c.h.b16 %v832
    %v1559 = vunpack.c.l.b16 %v833
    %v1560 = vunpack.c.h.b16 %v833
    %v1561 = vunpack.c.l.b16 %v834
    %v1562 = vunpack.c.h.b16 %v834
    %v1563 = vunpack.c.l.b16 %v835
    %v1564 = vunpack.c.h.b16 %v835
    %v1565 = vunpack.c.l.b16 %v836
    %v1566 = vunpack.c.h.b16 %v836
    %v1567 = vunpack.c.l.b16 %v837
    %v1568 = vunpack.c.h.b16 %v837
    %v1569 = vunpack.c.l.b16 %v838
    %v1570 = vunpack.c.h.b16 %v838
    %v1571 = vunpack.c.l.b16 %v839
    %v1572 = vunpack.c.h.b16 %v839
    %v1573 = vunpack.c.l.b16 %v840
    %v1574 = vunpack.c.h.b16 %v840
    %v1575 = vunpack.c.l.b16 %v841
    %v1576 = vunpack.c.h.b16 %v841
    %v1577 = vunpack.c.l.b16 %v842
    %v1578 = vunpack.c.h.b16 %v842
    %v1579 = vunpack.c.l.b16 %v843
    %v1580 = vunpack.c.h.b16 %v843
    %v1581 = vunpack.c.l.b16 %v844
    %v1582 = vunpack.c.h.b16 %v844
    %v1583 = vunpack.c.l.b16 %v845
    %v1584 = vunpack.c.h.b16 %v845
    %v1585 = vunpack.c.l.b16 %v846
    %v1586 = vunpack.c.h.b16 %v846
    %v1587 = vunpack.c.l.b16 %v847
    %v1588 = vunpack.c.h.b16 %v847
    %v1589 = vunpack.c.l.b16 %v848
    %v1590 = vunpack.c.h.b16 %v848
    %v1591 = vunpack.c.l.b16 %v849
    %v1592 = vunpack.c.h.b16 %v849
    %v1593 = vunpack.c.l.b16 %v850
    %v1594 = vunpack.c.h.b16 %v850
    %v1595 = vunpack.c.l.b16 %v851
    %v1596 = vunpack.c.h.b16 %v851
    %v1597 = vunpack.c.l.b16 %v852
    %v1598 = vunpack.c.h.b16 %v852
    %v1599 = vunpack.c.l.b16 %v853
    %v1600 = vunpack.c.h.b16 %v853
    %v1601 = vunpack.c.l.b16 %v854
    %v1602 = vunpack.c.h.b16 %v854
    %v1603 = vunpack.c.l.b16 %v855
    %v1604 = vunpack.c.h.b16 %v855
    %v1605 = vunpack.c.l.b16 %v856
    %v1606 = vunpack.c.h.b16 %v856
    %v1607 = vunpack.c.l.b16 %v857
    %v1608 = vunpack.c.h.b16 %v857
    %v1609 = vunpack.c.l.b16 %v858
    %v1610 = vunpack.c.h.b16 %v858
    %v1611 = vunpack.c.l.b16 %v859
    %v1612 = vunpack.c.h.b16 %v859
    %v1613 = vunpack.c.l.b16 %v860
    %v1614 = vunpack.c.h.b16 %v860
    %v1615 = vunpack.c.l.b16 %v861
    %v1616 = vunpack.c.h.b16 %v861
    %v1617 = vunpack.c.l.b16 %v862
    %v1618 = vunpack.c.h.b16 %v862
    %v1619 = vunpack.c.l.b16 %v863
    %v1620 = vunpack.c.h.b16 %v863
    %v1621 = vunpack.c.l.b16 %v864
    %v1622 = vunpack.c.h.b16 %v864
    %v1623 = vunpack.c.l.b16 %v865
    %v1624 = vunpack.c.h.b16 %v865
    %v1625 = vunpack.c.l.b16 %v866
    %v1626 = vunpack.c.h.b16 %v866
    %v1627 = vunpack.c.l.b16 %v867
    %v1628 = vunpack.c.h.b16 %v867
    %v1629 = vunpack.c.l.b16 %v868
    %v1630 = vunpack.c.h.b16 %v868
    %v1631 = vunpack.c.l.b16 %v869
    %v1632 = vunpack.c.h.b16 %v869
    %v1633 = vunpack.c.l.b16 %v870
    %v1634 = vunpack.c.h.b16 %v870
    %v1635 = vunpack.c.l.b16 %v871
    %v1636 = vunpack.c.h.b16 %v871
    %v1637 = vunpack.c.l.b16 %v872
    %v1638 = vunpack.c.h.b16 %v872
    %v1639 = vunpack.c.l.b16 %v873
    %v1640 = vunpack.c.h.b16 %v873
    %v1641 = vunpack.c.l.b16 %v874
    %v1642 = vunpack.c.h.b16 %v874
    %v1643 = vunpack.c.l.b16 %v875
    %v1644 = vunpack.c.h.b16 %v875
    %v1645 = vunpack.c.l.b16 %v876
    %v1646 = vunpack.c.h.b16 %v876
    %v1647 = vunpack.c.l.b16 %v877
    %v1648 = vunpack.c.h.b16 %v877
    %v1649 = vunpack.c.l.b16 %v878
    %v1650 = vunpack.c.h.b16 %v878
    %v1651 = vunpack.c.l.b16 %v879
    %v1652 = vunpack.c.h.b16 %v879
    %v1653 = vunpack.c.l.b16 %v880
    %v1654 = vunpack.c.h.b16 %v880
    %v1655 = vunpack.c.l.b16 %v881
    %v1656 = vunpack.c.h.b16 %v881
    %v1657 = vunpack.c.l.b16 %v882
    %v1658 = vunpack.c.h.b16 %v882
    %v1659 = vunpack.c.l.b16 %v883
    %v1660 = vunpack.c.h.b16 %v883
    %v1661 = vunpack.c.l.b16 %v884
    %v1662 = vunpack.c.h.b16 %v884
    %v1663 = vunpack.c.l.b16 %v885
    %v1664 = vunpack.c.h.b16 %v885
    %v1665 = vunpack.c.l.b16 %v886
    %v1666 = vunpack.c.h.b16 %v886
    %v1667 = vunpack.c.l.b16 %v887
    %v1668 = vunpack.c.h.b16 %v887
    %v1669 = vunpack.c.l.b16 %v888
    %v1670 = vunpack.c.h.b16 %v888
    %v1671 = vunpack.c.l.b16 %v889
    %v1672 = vunpack.c.h.b16 %v889
    %v1673 = vunpack.c.l.b16 %v890
    %v1674 = vunpack.c.h.b16 %v890
    %v1675 = vunpack.c.l.b16 %v891
    %v1676 = vunpack.c.h.b16 %v891
    %v1677 = vunpack.c.l.b16 %v892
    %v1678 = vunpack.c.h.b16 %v892
    %v1679 = vunpack.c.l.b16 %v893
    %v1680 = vunpack.c.h.b16 %v893
    %v1681 = vunpack.c.l.b16 %v894
    %v1682 = vunpack.c.h.b16 %v894
    %v1683 = vunpack.c.l.b16 %v895
    %v1684 = vunpack.c.h.b16 %v895
    %v1685 = vunpack.c.l.b16 %v896
    %v1686 = vunpack.c.h.b16 %v896
    %v1687 = vunpack.c.l.b16 %v897
    %v1688 = vunpack.c.h.b16 %v897
    %v1689 = vunpack.c.l.b16 %v898
    %v1690 = vunpack.c.h.b16 %v898
    %v1691 = vunpack.c.l.b16 %v899
    %v1692 = vunpack.c.h.b16 %v899
    %v1693 = vunpack.c.l.b16 %v900
    %v1694 = vunpack.c.h.b16 %v900
    %v1695 = vunpack.c.l.b16 %v901
    %v1696 = vunpack.c.h.b16 %v901
    %v1697 = vunpack.c.l.b16 %v902
    %v1698 = vunpack.c.h.b16 %v902
    %v1699 = vunpack.c.l.b16 %v903
    %v1700 = vunpack.c.h.b16 %v903
    %v1701 = vunpack.c.l.b16 %v904
    %v1702 = vunpack.c.h.b16 %v904
    %v1703 = vunpack.c.l.b16 %v905
    %v1704 = vunpack.c.h.b16 %v905
    %v1705 = vunpack.c.l.b16 %v906
    %v1706 = vunpack.c.h.b16 %v906
    %v1707 = vunpack.c.l.b16 %v907
    %v1708 = vunpack.c.h.b16 %v907
    %v1709 = vunpack.c.l.b16 %v908
    %v1710 = vunpack.c.h.b16 %v908
    %v1711 = vunpack.c.l.b16 %v909
    %v1712 = vunpack.c.h.b16 %v909
    %v1713 = vunpack.c.l.b16 %v910
    %v1714 = vunpack.c.h.b16 %v910
    %v1715 = vunpack.c.l.b16 %v911
    %v1716 = vunpack.c.h.b16 %v911
    %v1717 = vunpack.c.l.b16 %v912
    %v1718 = vunpack.c.h.b16 %v912
    %v1719 = vunpack.c.l.b16 %v913
    %v1720 = vunpack.c.h.b16 %v913
    %v1721 = vunpack.c.l.b16 %v914
    %v1722 = vunpack.c.h.b16 %v914
    %v1723 = vunpack.c.l.b16 %v915
    %v1724 = vunpack.c.h.b16 %v915
    %v1725 = vunpack.c.l.b16 %v916
    %v1726 = vunpack.c.h.b16 %v916
    %v1727 = vunpack.c.l.b16 %v917
    %v1728 = vunpack.c.h.b16 %v917
    %v1729 = vunpack.c.l.b16 %v918
    %v1730 = vunpack.c.h.b16 %v918
    %v1731 = vunpack.c.l.b16 %v919
    %v1732 = vunpack.c.h.b16 %v919
    %v1733 = vunpack.c.l.b16 %v920
    %v1734 = vunpack.c.h.b16 %v920
    %v1735 = vunpack.c.l.b16 %v921
    %v1736 = vunpack.c.h.b16 %v921
    %v1737 = vunpack.c.l.b16 %v922
    %v1738 = vunpack.c.h.b16 %v922
    %v1739 = vunpack.c.l.b16 %v923
    %v1740 = vunpack.c.h.b16 %v923
    %v1741 = vunpack.c.l.b16 %v924
    %v1742 = vunpack.c.h.b16 %v924
    %v1743 = vunpack.c.l.b16 %v925
    %v1744 = vunpack.c.h.b16 %v925
    %v1745 = vunpack.c.l.b16 %v926
    %v1746 = vunpack.c.h.b16 %v926
    %v1747 = vunpack.c.l.b16 %v927
    %v1748 = vunpack.c.h.b16 %v927
    %v1749 = vunpack.c.l.b16 %v928
    %v1750 = vunpack.c.h.b16 %v928
    %v1751 = vunpack.c.l.b16 %v929
    %v1752 = vunpack.c.h.b16 %v929
    %v1753 = vunpack.c.l.b16 %v930
    %v1754 = vunpack.c.h.b16 %v930
    %v1755 = vunpack.c.l.b16 %v931
    %v1756 = vunpack.c.h.b16 %v931
    %v1757 = vunpack.c.l.b16 %v932
    %v1758 = vunpack.c.h.b16 %v932
    %v1759 = vunpack.c.l.b16 %v933
    %v1760 = vunpack.c.h.b16 %v933
    %v1761 = vunpack.c.l.b16 %v934
    %v1762 = vunpack.c.h.b16 %v934
    %v1763 = vunpack.c.l.b16 %v935
    %v1764 = vunpack.c.h.b16 %v935
    %v1765 = vunpack.c.l.b16 %v936
    %v1766 = vunpack.c.h.b16 %v936
    %v1767 = vunpack.c.l.b16 %v937
    %v1768 = vunpack.c.h.b16 %v937
    %v1769 = vunpack.c.l.b16 %v938
    %v1770 = vunpack.c.h.b16 %v938
    %v1771 = vunpack.c.l.b16 %v939
    %v1772 = vunpack.c.h.b16 %v939
    %v1773 = vunpack.c.l.b16 %v940
    %v1774 = vunpack.c.h.b16 %v940
    %v1775 = vunpack.c.l.b16 %v941
    %v1776 = vunpack.c.h.b16 %v941
    %v1777 = vunpack.c.l.b16 %v942
    %v1778 = vunpack.c.h.b16 %v942
    %v1779 = vunpack.c.l.b16 %v943
    %v1780 = vunpack.c.h.b16 %v943
    %v1781 = vunpack.c.l.b16 %v944
    %v1782 = vunpack.c.h.b16 %v944
    %v1783 = vunpack.c.l.b16 %v945
    %v1784 = vunpack.c.h.b16 %v945
    %v1785 = vunpack.c.l.b16 %v946
    %v1786 = vunpack.c.h.b16 %v946
    %v1787 = vunpack.c.l.b16 %v947
    %v1788 = vunpack.c.h.b16 %v947
    %v1789 = vunpack.c.l.b16 %v948
    %v1790 = vunpack.c.h.b16 %v948
    %v1791 = vunpack.c.l.b16 %v949
    %v1792 = vunpack.c.h.b16 %v949
    %v1793 = vunpack.c.l.b16 %v950
    %v1794 = vunpack.c.h.b16 %v950
    %v1795 = vunpack.c.l.b16 %v951
    %v1796 = vunpack.c.h.b16 %v951
    %v1797 = vunpack.c.l.b16 %v952
    %v1798 = vunpack.c.h.b16 %v952
    %v1799 = vunpack.c.l.b16 %v953
    %v1800 = vunpack.c.h.b16 %v953
    %v1801 = vunpack.c.l.b16 %v954
    %v1802 = vunpack.c.h.b16 %v954
    %v1803 = vunpack.c.l.b16 %v955
    %v1804 = vunpack.c.h.b16 %v955
    %v1805 = vunpack.c.l.b16 %v956
    %v1806 = vunpack.c.h.b16 %v956
    %v1807 = vunpack.c.l.b16 %v957
    %v1808 = vunpack.c.h.b16 %v957
    %v1809 = vunpack.c.l.b16 %v958
    %v1810 = vunpack.c.h.b16 %v958
    %v1811 = vunpack.c.l.b16 %v959
    %v1812 = vunpack.c.h.b16 %v959
    %v1813 = vunpack.c.l.b16 %v960
    %v1814 = vunpack.c.h.b16 %v960
    %v1815 = vunpack.c.l.b16 %v961
    %v1816 = vunpack.c.h.b16 %v961
    %v1817 = vunpack.c.l.b16 %v962
    %v1818 = vunpack.c.h.b16 %v962
    %v1819 = vunpack.c.l.b16 %v963
    %v1820 = vunpack.c.h.b16 %v963
    %v1821 = vunpack.c.l.b16 %v964
    %v1822 = vunpack.c.h.b16 %v964
    %v1823 = vunpack.c.l.b16 %v965
    %v1824 = vunpack.c.h.b16 %v965
    %v1825 = vunpack.c.l.b16 %v966
    %v1826 = vunpack.c.h.b16 %v966
    %v1827 = vunpack.c.l.b16 %v967
    %v1828 = vunpack.c.h.b16 %v967
    %v1829 = vunpack.c.l.b16 %v968
    %v1830 = vunpack.c.h.b16 %v968
    %v1831 = vunpack.c.l.b16 %v969
    %v1832 = vunpack.c.h.b16 %v969
    %v1833 = vunpack.c.l.b16 %v970
    %v1834 = vunpack.c.h.b16 %v970
    %v1835 = vunpack.c.l.b16 %v971
    %v1836 = vunpack.c.h.b16 %v971
    %v1837 = vunpack.c.l.b16 %v972
    %v1838 = vunpack.c.h.b16 %v972
    %v1839 = vunpack.c.l.b16 %v973
    %v1840 = vunpack.c.h.b16 %v973
    %v1841 = vunpack.c.l.b16 %v974
    %v1842 = vunpack.c.h.b16 %v974
    %v1843 = vunpack.c.l.b16 %v975
    %v1844 = vunpack.c.h.b16 %v975
    %v1845 = vunpack.c.l.b16 %v976
    %v1846 = vunpack.c.h.b16 %v976
    %v1847 = vunpack.c.l.b16 %v977
    %v1848 = vunpack.c.h.b16 %v977
    %v1849 = vunpack.c.l.b16 %v978
    %v1850 = vunpack.c.h.b16 %v978
    %v1851 = vunpack.c.l.b16 %v979
    %v1852 = vunpack.c.h.b16 %v979
    %v1853 = vunpack.c.l.b16 %v980
    %v1854 = vunpack.c.h.b16 %v980
    %v1855 = vunpack.c.l.b16 %v981
    %v1856 = vunpack.c.h.b16 %v981
    %v1857 = vunpack.c.l.b16 %v982
    %v1858 = vunpack.c.h.b16 %v982
    %v1859 = vunpack.c.l.b16 %v983
    %v1860 = vunpack.c.h.b16 %v983
    %v1861 = vunpack.c.l.b16 %v984
    %v1862 = vunpack.c.h.b16 %v984
    %v1863 = vunpack.c.l.b16 %v985
    %v1864 = vunpack.c.h.b16 %v985
    %v1865 = vunpack.c.l.b16 %v986
    %v1866 = vunpack.c.h.b16 %v986
    %v1867 = vunpack.c.l.b16 %v987
    %v1868 = vunpack.c.h.b16 %v987
    %v1869 = vunpack.c.l.b16 %v988
    %v1870 = vunpack.c.h.b16 %v988
    %v1871 = vunpack.c.l.b16 %v989
    %v1872 = vunpack.c.h.b16 %v989
    %v1873 = vunpack.c.l.b16 %v990
    %v1874 = vunpack.c.h.b16 %v990
    %v1875 = vunpack.c.l.b16 %v991
    %v1876 = vunpack.c.h.b16 %v991
    %v1877 = vunpack.c.l.b16 %v992
    %v1878 = vunpack.c.h.b16 %v992
    %v1879 = vunpack.c.l.b16 %v993
    %v1880 = vunpack.c.h.b16 %v993
    %v1881 = vunpack.c.l.b16 %v994
    %v1882 = vunpack.c.h.b16 %v994
    %v1883 = vunpack.c.l.b16 %v995
    %v1884 = vunpack.c.h.b16 %v995
    %v1885 = vunpack.c.l.b16 %v996
    %v1886 = vunpack.c.h.b16 %v996
    %v1887 = vunpack.c.l.b16 %v997
    %v1888 = vunpack.c.h.b16 %v997
    %v1889 = vunpack.c.l.b16 %v998
    %v1890 = vunpack.c.h.b16 %v998
    %v1891 = vunpack.c.l.b16 %v999
    %v1892 = vunpack.c.h.b16 %v999
    %v1893 = vunpack.c.l.b16 %v1000
    %v1894 = vunpack.c.h.b16 %v1000
    %v1895 = vunpack.c.l.b16 %v1001
    %v1896 = vunpack.c.h.b16 %v1001
    %v1897 = vunpack.c.l.b16 %v1002
    %v1898 = vunpack.c.h.b16 %v1002
    %v1899 = vpack.c.b16 %v1329, %v1323
    %v1900 = vpack.c.b16 %v1330, %v1324
    %v1901 = vpack.c.b16 %v1331, %v1325
    %v1902 = vpack.c.b16 %v1332, %v1326
    %v1903 = vpack.c.b16 %v1333, %v1327
    %v1904 = vpack.c.b16 %v1334, %v1328
    %v1905 = vpack.c.b16 %v1341, %v1335
    %v1906 = vpack.c.b16 %v1342, %v1336
    %v1907 = vpack.c.b16 %v1343, %v1337
    %v1908 = vpack.c.b16 %v1344, %v1338
    %v1909 = vpack.c.b16 %v1345, %v1339
    %v1910 = vpack.c.b16 %v1346, %v1340
    %v1911 = vpack.c.b16 %v1353, %v1347
    %v1912 = vpack.c.b16 %v1354, %v1348
    %v1913 = vpack.c.b16 %v1355, %v1349
    %v1914 = vpack.c.b16 %v1356, %v1350
    %v1915 = vpack.c.b16 %v1357, %v1351
    %v1916 = vpack.c.b16 %v1358, %v1352
    %v1917 = vpack.c.b16 %v1365, %v1359
    %v1918 = vpack.c.b16 %v1366, %v1360
    %v1919 = vpack.c.b16 %v1367, %v1361
    %v1920 = vpack.c.b16 %v1368, %v1362
    %v1921 = vpack.c.b16 %v1369, %v1363
    %v1922 = vpack.c.b16 %v1370, %v1364
    %v1923 = vpack.c.b16 %v1377, %v1371
    %v1924 = vpack.c.b16 %v1378, %v1372
    %v1925 = vpack.c.b16 %v1379, %v1373
    %v1926 = vpack.c.b16 %v1380, %v1374
    %v1927 = vpack.c.b16 %v1381, %v1375
    %v1928 = vpack.c.b16 %v1382, %v1376
    %v1929 = vpack.c.b16 %v1389, %v1383
    %v1930 = vpack.c.b16 %v1390, %v1384
    %v1931 = vpack.c.b16 %v1391, %v1385
    %v1932 = vpack.c.b16 %v1392, %v1386
    %v1933 = vpack.c.b16 %v1393, %v1387
    %v1934 = vpack.c.b16 %v1394, %v1388
    %v1935 = vpack.c.b16 %v1401, %v1395
    %v1936 = vpack.c.b16 %v1402, %v1396
    %v1937 = vpack.c.b16 %v1403, %v1397
    %v1938 = vpack.c.b16 %v1404, %v1398
    %v1939 = vpack.c.b16 %v1405, %v1399
    %v1940 = vpack.c.b16 %v1406, %v1400
    %v1941 = vpack.c.b16 %v1413, %v1407
    %v1942 = vpack.c.b16 %v1414, %v1408
    %v1943 = vpack.c.b16 %v1415, %v1409
    %v1944 = vpack.c.b16 %v1416, %v1410
    %v1945 = vpack.c.b16 %v1417, %v1411
    %v1946 = vpack.c.b16 %v1418, %v1412
    %v1947 = vpack.c.b16 %v1425, %v1419
    %v1948 = vpack.c.b16 %v1426, %v1420
    %v1949 = vpack.c.b16 %v1427, %v1421
    %v1950 = vpack.c.b16 %v1428, %v1422
    %v1951 = vpack.c.b16 %v1429, %v1423
    %v1952 = vpack.c.b16 %v1430, %v1424
    %v1953 = vpack.c.b16 %v1437, %v1431
    %v1954 = vpack.c.b16 %v1438, %v1432
    %v1955 = vpack.c.b16 %v1439, %v1433
    %v1956 = vpack.c.b16 %v1440, %v1434
    %v1957 = vpack.c.b16 %v1441, %v1435
    %v1958 = vpack.c.b16 %v1442, %v1436
    %v1959 = vpack.c.b16 %v1449, %v1443
    %v1960 = vpack.c.b16 %v1450, %v1444
    %v1961 = vpack.c.b16 %v1451, %v1445
    %v1962 = vpack.c.b16 %v1452, %v1446
    %v1963 = vpack.c.b16 %v1453, %v1447
    %v1964 = vpack.c.b16 %v1454, %v1448
    %v1965 = vpack.c.b16 %v1461, %v1455
    %v1966 = vpack.c.b16 %v1462, %v1456
    %v1967 = vpack.c.b16 %v1463, %v1457
    %v1968 = vpack.c.b16 %v1464, %v1458
    %v1969 = vpack.c.b16 %v1465, %v1459
    %v1970 = vpack.c.b16 %v1466, %v1460
    %v1971 = vpack.c.b16 %v1473, %v1467
    %v1972 = vpack.c.b16 %v1474, %v1468
    %v1973 = vpack.c.b16 %v1475, %v1469
    %v1974 = vpack.c.b16 %v1476, %v1470
    %v1975 = vpack.c.b16 %v1477, %v1471
    %v1976 = vpack.c.b16 %v1478, %v1472
    %v1977 = vpack.c.b16 %v1485, %v1479
    %v1978 = vpack.c.b16 %v1486, %v1480
    %v1979 = vpack.c.b16 %v1487, %v1481
    %v1980 = vpack.c.b16 %v1488, %v1482
    %v1981 = vpack.c.b16 %v1489, %v1483
    %v1982 = vpack.c.b16 %v1490, %v1484
    %v1983 = vpack.c.b16 %v1497, %v1491
    %v1984 = vpack.c.b16 %v1498, %v1492
    %v1985 = vpack.c.b16 %v1499, %v1493
    %v1986 = vpack.c.b16 %v1500, %v1494
    %v1987 = vpack.c.b16 %v1501, %v1495
    %v1988 = vpack.c.b16 %v1502, %v1496
    %v1989 = vpack.c.b16 %v1509, %v1503
    %v1990 = vpack.c.b16 %v1510, %v1504
    %v1991 = vpack.c.b16 %v1511, %v1505
    %v1992 = vpack.c.b16 %v1512, %v1506
    %v1993 = vpack.c.b16 %v1513, %v1507
    %v1994 = vpack.c.b16 %v1514, %v1508
    %v1995 = vpack.c.b16 %v1521, %v1515
    %v1996 = vpack.c.b16 %v1522, %v1516
    %v1997 = vpack.c.b16 %v1523, %v1517
    %v1998 = vpack.c.b16 %v1524, %v1518
    %v1999 = vpack.c.b16 %v1525, %v1519
    %v2000 = vpack.c.b16 %v1526, %v1520
    %v2001 = vpack.c.b16 %v1533, %v1527
    %v2002 = vpack.c.b16 %v1534, %v1528
    %v2003 = vpack.c.b16 %v1535, %v1529
    %v2004 = vpack.c.b16 %v1536, %v1530
    %v2005 = vpack.c.b16 %v1537, %v1531
    %v2006 = vpack.c.b16 %v1538, %v1532
    %v2007 = vpack.c.b16 %v1545, %v1539
    %v2008 = vpack.c.b16 %v1546, %v1540
    %v2009 = vpack.c.b16 %v1547, %v1541
    %v2010 = vpack.c.b16 %v1548, %v1542
    %v2011 = vpack.c.b16 %v1549, %v1543
    %v2012 = vpack.c.b16 %v1550, %v1544
    %v2013 = vpack.c.b16 %v1557, %v1551
    %v2014 = vpack.c.b16 %v1558, %v1552
    %v2015 = vpack.c.b16 %v1559, %v1553
    %v2016 = vpack.c.b16 %v1560, %v1554
    %v2017 = vpack.c.b16 %v1561, %v1555
    %v2018 = vpack.c.b16 %v1562, %v1556
    %v2019 = vpack.c.b16 %v1569, %v1563
    %v2020 = vpack.c.b16 %v1570, %v1564
    %v2021 = vpack.c.b16 %v1571, %v1565
    %v2022 = vpack.c.b16 %v1572, %v1566
    %v2023 = vpack.c.b16 %v1573, %v1567
    %v2024 = vpack.c.b16 %v1574, %v1568
    %v2025 = vpack.c.b16 %v1581, %v1575
    %v2026 = vpack.c.b16 %v1582, %v1576
    %v2027 = vpack.c.b16 %v1583, %v1577
    %v2028 = vpack.c.b16 %v1584, %v1578
    %v2029 = vpack.c.b16 %v1585, %v1579
    %v2030 = vpack.c.b16 %v1586, %v1580
    %v2031 = vpack.c.b16 %v1593, %v1587
    %v2032 = vpack.c.b16 %v1594, %v1588
    %v2033 = vpack.c.b16 %v1595, %v1589
    %v2034 = vpack.c.b16 %v1596, %v1590
    %v2035 = vpack.c.b16 %v1597, %v1591
    %v2036 = vpack.c.b16 %v1598, %v1592
    %v2037 = vpack.c.b16 %v1605, %v1599
    %v2038 = vpack.c.b16 %v1606, %v1600
    %v2039 = vpack.c.b16 %v1607, %v1601
    %v2040 = vpack.c.b16 %v1608, %v1602
    %v2041 = vpack.c.b16 %v1609, %v1603
    %v2042 = vpack.c.b16 %v1610, %v1604
    %v2043 = vpack.c.b16 %v1617, %v1611
    %v2044 = vpack.c.b16 %v1618, %v1612
    %v2045 = vpack.c.b16 %v1619, %v1613
    %v2046 = vpack.c.b16 %v1620, %v1614
    %v2047 = vpack.c.b16 %v1621, %v1615
    %v2048 = vpack.c.b16 %v1622, %v1616
    %v2049 = vpack.c.b16 %v1629, %v1623
    %v2050 = vpack.c.b16 %v1630, %v1624
    %v2051 = vpack.c.b16 %v1631, %v1625
    %v2052 = vpack.c.b16 %v1632, %v1626
    %v2053 = vpack.c.b16 %v1633, %v1627
    %v2054 = vpack.c.b16 %v1634, %v1628
    %v2055 = vpack.c.b16 %v1641, %v1635
    %v2056 = vpack.c.b16 %v1642, %v1636
    %v2057 = vpack.c.b16 %v1643, %v1637
    %v2058 = vpack.c.b16 %v1644, %v1638
    %v2059 = vpack.c.b16 %v1645, %v1639
    %v2060 = vpack.c.b16 %v1646, %v1640
    %v2061 = vpack.c.b16 %v1653, %v1647
    %v2062 = vpack.c.b16 %v1654, %v1648
    %v2063 = vpack.c.b16 %v1655, %v1649
    %v2064 = vpack.c.b16 %v1656, %v1650
    %v2065 = vpack.c.b16 %v1657, %v1651
    %v2066 = vpack.c.b16 %v1658, %v1652
    %v2067 = vpack.c.b16 %v1665, %v1659
    %v2068 = vpack.c.b16 %v1666, %v1660
    %v2069 = vpack.c.b16 %v1667, %v1661
    %v2070 = vpack.c.b16 %v1668, %v1662
    %v2071 = vpack.c.b16 %v1669, %v1663
    %v2072 = vpack.c.b16 %v1670, %v1664
    %v2073 = vpack.c.b16 %v1677, %v1671
    %v2074 = vpack.c.b16 %v1678, %v1672
    %v2075 = vpack.c.b16 %v1679, %v1673
    %v2076 = vpack.c.b16 %v1680, %v1674
    %v2077 = vpack.c.b16 %v1681, %v1675
    %v2078 = vpack.c.b16 %v1682, %v1676
    %v2079 = vpack.c.b16 %v1689, %v1683
    %v2080 = vpack.c.b16 %v1690, %v1684
    %v2081 = vpack.c.b16 %v1691, %v1685
    %v2082 = vpack.c.b16 %v1692, %v1686
    %v2083 = vpack.c.b16 %v1693, %v1687
    %v2084 = vpack.c.b16 %v1694, %v1688
    %v2085 = vpack.c.b16 %v1701, %v1695
    %v2086 = vpack.c.b16 %v1702, %v1696
    %v2087 = vpack.c.b16 %v1703, %v1697
    %v2088 = vpack.c.b16 %v1704, %v1698
    %v2089 = vpack.c.b16 %v1705, %v1699
    %v2090 = vpack.c.b16 %v1706, %v1700
    %v2091 = vpack.c.b16 %v1713, %v1707
    %v2092 = vpack.c.b16 %v1714, %v1708
    %v2093 = vpack.c.b16 %v1715, %v1709
    %v2094 = vpack.c.b16 %v1716, %v1710
    %v2095 = vpack.c.b16 %v1717, %v1711
    %v2096 = vpack.c.b16 %v1718, %v1712
    %v2097 = vpack.c.b16 %v1725, %v1719
    %v2098 = vpack.c.b16 %v1726, %v1720
    %v2099 = vpack.c.b16 %v1727, %v1721
    %v2100 = vpack.c.b16 %v1728, %v1722
    %v2101 = vpack.c.b16 %v1729, %v1723
    %v2102 = vpack.c.b16 %v1730, %v1724
    %v2103 = vpack.c.b16 %v1737, %v1731
    %v2104 = vpack.c.b16 %v1738, %v1732
    %v2105 = vpack.c.b16 %v1739, %v1733
    %v2106 = vpack.c.b16 %v1740, %v1734
    %v2107 = vpack.c.b16 %v1741, %v1735
    %v2108 = vpack.c.b16 %v1742, %v1736
    %v2109 = vpack.c.b16 %v1749, %v1743
    %v2110 = vpack.c.b16 %v1750, %v1744
    %v2111 = vpack.c.b16 %v1751, %v1745
    %v2112 = vpack.c.b16 %v1752, %v1746
    %v2113 = vpack.c.b16 %v1753, %v1747
    %v2114 = vpack.c.b16 %v1754, %v1748
    %v2115 = vpack.c.b16 %v1761, %v1755
    %v2116 = vpack.c.b16 %v1762, %v1756
    %v2117 = vpack.c.b16 %v1763, %v1757
    %v2118 = vpack.c.b16 %v1764, %v1758
    %v2119 = vpack.c.b16 %v1765, %v1759
    %v2120 = vpack.c.b16 %v1766, %v1760
    %v2121 = vpack.c.b16 %v1773, %v1767
    %v2122 = vpack.c.b16 %v1774, %v1768
    %v2123 = vpack.c.b16 %v1775, %v1769
    %v2124 = vpack.c.b16 %v1776, %v1770
    %v2125 = vpack.c.b16 %v1777, %v1771
    %v2126 = vpack.c.b16 %v1778, %v1772
    %v2127 = vpack.c.b16 %v1785, %v1779
    %v2128 = vpack.c.b16 %v1786, %v1780
    %v2129 = vpack.c.b16 %v1787, %v1781
    %v2130 = vpack.c.b16 %v1788, %v1782
    %v2131 = vpack.c.b16 %v1789, %v1783
    %v2132 = vpack.c.b16 %v1790, %v1784
    %v2133 = vpack.c.b16 %v1797, %v1791
    %v2134 = vpack.c.b16 %v1798, %v1792
    %v2135 = vpack.c.b16 %v1799, %v1793
    %v2136 = vpack.c.b16 %v1800, %v1794
    %v2137 = vpack.c.b16 %v1801, %v1795
    %v2138 = vpack.c.b16 %v1802, %v1796
    %v2139 = vpack.c.b16 %v1809, %v1803
    %v2140 = vpack.c.b16 %v1810, %v1804
    %v2141 = vpack.c.b16 %v1811, %v1805
    %v2142 = vpack.c.b16 %v1812, %v1806
    %v2143 = vpack.c.b16 %v1813, %v1807
    %v2144 = vpack.c.b16 %v1814, %v1808
    %v2145 = vpack.c.b16 %v1821, %v1815
    %v2146 = vpack.c.b16 %v1822, %v1816
    %v2147 = vpack.c.b16 %v1823, %v1817
    %v2148 = vpack.c.b16 %v1824, %v1818
    %v2149 = vpack.c.b16 %v1825, %v1819
    %v2150 = vpack.c.b16 %v1826, %v1820
    %v2151 = vpack.c.b16 %v1833, %v1827
    %v2152 = vpack.c.b16 %v1834, %v1828
    %v2153 = vpack.c.b16 %v1835, %v1829
    %v2154 = vpack.c.b16 %v1836, %v1830
    %v2155 = vpack.c.b16 %v1837, %v1831
    %v2156 = vpack.c.b16 %v1838, %v1832
    %v2157 = vpack.c.b16 %v1845, %v1839
    %v2158 = vpack.c.b16 %v1846, %v1840
    %v2159 = vpack.c.b16 %v1847, %v1841
    %v2160 = vpack.c.b16 %v1848, %v1842
    %v2161 = vpack.c.b16 %v1849, %v1843
    %v2162 = vpack.c.b16 %v1850, %v1844
    %v2163 = vpack.c.b16 %v1857, %v1851
    %v2164 = vpack.c.b16 %v1858, %v1852
    %v2165 = vpack.c.b16 %v1859, %v1853
    %v2166 = vpack.c.b16 %v1860, %v1854
    %v2167 = vpack.c.b16 %v1861, %v1855
    %v2168 = vpack.c.b16 %v1862, %v1856
    %v2169 = vpack.c.b16 %v1869, %v1863
    %v2170 = vpack.c.b16 %v1870, %v1864
    %v2171 = vpack.c.b16 %v1871, %v1865
    %v2172 = vpack.c.b16 %v1872, %v1866
    %v2173 = vpack.c.b16 %v1873, %v1867
    %v2174 = vpack.c.b16 %v1874, %v1868
    %v2175 = vpack.c.b16 %v1881, %v1875
    %v2176 = vpack.c.b16 %v1882, %v1876
    %v2177 = vpack.c.b16 %v1883, %v1877
    %v2178 = vpack.c.b16 %v1884, %v1878
    %v2179 = vpack.c.b16 %v1885, %v1879
    %v2180 = vpack.c.b16 %v1886, %v1880
    %v2181 = vpack.c.b16 %v1893, %v1887
    %v2182 = vpack.c.b16 %v1894, %v1888
    %v2183 = vpack.c.b16 %v1895, %v1889
    %v2184 = vpack.c.b16 %v1896, %v1890
    %v2185 = vpack.c.b16 %v1897, %v1891
    %v2186 = vpack.c.b16 %v1898, %v1892
    %2475 = vmatprep.subr.bf16.mxu0 %v1942
    %2476 = vmatpush1.bf16.msra.mxu0 %v1941
    %2477 = vmatprep.subr.bf16.mxu0 %v1936
    %2478 = vmatpush1.bf16.msra.mxu0 %v1935
    %2479 = vmatprep.subr.bf16.mxu0 %v1930
    %2480 = vmatpush1.bf16.msra.mxu0 %v1929
    %2481 = vmatprep.subr.bf16.mxu0 %v1924
    %2482 = vmatpush1.bf16.msra.mxu0 %v1923
    %2483 = vmatprep.subr.bf16.mxu0 %v1918
    %2484 = vmatpush1.bf16.msra.mxu0 %v1917
    %2485 = vmatprep.subr.bf16.mxu0 %v1912
    %2486 = vmatpush1.bf16.msra.mxu0 %v1911
    %2487 = vmatprep.subr.bf16.mxu0 %v1906
    %2488 = vmatpush1.bf16.msra.mxu0 %v1905
    %2489 = vmatprep.subr.bf16.mxu0 %v1900
    %2490 = vmatpush1.bf16.msra.mxu0 %v1899
    %2491 = vmatprep.subr.bf16.mxu0 %v1990
    %2492 = vmatpush2.bf16.msra.mxu0 %v1989
    %2493 = vmatprep.subr.bf16.mxu0 %v1984
    %2494 = vmatpush2.bf16.msra.mxu0 %v1983
    %2495 = vmatprep.subr.bf16.mxu0 %v1978
    %2496 = vmatpush2.bf16.msra.mxu0 %v1977
    %2497 = vmatprep.subr.bf16.mxu0 %v1972
    %2498 = vmatpush2.bf16.msra.mxu0 %v1971
    %2499 = vmatprep.subr.bf16.mxu0 %v1966
    %2500 = vmatpush2.bf16.msra.mxu0 %v1965
    %2501 = vmatprep.subr.bf16.mxu0 %v1960
    %2502 = vmatpush2.bf16.msra.mxu0 %v1959
    %2503 = vmatprep.subr.bf16.mxu0 %v1954
    %2504 = vmatpush2.bf16.msra.mxu0 %v1953
    %2505 = vmatprep.subr.bf16.mxu0 %v1948
    %2506 = vmatpush2.bf16.msra.mxu0 %v1947
    %2507 = vmatprep.mubr.bf16.mxu0 %v710
    %2508 = vmatmul.mubr.bf16.gmra.mxu0 %v709
    %v2509 = vpop.f32.mrf.mxu0
    %v2510 = vadd.f32 %v1008, %v2509
    %v2511 = vpop.f32.mrf.mxu0
    %v2512 = vadd.f32 %v1012, %v2511
    %v2513 = vpop.f32.mrf.mxu0
    %v2514 = vpop.f32.mrf.mxu0
    %2515 = vdwg.mxu0
    %2516 = vmatprep.subr.bf16.mxu0 %v2038
    %2517 = vmatpush1.bf16.msra.mxu0 %v2037
    %2518 = vmatprep.subr.bf16.mxu0 %v2032
    %2519 = vmatpush1.bf16.msra.mxu0 %v2031
    %2520 = vmatprep.subr.bf16.mxu0 %v2026
    %2521 = vmatpush1.bf16.msra.mxu0 %v2025
    %2522 = vmatprep.subr.bf16.mxu0 %v2020
    %2523 = vmatpush1.bf16.msra.mxu0 %v2019
    %2524 = vmatprep.subr.bf16.mxu0 %v2014
    %2525 = vmatpush1.bf16.msra.mxu0 %v2013
    %2526 = vmatprep.subr.bf16.mxu0 %v2008
    %2527 = vmatpush1.bf16.msra.mxu0 %v2007
    %2528 = vmatprep.subr.bf16.mxu0 %v2002
    %2529 = vmatpush1.bf16.msra.mxu0 %v2001
    %2530 = vmatprep.subr.bf16.mxu0 %v1996
    %2531 = vmatpush1.bf16.msra.mxu0 %v1995
    %2532 = vmatprep.subr.bf16.mxu0 %v2086
    %2533 = vmatpush2.bf16.msra.mxu0 %v2085
    %2534 = vmatprep.subr.bf16.mxu0 %v2080
    %2535 = vmatpush2.bf16.msra.mxu0 %v2079
    %2536 = vmatprep.subr.bf16.mxu0 %v2074
    %2537 = vmatpush2.bf16.msra.mxu0 %v2073
    %2538 = vmatprep.subr.bf16.mxu0 %v2068
    %2539 = vmatpush2.bf16.msra.mxu0 %v2067
    %2540 = vmatprep.subr.bf16.mxu0 %v2062
    %2541 = vmatpush2.bf16.msra.mxu0 %v2061
    %2542 = vmatprep.subr.bf16.mxu0 %v2056
    %2543 = vmatpush2.bf16.msra.mxu0 %v2055
    %2544 = vmatprep.subr.bf16.mxu0 %v2050
    %2545 = vmatpush2.bf16.msra.mxu0 %v2049
    %2546 = vmatprep.subr.bf16.mxu0 %v2044
    %2547 = vmatpush2.bf16.msra.mxu0 %v2043
    %2548 = vmatprep.mubr.bf16.mxu0 %v712
    %2549 = vmatmul.mubr.bf16.gmra.mxu0 %v711
    %v2550 = vpop.f32.mrf.mxu0
    %v2551 = vadd.f32 %v2510, %v2550
    %v2552 = vpop.f32.mrf.mxu0
    %v2553 = vadd.f32 %v2512, %v2552
    %v2554 = vpop.f32.mrf.mxu0
    %v2555 = vpop.f32.mrf.mxu0
    %2556 = vdwg.mxu0
    %2557 = vmatprep.subr.bf16.mxu0 %v2134
    %2558 = vmatpush1.bf16.msra.mxu0 %v2133
    %2559 = vmatprep.subr.bf16.mxu0 %v2128
    %2560 = vmatpush1.bf16.msra.mxu0 %v2127
    %2561 = vmatprep.subr.bf16.mxu0 %v2122
    %2562 = vmatpush1.bf16.msra.mxu0 %v2121
    %2563 = vmatprep.subr.bf16.mxu0 %v2116
    %2564 = vmatpush1.bf16.msra.mxu0 %v2115
    %2565 = vmatprep.subr.bf16.mxu0 %v2110
    %2566 = vmatpush1.bf16.msra.mxu0 %v2109
    %2567 = vmatprep.subr.bf16.mxu0 %v2104
    %2568 = vmatpush1.bf16.msra.mxu0 %v2103
    %2569 = vmatprep.subr.bf16.mxu0 %v2098
    %2570 = vmatpush1.bf16.msra.mxu0 %v2097
    %2571 = vmatprep.subr.bf16.mxu0 %v2092
    %2572 = vmatpush1.bf16.msra.mxu0 %v2091
    %2573 = vmatprep.subr.bf16.mxu0 %v2182
    %2574 = vmatpush2.bf16.msra.mxu0 %v2181
    %2575 = vmatprep.subr.bf16.mxu0 %v2176
    %2576 = vmatpush2.bf16.msra.mxu0 %v2175
    %2577 = vmatprep.subr.bf16.mxu0 %v2170
    %2578 = vmatpush2.bf16.msra.mxu0 %v2169
    %2579 = vmatprep.subr.bf16.mxu0 %v2164
    %2580 = vmatpush2.bf16.msra.mxu0 %v2163
    %2581 = vmatprep.subr.bf16.mxu0 %v2158
    %2582 = vmatpush2.bf16.msra.mxu0 %v2157
    %2583 = vmatprep.subr.bf16.mxu0 %v2152
    %2584 = vmatpush2.bf16.msra.mxu0 %v2151
    %2585 = vmatprep.subr.bf16.mxu0 %v2146
    %2586 = vmatpush2.bf16.msra.mxu0 %v2145
    %2587 = vmatprep.subr.bf16.mxu0 %v2140
    %2588 = vmatpush2.bf16.msra.mxu0 %v2139
    %2589 = vmatprep.mubr.bf16.mxu0 %v714
    %2590 = vmatmul.mubr.bf16.gmra.mxu0 %v713
    %v2591 = vpop.f32.mrf.mxu0
    %v2592 = vadd.f32 %v2551, %v2591
    %v2593 = vpop.f32.mrf.mxu0
    %v2594 = vadd.f32 %v2553, %v2593
    %v2595 = vpop.f32.mrf.mxu0
    %v2596 = vpop.f32.mrf.mxu0
    %2597 = vdwg.mxu0
    %2598 = vmatprep.subr.bf16.mxu0 %v1944
    %2599 = vmatpush1.bf16.msra.mxu0 %v1943
    %2600 = vmatprep.subr.bf16.mxu0 %v1938
    %2601 = vmatpush1.bf16.msra.mxu0 %v1937
    %2602 = vmatprep.subr.bf16.mxu0 %v1932
    %2603 = vmatpush1.bf16.msra.mxu0 %v1931
    %2604 = vmatprep.subr.bf16.mxu0 %v1926
    %2605 = vmatpush1.bf16.msra.mxu0 %v1925
    %2606 = vmatprep.subr.bf16.mxu0 %v1920
    %2607 = vmatpush1.bf16.msra.mxu0 %v1919
    %2608 = vmatprep.subr.bf16.mxu0 %v1914
    %2609 = vmatpush1.bf16.msra.mxu0 %v1913
    %2610 = vmatprep.subr.bf16.mxu0 %v1908
    %2611 = vmatpush1.bf16.msra.mxu0 %v1907
    %2612 = vmatprep.subr.bf16.mxu0 %v1902
    %2613 = vmatpush1.bf16.msra.mxu0 %v1901
    %2614 = vmatprep.subr.bf16.mxu0 %v1992
    %2615 = vmatpush2.bf16.msra.mxu0 %v1991
    %2616 = vmatprep.subr.bf16.mxu0 %v1986
    %2617 = vmatpush2.bf16.msra.mxu0 %v1985
    %2618 = vmatprep.subr.bf16.mxu0 %v1980
    %2619 = vmatpush2.bf16.msra.mxu0 %v1979
    %2620 = vmatprep.subr.bf16.mxu0 %v1974
    %2621 = vmatpush2.bf16.msra.mxu0 %v1973
    %2622 = vmatprep.subr.bf16.mxu0 %v1968
    %2623 = vmatpush2.bf16.msra.mxu0 %v1967
    %2624 = vmatprep.subr.bf16.mxu0 %v1962
    %2625 = vmatpush2.bf16.msra.mxu0 %v1961
    %2626 = vmatprep.subr.bf16.mxu0 %v1956
    %2627 = vmatpush2.bf16.msra.mxu0 %v1955
    %2628 = vmatprep.subr.bf16.mxu0 %v1950
    %2629 = vmatpush2.bf16.msra.mxu0 %v1949
    %2630 = vmatprep.mubr.bf16.mxu0 %v710
    %2631 = vmatmul.mubr.bf16.gmra.mxu0 %v709
    %v2632 = vpop.f32.mrf.mxu0
    %v2633 = vadd.f32 %v1016, %v2632
    %v2634 = vpop.f32.mrf.mxu0
    %v2635 = vadd.f32 %v1020, %v2634
    %v2636 = vpop.f32.mrf.mxu0
    %v2637 = vpop.f32.mrf.mxu0
    %2638 = vdwg.mxu0
    %2639 = vmatprep.subr.bf16.mxu0 %v2040
    %2640 = vmatpush1.bf16.msra.mxu0 %v2039
    %2641 = vmatprep.subr.bf16.mxu0 %v2034
    %2642 = vmatpush1.bf16.msra.mxu0 %v2033
    %2643 = vmatprep.subr.bf16.mxu0 %v2028
    %2644 = vmatpush1.bf16.msra.mxu0 %v2027
    %2645 = vmatprep.subr.bf16.mxu0 %v2022
    %2646 = vmatpush1.bf16.msra.mxu0 %v2021
    %2647 = vmatprep.subr.bf16.mxu0 %v2016
    %2648 = vmatpush1.bf16.msra.mxu0 %v2015
    %2649 = vmatprep.subr.bf16.mxu0 %v2010
    %2650 = vmatpush1.bf16.msra.mxu0 %v2009
    %2651 = vmatprep.subr.bf16.mxu0 %v2004
    %2652 = vmatpush1.bf16.msra.mxu0 %v2003
    %2653 = vmatprep.subr.bf16.mxu0 %v1998
    %2654 = vmatpush1.bf16.msra.mxu0 %v1997
    %2655 = vmatprep.subr.bf16.mxu0 %v2088
    %2656 = vmatpush2.bf16.msra.mxu0 %v2087
    %2657 = vmatprep.subr.bf16.mxu0 %v2082
    %2658 = vmatpush2.bf16.msra.mxu0 %v2081
    %2659 = vmatprep.subr.bf16.mxu0 %v2076
    %2660 = vmatpush2.bf16.msra.mxu0 %v2075
    %2661 = vmatprep.subr.bf16.mxu0 %v2070
    %2662 = vmatpush2.bf16.msra.mxu0 %v2069
    %2663 = vmatprep.subr.bf16.mxu0 %v2064
    %2664 = vmatpush2.bf16.msra.mxu0 %v2063
    %2665 = vmatprep.subr.bf16.mxu0 %v2058
    %2666 = vmatpush2.bf16.msra.mxu0 %v2057
    %2667 = vmatprep.subr.bf16.mxu0 %v2052
    %2668 = vmatpush2.bf16.msra.mxu0 %v2051
    %2669 = vmatprep.subr.bf16.mxu0 %v2046
    %2670 = vmatpush2.bf16.msra.mxu0 %v2045
    %2671 = vmatprep.mubr.bf16.mxu0 %v712
    %2672 = vmatmul.mubr.bf16.gmra.mxu0 %v711
    %v2673 = vpop.f32.mrf.mxu0
    %v2674 = vadd.f32 %v2633, %v2673
    %v2675 = vpop.f32.mrf.mxu0
    %v2676 = vadd.f32 %v2635, %v2675
    %v2677 = vpop.f32.mrf.mxu0
    %v2678 = vpop.f32.mrf.mxu0
    %2679 = vdwg.mxu0
    %2680 = vmatprep.subr.bf16.mxu0 %v2136
    %2681 = vmatpush1.bf16.msra.mxu0 %v2135
    %2682 = vmatprep.subr.bf16.mxu0 %v2130
    %2683 = vmatpush1.bf16.msra.mxu0 %v2129
    %2684 = vmatprep.subr.bf16.mxu0 %v2124
    %2685 = vmatpush1.bf16.msra.mxu0 %v2123
    %2686 = vmatprep.subr.bf16.mxu0 %v2118
    %2687 = vmatpush1.bf16.msra.mxu0 %v2117
    %2688 = vmatprep.subr.bf16.mxu0 %v2112
    %2689 = vmatpush1.bf16.msra.mxu0 %v2111
    %2690 = vmatprep.subr.bf16.mxu0 %v2106
    %2691 = vmatpush1.bf16.msra.mxu0 %v2105
    %2692 = vmatprep.subr.bf16.mxu0 %v2100
    %2693 = vmatpush1.bf16.msra.mxu0 %v2099
    %2694 = vmatprep.subr.bf16.mxu0 %v2094
    %2695 = vmatpush1.bf16.msra.mxu0 %v2093
    %2696 = vmatprep.subr.bf16.mxu0 %v2184
    %2697 = vmatpush2.bf16.msra.mxu0 %v2183
    %2698 = vmatprep.subr.bf16.mxu0 %v2178
    %2699 = vmatpush2.bf16.msra.mxu0 %v2177
    %2700 = vmatprep.subr.bf16.mxu0 %v2172
    %2701 = vmatpush2.bf16.msra.mxu0 %v2171
    %2702 = vmatprep.subr.bf16.mxu0 %v2166
    %2703 = vmatpush2.bf16.msra.mxu0 %v2165
    %2704 = vmatprep.subr.bf16.mxu0 %v2160
    %2705 = vmatpush2.bf16.msra.mxu0 %v2159
    %2706 = vmatprep.subr.bf16.mxu0 %v2154
    %2707 = vmatpush2.bf16.msra.mxu0 %v2153
    %2708 = vmatprep.subr.bf16.mxu0 %v2148
    %2709 = vmatpush2.bf16.msra.mxu0 %v2147
    %2710 = vmatprep.subr.bf16.mxu0 %v2142
    %2711 = vmatpush2.bf16.msra.mxu0 %v2141
    %2712 = vmatprep.mubr.bf16.mxu0 %v714
    %2713 = vmatmul.mubr.bf16.gmra.mxu0 %v713
    %v2714 = vpop.f32.mrf.mxu0
    %v2715 = vadd.f32 %v2674, %v2714
    %v2716 = vpop.f32.mrf.mxu0
    %v2717 = vadd.f32 %v2676, %v2716
    %v2718 = vpop.f32.mrf.mxu0
    %v2719 = vpop.f32.mrf.mxu0
    %2720 = vdwg.mxu0
    %2721 = vmatprep.subr.bf16.mxu0 %v1946
    %2722 = vmatpush1.bf16.msra.mxu0 %v1945
    %2723 = vmatprep.subr.bf16.mxu0 %v1940
    %2724 = vmatpush1.bf16.msra.mxu0 %v1939
    %2725 = vmatprep.subr.bf16.mxu0 %v1934
    %2726 = vmatpush1.bf16.msra.mxu0 %v1933
    %2727 = vmatprep.subr.bf16.mxu0 %v1928
    %2728 = vmatpush1.bf16.msra.mxu0 %v1927
    %2729 = vmatprep.subr.bf16.mxu0 %v1922
    %2730 = vmatpush1.bf16.msra.mxu0 %v1921
    %2731 = vmatprep.subr.bf16.mxu0 %v1916
    %2732 = vmatpush1.bf16.msra.mxu0 %v1915
    %2733 = vmatprep.subr.bf16.mxu0 %v1910
    %2734 = vmatpush1.bf16.msra.mxu0 %v1909
    %2735 = vmatprep.subr.bf16.mxu0 %v1904
    %2736 = vmatpush1.bf16.msra.mxu0 %v1903
    %2737 = vmatprep.subr.bf16.mxu0 %v1994
    %2738 = vmatpush2.bf16.msra.mxu0 %v1993
    %2739 = vmatprep.subr.bf16.mxu0 %v1988
    %2740 = vmatpush2.bf16.msra.mxu0 %v1987
    %2741 = vmatprep.subr.bf16.mxu0 %v1982
    %2742 = vmatpush2.bf16.msra.mxu0 %v1981
    %2743 = vmatprep.subr.bf16.mxu0 %v1976
    %2744 = vmatpush2.bf16.msra.mxu0 %v1975
    %2745 = vmatprep.subr.bf16.mxu0 %v1970
    %2746 = vmatpush2.bf16.msra.mxu0 %v1969
    %2747 = vmatprep.subr.bf16.mxu0 %v1964
    %2748 = vmatpush2.bf16.msra.mxu0 %v1963
    %2749 = vmatprep.subr.bf16.mxu0 %v1958
    %2750 = vmatpush2.bf16.msra.mxu0 %v1957
    %2751 = vmatprep.subr.bf16.mxu0 %v1952
    %2752 = vmatpush2.bf16.msra.mxu0 %v1951
    %2753 = vmatprep.mubr.bf16.mxu0 %v710
    %2754 = vmatmul.mubr.bf16.gmra.mxu0 %v709
    %v2755 = vpop.f32.mrf.mxu0
    %v2756 = vadd.f32 %v1024, %v2755
    %v2757 = vpop.f32.mrf.mxu0
    %v2758 = vadd.f32 %v1028, %v2757
    %v2759 = vpop.f32.mrf.mxu0
    %v2760 = vpop.f32.mrf.mxu0
    %2761 = vdwg.mxu0
    %2762 = vmatprep.subr.bf16.mxu0 %v2042
    %2763 = vmatpush1.bf16.msra.mxu0 %v2041
    %2764 = vmatprep.subr.bf16.mxu0 %v2036
    %2765 = vmatpush1.bf16.msra.mxu0 %v2035
    %2766 = vmatprep.subr.bf16.mxu0 %v2030
    %2767 = vmatpush1.bf16.msra.mxu0 %v2029
    %2768 = vmatprep.subr.bf16.mxu0 %v2024
    %2769 = vmatpush1.bf16.msra.mxu0 %v2023
    %2770 = vmatprep.subr.bf16.mxu0 %v2018
    %2771 = vmatpush1.bf16.msra.mxu0 %v2017
    %2772 = vmatprep.subr.bf16.mxu0 %v2012
    %2773 = vmatpush1.bf16.msra.mxu0 %v2011
    %2774 = vmatprep.subr.bf16.mxu0 %v2006
    %2775 = vmatpush1.bf16.msra.mxu0 %v2005
    %2776 = vmatprep.subr.bf16.mxu0 %v2000
    %2777 = vmatpush1.bf16.msra.mxu0 %v1999
    %2778 = vmatprep.subr.bf16.mxu0 %v2090
    %2779 = vmatpush2.bf16.msra.mxu0 %v2089
    %2780 = vmatprep.subr.bf16.mxu0 %v2084
    %2781 = vmatpush2.bf16.msra.mxu0 %v2083
    %2782 = vmatprep.subr.bf16.mxu0 %v2078
    %2783 = vmatpush2.bf16.msra.mxu0 %v2077
    %2784 = vmatprep.subr.bf16.mxu0 %v2072
    %2785 = vmatpush2.bf16.msra.mxu0 %v2071
    %2786 = vmatprep.subr.bf16.mxu0 %v2066
    %2787 = vmatpush2.bf16.msra.mxu0 %v2065
    %2788 = vmatprep.subr.bf16.mxu0 %v2060
    %2789 = vmatpush2.bf16.msra.mxu0 %v2059
    %2790 = vmatprep.subr.bf16.mxu0 %v2054
    %2791 = vmatpush2.bf16.msra.mxu0 %v2053
    %2792 = vmatprep.subr.bf16.mxu0 %v2048
    %2793 = vmatpush2.bf16.msra.mxu0 %v2047
    %2794 = vmatprep.mubr.bf16.mxu0 %v712
    %2795 = vmatmul.mubr.bf16.gmra.mxu0 %v711
    %v2796 = vpop.f32.mrf.mxu0
    %v2797 = vadd.f32 %v2756, %v2796
    %v2798 = vpop.f32.mrf.mxu0
    %v2799 = vadd.f32 %v2758, %v2798
    %v2800 = vpop.f32.mrf.mxu0
    %v2801 = vpop.f32.mrf.mxu0
    %2802 = vdwg.mxu0
    %2803 = vmatprep.subr.bf16.mxu0 %v2138
    %2804 = vmatpush1.bf16.msra.mxu0 %v2137
    %2805 = vmatprep.subr.bf16.mxu0 %v2132
    %2806 = vmatpush1.bf16.msra.mxu0 %v2131
    %2807 = vmatprep.subr.bf16.mxu0 %v2126
    %2808 = vmatpush1.bf16.msra.mxu0 %v2125
    %2809 = vmatprep.subr.bf16.mxu0 %v2120
    %2810 = vmatpush1.bf16.msra.mxu0 %v2119
    %2811 = vmatprep.subr.bf16.mxu0 %v2114
    %2812 = vmatpush1.bf16.msra.mxu0 %v2113
    %2813 = vmatprep.subr.bf16.mxu0 %v2108
    %2814 = vmatpush1.bf16.msra.mxu0 %v2107
    %2815 = vmatprep.subr.bf16.mxu0 %v2102
    %2816 = vmatpush1.bf16.msra.mxu0 %v2101
    %2817 = vmatprep.subr.bf16.mxu0 %v2096
    %2818 = vmatpush1.bf16.msra.mxu0 %v2095
    %2819 = vmatprep.subr.bf16.mxu0 %v2186
    %2820 = vmatpush2.bf16.msra.mxu0 %v2185
    %2821 = vmatprep.subr.bf16.mxu0 %v2180
    %2822 = vmatpush2.bf16.msra.mxu0 %v2179
    %2823 = vmatprep.subr.bf16.mxu0 %v2174
    %2824 = vmatpush2.bf16.msra.mxu0 %v2173
    %2825 = vmatprep.subr.bf16.mxu0 %v2168
    %2826 = vmatpush2.bf16.msra.mxu0 %v2167
    %2827 = vmatprep.subr.bf16.mxu0 %v2162
    %2828 = vmatpush2.bf16.msra.mxu0 %v2161
    %2829 = vmatprep.subr.bf16.mxu0 %v2156
    %2830 = vmatpush2.bf16.msra.mxu0 %v2155
    %2831 = vmatprep.subr.bf16.mxu0 %v2150
    %2832 = vmatpush2.bf16.msra.mxu0 %v2149
    %2833 = vmatprep.subr.bf16.mxu0 %v2144
    %2834 = vmatpush2.bf16.msra.mxu0 %v2143
    %2835 = vmatprep.mubr.bf16.mxu0 %v714
    %2836 = vmatmul.mubr.bf16.gmra.mxu0 %v713
    %v2837 = vpop.f32.mrf.mxu0
    %v2838 = vadd.f32 %v2797, %v2837
    %v2839 = vpop.f32.mrf.mxu0
    %v2840 = vadd.f32 %v2799, %v2839
    %v2841 = vpop.f32.mrf.mxu0
    %v2842 = vpop.f32.mrf.mxu0
    %2843 = vdwg.mxu0
    %v2844 = vmax.f32 %v2592, 0.0
    %v2845 = vmax.f32 %v2594, 0.0
    %v2846 = vmax.f32 %v2715, 0.0
    %v2847 = vmax.f32 %v2717, 0.0
    %v2848 = vmax.f32 %v2838, 0.0
    %v2849 = vmax.f32 %v2840, 0.0
    %v2850 = vpack.c.bf16 %v2844, %v2844
    %v2851 = vpack.c.bf16 %v2845, %v2845
    %v2852 = vpack.c.bf16 %v2846, %v2846
    %v2853 = vpack.c.bf16 %v2847, %v2847
    %v2854 = vpack.c.bf16 %v2848, %v2848
    %v2855 = vpack.c.bf16 %v2849, %v2849
    %v2856 = vld [vmem:[#allocation14] sm:$0xff]
    %v2857 = vld [vmem:[#allocation14 + $0x8] sm:$0xff]
    %v2858 = vld [vmem:[#allocation14 + $0x10] sm:$0xff]
    %v2859 = vld [vmem:[#allocation14 + $0x18] sm:$0xff]
    %v2860 = vld [vmem:[#allocation14 + $0x20] sm:$0xff]
    %v2861 = vld [vmem:[#allocation14 + $0x28] sm:$0xff]
    %v2862 = vld [vmem:[#allocation14 + $0x30] sm:$0xff]
    %v2863 = vld [vmem:[#allocation14 + $0x38] sm:$0xff]
    %v2864 = vld [vmem:[#allocation14 + $0x40] sm:$0xff]
    %v2865 = vld [vmem:[#allocation14 + $0x48] sm:$0xff]
    %v2866 = vld [vmem:[#allocation14 + $0x50] sm:$0xff]
    %v2867 = vld [vmem:[#allocation14 + $0x58] sm:$0xff]
    %v2868 = vld [vmem:[#allocation14 + $0x60] sm:$0xff]
    %v2869 = vld [vmem:[#allocation14 + $0x68] sm:$0xff]
    %v2870 = vld [vmem:[#allocation14 + $0x70] sm:$0xff]
    %v2871 = vld [vmem:[#allocation14 + $0x78] sm:$0xff]
    %v2872 = vld [vmem:[#allocation14 + $0x80] sm:$0xff]
    %v2873 = vld [vmem:[#allocation14 + $0x88] sm:$0xff]
    %v2874 = vld [vmem:[#allocation14 + $0x90] sm:$0xff]
    %v2875 = vld [vmem:[#allocation14 + $0x98] sm:$0xff]
    %v2876 = vld [vmem:[#allocation14 + $0xa0] sm:$0xff]
    %v2877 = vld [vmem:[#allocation14 + $0xa8] sm:$0xff]
    %v2878 = vld [vmem:[#allocation14 + $0xb0] sm:$0xff]
    %v2879 = vld [vmem:[#allocation14 + $0xb8] sm:$0xff]
    %v2880 = vld [vmem:[#allocation14 + $0xc0] sm:$0xff]
    %v2881 = vld [vmem:[#allocation14 + $0xc8] sm:$0xff]
    %v2882 = vld [vmem:[#allocation14 + $0xd0] sm:$0xff]
    %v2883 = vld [vmem:[#allocation14 + $0xd8] sm:$0xff]
    %v2884 = vld [vmem:[#allocation14 + $0xe0] sm:$0xff]
    %v2885 = vld [vmem:[#allocation14 + $0xe8] sm:$0xff]
    %v2886 = vld [vmem:[#allocation14 + $0xf0] sm:$0xff]
    %v2887 = vld [vmem:[#allocation14 + $0xf8] sm:$0xff]
    %v2888 = vld [vmem:[#allocation14 + $0x100] sm:$0xff]
    %v2889 = vld [vmem:[#allocation14 + $0x108] sm:$0xff]
    %v2890 = vld [vmem:[#allocation14 + $0x110] sm:$0xff]
    %v2891 = vld [vmem:[#allocation14 + $0x118] sm:$0xff]
    %v2892 = vld [vmem:[#allocation14 + $0x120] sm:$0xff]
    %v2893 = vld [vmem:[#allocation14 + $0x128] sm:$0xff]
    %v2894 = vld [vmem:[#allocation14 + $0x130] sm:$0xff]
    %v2895 = vld [vmem:[#allocation14 + $0x138] sm:$0xff]
    %v2896 = vld [vmem:[#allocation14 + $0x140] sm:$0xff]
    %v2897 = vld [vmem:[#allocation14 + $0x148] sm:$0xff]
    %v2898 = vld [vmem:[#allocation14 + $0x150] sm:$0xff]
    %v2899 = vld [vmem:[#allocation14 + $0x158] sm:$0xff]
    %v2900 = vld [vmem:[#allocation14 + $0x160] sm:$0xff]
    %v2901 = vld [vmem:[#allocation14 + $0x168] sm:$0xff]
    %v2902 = vld [vmem:[#allocation14 + $0x170] sm:$0xff]
    %v2903 = vld [vmem:[#allocation14 + $0x178] sm:$0xff]
    %v2904 = vld [vmem:[#allocation14 + $0x180] sm:$0xff]
    %v2905 = vld [vmem:[#allocation14 + $0x188] sm:$0xff]
    %v2906 = vld [vmem:[#allocation14 + $0x190] sm:$0xff]
    %v2907 = vld [vmem:[#allocation14 + $0x198] sm:$0xff]
    %v2908 = vld [vmem:[#allocation14 + $0x1a0] sm:$0xff]
    %v2909 = vld [vmem:[#allocation14 + $0x1a8] sm:$0xff]
    %v2910 = vld [vmem:[#allocation14 + $0x1b0] sm:$0xff]
    %v2911 = vld [vmem:[#allocation14 + $0x1b8] sm:$0xff]
    %v2912 = vld [vmem:[#allocation14 + $0x1c0] sm:$0xff]
    %v2913 = vld [vmem:[#allocation14 + $0x1c8] sm:$0xff]
    %v2914 = vld [vmem:[#allocation14 + $0x1d0] sm:$0xff]
    %v2915 = vld [vmem:[#allocation14 + $0x1d8] sm:$0xff]
    %v2916 = vld [vmem:[#allocation14 + $0x1e0] sm:$0xff]
    %v2917 = vld [vmem:[#allocation14 + $0x1e8] sm:$0xff]
    %v2918 = vld [vmem:[#allocation14 + $0x1f0] sm:$0xff]
    %v2919 = vld [vmem:[#allocation14 + $0x1f8] sm:$0xff]
    %v2920 = vld [vmem:[#allocation14 + $0x200] sm:$0xff]
    %v2921 = vld [vmem:[#allocation14 + $0x208] sm:$0xff]
    %v2922 = vld [vmem:[#allocation14 + $0x210] sm:$0xff]
    %v2923 = vld [vmem:[#allocation14 + $0x218] sm:$0xff]
    %v2924 = vld [vmem:[#allocation14 + $0x220] sm:$0xff]
    %v2925 = vld [vmem:[#allocation14 + $0x228] sm:$0xff]
    %v2926 = vld [vmem:[#allocation14 + $0x230] sm:$0xff]
    %v2927 = vld [vmem:[#allocation14 + $0x238] sm:$0xff]
    %v2928 = vld [vmem:[#allocation14 + $0x240] sm:$0xff]
    %v2929 = vld [vmem:[#allocation14 + $0x248] sm:$0xff]
    %v2930 = vld [vmem:[#allocation14 + $0x250] sm:$0xff]
    %v2931 = vld [vmem:[#allocation14 + $0x258] sm:$0xff]
    %v2932 = vld [vmem:[#allocation14 + $0x260] sm:$0xff]
    %v2933 = vld [vmem:[#allocation14 + $0x268] sm:$0xff]
    %v2934 = vld [vmem:[#allocation14 + $0x270] sm:$0xff]
    %v2935 = vld [vmem:[#allocation14 + $0x278] sm:$0xff]
    %v2936 = vld [vmem:[#allocation14 + $0x280] sm:$0xff]
    %v2937 = vld [vmem:[#allocation14 + $0x288] sm:$0xff]
    %v2938 = vld [vmem:[#allocation14 + $0x290] sm:$0xff]
    %v2939 = vld [vmem:[#allocation14 + $0x298] sm:$0xff]
    %v2940 = vld [vmem:[#allocation14 + $0x2a0] sm:$0xff]
    %v2941 = vld [vmem:[#allocation14 + $0x2a8] sm:$0xff]
    %v2942 = vld [vmem:[#allocation14 + $0x2b0] sm:$0xff]
    %v2943 = vld [vmem:[#allocation14 + $0x2b8] sm:$0xff]
    %v2944 = vld [vmem:[#allocation14 + $0x2c0] sm:$0xff]
    %v2945 = vld [vmem:[#allocation14 + $0x2c8] sm:$0xff]
    %v2946 = vld [vmem:[#allocation14 + $0x2d0] sm:$0xff]
    %v2947 = vld [vmem:[#allocation14 + $0x2d8] sm:$0xff]
    %v2948 = vld [vmem:[#allocation14 + $0x2e0] sm:$0xff]
    %v2949 = vld [vmem:[#allocation14 + $0x2e8] sm:$0xff]
    %v2950 = vld [vmem:[#allocation14 + $0x2f0] sm:$0xff]
    %v2951 = vld [vmem:[#allocation14 + $0x2f8] sm:$0xff]
    %v2952 = vld [vmem:[#allocation16] sm:$0x3]
    %v2954 = vlaneseq
    %v2955 = vshrl.u32 %v2954, 7
    %v2956 = vsub.s32 0, %v2955
    %v2957 = vrot.slane %v2952, %v2956
    %v2958 = vlaneseq
    %v2959 = vshrl.u32 %v2958, 7
    %v2960 = vsub.s32 1, %v2959
    %v2961 = vrot.slane %v2952, %v2960
    %v3060 = vunpack.c.l.b16 %v2856
    %v3061 = vunpack.c.h.b16 %v2856
    %v3062 = vunpack.c.l.b16 %v2857
    %v3063 = vunpack.c.h.b16 %v2857
    %v3064 = vunpack.c.l.b16 %v2858
    %v3065 = vunpack.c.h.b16 %v2858
    %v3066 = vunpack.c.l.b16 %v2859
    %v3067 = vunpack.c.h.b16 %v2859
    %v3068 = vunpack.c.l.b16 %v2860
    %v3069 = vunpack.c.h.b16 %v2860
    %v3070 = vunpack.c.l.b16 %v2861
    %v3071 = vunpack.c.h.b16 %v2861
    %v3072 = vunpack.c.l.b16 %v2862
    %v3073 = vunpack.c.h.b16 %v2862
    %v3074 = vunpack.c.l.b16 %v2863
    %v3075 = vunpack.c.h.b16 %v2863
    %v3076 = vunpack.c.l.b16 %v2864
    %v3077 = vunpack.c.h.b16 %v2864
    %v3078 = vunpack.c.l.b16 %v2865
    %v3079 = vunpack.c.h.b16 %v2865
    %v3080 = vunpack.c.l.b16 %v2866
    %v3081 = vunpack.c.h.b16 %v2866
    %v3082 = vunpack.c.l.b16 %v2867
    %v3083 = vunpack.c.h.b16 %v2867
    %v3084 = vunpack.c.l.b16 %v2868
    %v3085 = vunpack.c.h.b16 %v2868
    %v3086 = vunpack.c.l.b16 %v2869
    %v3087 = vunpack.c.h.b16 %v2869
    %v3088 = vunpack.c.l.b16 %v2870
    %v3089 = vunpack.c.h.b16 %v2870
    %v3090 = vunpack.c.l.b16 %v2871
    %v3091 = vunpack.c.h.b16 %v2871
    %v3092 = vunpack.c.l.b16 %v2872
    %v3093 = vunpack.c.h.b16 %v2872
    %v3094 = vunpack.c.l.b16 %v2873
    %v3095 = vunpack.c.h.b16 %v2873
    %v3096 = vunpack.c.l.b16 %v2874
    %v3097 = vunpack.c.h.b16 %v2874
    %v3098 = vunpack.c.l.b16 %v2875
    %v3099 = vunpack.c.h.b16 %v2875
    %v3100 = vunpack.c.l.b16 %v2876
    %v3101 = vunpack.c.h.b16 %v2876
    %v3102 = vunpack.c.l.b16 %v2877
    %v3103 = vunpack.c.h.b16 %v2877
    %v3104 = vunpack.c.l.b16 %v2878
    %v3105 = vunpack.c.h.b16 %v2878
    %v3106 = vunpack.c.l.b16 %v2879
    %v3107 = vunpack.c.h.b16 %v2879
    %v3108 = vunpack.c.l.b16 %v2880
    %v3109 = vunpack.c.h.b16 %v2880
    %v3110 = vunpack.c.l.b16 %v2881
    %v3111 = vunpack.c.h.b16 %v2881
    %v3112 = vunpack.c.l.b16 %v2882
    %v3113 = vunpack.c.h.b16 %v2882
    %v3114 = vunpack.c.l.b16 %v2883
    %v3115 = vunpack.c.h.b16 %v2883
    %v3116 = vunpack.c.l.b16 %v2884
    %v3117 = vunpack.c.h.b16 %v2884
    %v3118 = vunpack.c.l.b16 %v2885
    %v3119 = vunpack.c.h.b16 %v2885
    %v3120 = vunpack.c.l.b16 %v2886
    %v3121 = vunpack.c.h.b16 %v2886
    %v3122 = vunpack.c.l.b16 %v2887
    %v3123 = vunpack.c.h.b16 %v2887
    %v3124 = vunpack.c.l.b16 %v2888
    %v3125 = vunpack.c.h.b16 %v2888
    %v3126 = vunpack.c.l.b16 %v2889
    %v3127 = vunpack.c.h.b16 %v2889
    %v3128 = vunpack.c.l.b16 %v2890
    %v3129 = vunpack.c.h.b16 %v2890
    %v3130 = vunpack.c.l.b16 %v2891
    %v3131 = vunpack.c.h.b16 %v2891
    %v3132 = vunpack.c.l.b16 %v2892
    %v3133 = vunpack.c.h.b16 %v2892
    %v3134 = vunpack.c.l.b16 %v2893
    %v3135 = vunpack.c.h.b16 %v2893
    %v3136 = vunpack.c.l.b16 %v2894
    %v3137 = vunpack.c.h.b16 %v2894
    %v3138 = vunpack.c.l.b16 %v2895
    %v3139 = vunpack.c.h.b16 %v2895
    %v3140 = vunpack.c.l.b16 %v2896
    %v3141 = vunpack.c.h.b16 %v2896
    %v3142 = vunpack.c.l.b16 %v2897
    %v3143 = vunpack.c.h.b16 %v2897
    %v3144 = vunpack.c.l.b16 %v2898
    %v3145 = vunpack.c.h.b16 %v2898
    %v3146 = vunpack.c.l.b16 %v2899
    %v3147 = vunpack.c.h.b16 %v2899
    %v3148 = vunpack.c.l.b16 %v2900
    %v3149 = vunpack.c.h.b16 %v2900
    %v3150 = vunpack.c.l.b16 %v2901
    %v3151 = vunpack.c.h.b16 %v2901
    %v3152 = vunpack.c.l.b16 %v2902
    %v3153 = vunpack.c.h.b16 %v2902
    %v3154 = vunpack.c.l.b16 %v2903
    %v3155 = vunpack.c.h.b16 %v2903
    %v3156 = vunpack.c.l.b16 %v2904
    %v3157 = vunpack.c.h.b16 %v2904
    %v3158 = vunpack.c.l.b16 %v2905
    %v3159 = vunpack.c.h.b16 %v2905
    %v3160 = vunpack.c.l.b16 %v2906
    %v3161 = vunpack.c.h.b16 %v2906
    %v3162 = vunpack.c.l.b16 %v2907
    %v3163 = vunpack.c.h.b16 %v2907
    %v3164 = vunpack.c.l.b16 %v2908
    %v3165 = vunpack.c.h.b16 %v2908
    %v3166 = vunpack.c.l.b16 %v2909
    %v3167 = vunpack.c.h.b16 %v2909
    %v3168 = vunpack.c.l.b16 %v2910
    %v3169 = vunpack.c.h.b16 %v2910
    %v3170 = vunpack.c.l.b16 %v2911
    %v3171 = vunpack.c.h.b16 %v2911
    %v3172 = vunpack.c.l.b16 %v2912
    %v3173 = vunpack.c.h.b16 %v2912
    %v3174 = vunpack.c.l.b16 %v2913
    %v3175 = vunpack.c.h.b16 %v2913
    %v3176 = vunpack.c.l.b16 %v2914
    %v3177 = vunpack.c.h.b16 %v2914
    %v3178 = vunpack.c.l.b16 %v2915
    %v3179 = vunpack.c.h.b16 %v2915
    %v3180 = vunpack.c.l.b16 %v2916
    %v3181 = vunpack.c.h.b16 %v2916
    %v3182 = vunpack.c.l.b16 %v2917
    %v3183 = vunpack.c.h.b16 %v2917
    %v3184 = vunpack.c.l.b16 %v2918
    %v3185 = vunpack.c.h.b16 %v2918
    %v3186 = vunpack.c.l.b16 %v2919
    %v3187 = vunpack.c.h.b16 %v2919
    %v3188 = vunpack.c.l.b16 %v2920
    %v3189 = vunpack.c.h.b16 %v2920
    %v3190 = vunpack.c.l.b16 %v2921
    %v3191 = vunpack.c.h.b16 %v2921
    %v3192 = vunpack.c.l.b16 %v2922
    %v3193 = vunpack.c.h.b16 %v2922
    %v3194 = vunpack.c.l.b16 %v2923
    %v3195 = vunpack.c.h.b16 %v2923
    %v3196 = vunpack.c.l.b16 %v2924
    %v3197 = vunpack.c.h.b16 %v2924
    %v3198 = vunpack.c.l.b16 %v2925
    %v3199 = vunpack.c.h.b16 %v2925
    %v3200 = vunpack.c.l.b16 %v2926
    %v3201 = vunpack.c.h.b16 %v2926
    %v3202 = vunpack.c.l.b16 %v2927
    %v3203 = vunpack.c.h.b16 %v2927
    %v3204 = vunpack.c.l.b16 %v2928
    %v3205 = vunpack.c.h.b16 %v2928
    %v3206 = vunpack.c.l.b16 %v2929
    %v3207 = vunpack.c.h.b16 %v2929
    %v3208 = vunpack.c.l.b16 %v2930
    %v3209 = vunpack.c.h.b16 %v2930
    %v3210 = vunpack.c.l.b16 %v2931
    %v3211 = vunpack.c.h.b16 %v2931
    %v3212 = vunpack.c.l.b16 %v2932
    %v3213 = vunpack.c.h.b16 %v2932
    %v3214 = vunpack.c.l.b16 %v2933
    %v3215 = vunpack.c.h.b16 %v2933
    %v3216 = vunpack.c.l.b16 %v2934
    %v3217 = vunpack.c.h.b16 %v2934
    %v3218 = vunpack.c.l.b16 %v2935
    %v3219 = vunpack.c.h.b16 %v2935
    %v3220 = vunpack.c.l.b16 %v2936
    %v3221 = vunpack.c.h.b16 %v2936
    %v3222 = vunpack.c.l.b16 %v2937
    %v3223 = vunpack.c.h.b16 %v2937
    %v3224 = vunpack.c.l.b16 %v2938
    %v3225 = vunpack.c.h.b16 %v2938
    %v3226 = vunpack.c.l.b16 %v2939
    %v3227 = vunpack.c.h.b16 %v2939
    %v3228 = vunpack.c.l.b16 %v2940
    %v3229 = vunpack.c.h.b16 %v2940
    %v3230 = vunpack.c.l.b16 %v2941
    %v3231 = vunpack.c.h.b16 %v2941
    %v3232 = vunpack.c.l.b16 %v2942
    %v3233 = vunpack.c.h.b16 %v2942
    %v3234 = vunpack.c.l.b16 %v2943
    %v3235 = vunpack.c.h.b16 %v2943
    %v3236 = vunpack.c.l.b16 %v2944
    %v3237 = vunpack.c.h.b16 %v2944
    %v3238 = vunpack.c.l.b16 %v2945
    %v3239 = vunpack.c.h.b16 %v2945
    %v3240 = vunpack.c.l.b16 %v2946
    %v3241 = vunpack.c.h.b16 %v2946
    %v3242 = vunpack.c.l.b16 %v2947
    %v3243 = vunpack.c.h.b16 %v2947
    %v3244 = vunpack.c.l.b16 %v2948
    %v3245 = vunpack.c.h.b16 %v2948
    %v3246 = vunpack.c.l.b16 %v2949
    %v3247 = vunpack.c.h.b16 %v2949
    %v3248 = vunpack.c.l.b16 %v2950
    %v3249 = vunpack.c.h.b16 %v2950
    %v3250 = vunpack.c.l.b16 %v2951
    %v3251 = vunpack.c.h.b16 %v2951
    %v3252 = vpack.c.b16 %v3062, %v3060
    %v3253 = vpack.c.b16 %v3063, %v3061
    %v3254 = vpack.c.b16 %v3066, %v3064
    %v3255 = vpack.c.b16 %v3067, %v3065
    %v3256 = vpack.c.b16 %v3070, %v3068
    %v3257 = vpack.c.b16 %v3071, %v3069
    %v3258 = vpack.c.b16 %v3074, %v3072
    %v3259 = vpack.c.b16 %v3075, %v3073
    %v3260 = vpack.c.b16 %v3078, %v3076
    %v3261 = vpack.c.b16 %v3079, %v3077
    %v3262 = vpack.c.b16 %v3082, %v3080
    %v3263 = vpack.c.b16 %v3083, %v3081
    %v3264 = vpack.c.b16 %v3086, %v3084
    %v3265 = vpack.c.b16 %v3087, %v3085
    %v3266 = vpack.c.b16 %v3090, %v3088
    %v3267 = vpack.c.b16 %v3091, %v3089
    %v3268 = vpack.c.b16 %v3094, %v3092
    %v3269 = vpack.c.b16 %v3095, %v3093
    %v3270 = vpack.c.b16 %v3098, %v3096
    %v3271 = vpack.c.b16 %v3099, %v3097
    %v3272 = vpack.c.b16 %v3102, %v3100
    %v3273 = vpack.c.b16 %v3103, %v3101
    %v3274 = vpack.c.b16 %v3106, %v3104
    %v3275 = vpack.c.b16 %v3107, %v3105
    %v3276 = vpack.c.b16 %v3110, %v3108
    %v3277 = vpack.c.b16 %v3111, %v3109
    %v3278 = vpack.c.b16 %v3114, %v3112
    %v3279 = vpack.c.b16 %v3115, %v3113
    %v3280 = vpack.c.b16 %v3118, %v3116
    %v3281 = vpack.c.b16 %v3119, %v3117
    %v3282 = vpack.c.b16 %v3122, %v3120
    %v3283 = vpack.c.b16 %v3123, %v3121
    %v3284 = vpack.c.b16 %v3126, %v3124
    %v3285 = vpack.c.b16 %v3127, %v3125
    %v3286 = vpack.c.b16 %v3130, %v3128
    %v3287 = vpack.c.b16 %v3131, %v3129
    %v3288 = vpack.c.b16 %v3134, %v3132
    %v3289 = vpack.c.b16 %v3135, %v3133
    %v3290 = vpack.c.b16 %v3138, %v3136
    %v3291 = vpack.c.b16 %v3139, %v3137
    %v3292 = vpack.c.b16 %v3142, %v3140
    %v3293 = vpack.c.b16 %v3143, %v3141
    %v3294 = vpack.c.b16 %v3146, %v3144
    %v3295 = vpack.c.b16 %v3147, %v3145
    %v3296 = vpack.c.b16 %v3150, %v3148
    %v3297 = vpack.c.b16 %v3151, %v3149
    %v3298 = vpack.c.b16 %v3154, %v3152
    %v3299 = vpack.c.b16 %v3155, %v3153
    %v3300 = vpack.c.b16 %v3158, %v3156
    %v3301 = vpack.c.b16 %v3159, %v3157
    %v3302 = vpack.c.b16 %v3162, %v3160
    %v3303 = vpack.c.b16 %v3163, %v3161
    %v3304 = vpack.c.b16 %v3166, %v3164
    %v3305 = vpack.c.b16 %v3167, %v3165
    %v3306 = vpack.c.b16 %v3170, %v3168
    %v3307 = vpack.c.b16 %v3171, %v3169
    %v3308 = vpack.c.b16 %v3174, %v3172
    %v3309 = vpack.c.b16 %v3175, %v3173
    %v3310 = vpack.c.b16 %v3178, %v3176
    %v3311 = vpack.c.b16 %v3179, %v3177
    %v3312 = vpack.c.b16 %v3182, %v3180
    %v3313 = vpack.c.b16 %v3183, %v3181
    %v3314 = vpack.c.b16 %v3186, %v3184
    %v3315 = vpack.c.b16 %v3187, %v3185
    %v3316 = vpack.c.b16 %v3190, %v3188
    %v3317 = vpack.c.b16 %v3191, %v3189
    %v3318 = vpack.c.b16 %v3194, %v3192
    %v3319 = vpack.c.b16 %v3195, %v3193
    %v3320 = vpack.c.b16 %v3198, %v3196
    %v3321 = vpack.c.b16 %v3199, %v3197
    %v3322 = vpack.c.b16 %v3202, %v3200
    %v3323 = vpack.c.b16 %v3203, %v3201
    %v3324 = vpack.c.b16 %v3206, %v3204
    %v3325 = vpack.c.b16 %v3207, %v3205
    %v3326 = vpack.c.b16 %v3210, %v3208
    %v3327 = vpack.c.b16 %v3211, %v3209
    %v3328 = vpack.c.b16 %v3214, %v3212
    %v3329 = vpack.c.b16 %v3215, %v3213
    %v3330 = vpack.c.b16 %v3218, %v3216
    %v3331 = vpack.c.b16 %v3219, %v3217
    %v3332 = vpack.c.b16 %v3222, %v3220
    %v3333 = vpack.c.b16 %v3223, %v3221
    %v3334 = vpack.c.b16 %v3226, %v3224
    %v3335 = vpack.c.b16 %v3227, %v3225
    %v3336 = vpack.c.b16 %v3230, %v3228
    %v3337 = vpack.c.b16 %v3231, %v3229
    %v3338 = vpack.c.b16 %v3234, %v3232
    %v3339 = vpack.c.b16 %v3235, %v3233
    %v3340 = vpack.c.b16 %v3238, %v3236
    %v3341 = vpack.c.b16 %v3239, %v3237
    %v3342 = vpack.c.b16 %v3242, %v3240
    %v3343 = vpack.c.b16 %v3243, %v3241
    %v3344 = vpack.c.b16 %v3246, %v3244
    %v3345 = vpack.c.b16 %v3247, %v3245
    %v3346 = vpack.c.b16 %v3250, %v3248
    %v3347 = vpack.c.b16 %v3251, %v3249
    %3444 = vmatprep.subr.bf16.mxu0 %v3267
    %3445 = vmatpush1.bf16.msra.mxu0 %v3266
    %3446 = vmatprep.subr.bf16.mxu0 %v3265
    %3447 = vmatpush1.bf16.msra.mxu0 %v3264
    %3448 = vmatprep.subr.bf16.mxu0 %v3263
    %3449 = vmatpush1.bf16.msra.mxu0 %v3262
    %3450 = vmatprep.subr.bf16.mxu0 %v3261
    %3451 = vmatpush1.bf16.msra.mxu0 %v3260
    %3452 = vmatprep.subr.bf16.mxu0 %v3259
    %3453 = vmatpush1.bf16.msra.mxu0 %v3258
    %3454 = vmatprep.subr.bf16.mxu0 %v3257
    %3455 = vmatpush1.bf16.msra.mxu0 %v3256
    %3456 = vmatprep.subr.bf16.mxu0 %v3255
    %3457 = vmatpush1.bf16.msra.mxu0 %v3254
    %3458 = vmatprep.subr.bf16.mxu0 %v3253
    %3459 = vmatpush1.bf16.msra.mxu0 %v3252
    %3460 = vmatprep.subr.bf16.mxu0 %v3283
    %3461 = vmatpush2.bf16.msra.mxu0 %v3282
    %3462 = vmatprep.subr.bf16.mxu0 %v3281
    %3463 = vmatpush2.bf16.msra.mxu0 %v3280
    %3464 = vmatprep.subr.bf16.mxu0 %v3279
    %3465 = vmatpush2.bf16.msra.mxu0 %v3278
    %3466 = vmatprep.subr.bf16.mxu0 %v3277
    %3467 = vmatpush2.bf16.msra.mxu0 %v3276
    %3468 = vmatprep.subr.bf16.mxu0 %v3275
    %3469 = vmatpush2.bf16.msra.mxu0 %v3274
    %3470 = vmatprep.subr.bf16.mxu0 %v3273
    %3471 = vmatpush2.bf16.msra.mxu0 %v3272
    %3472 = vmatprep.subr.bf16.mxu0 %v3271
    %3473 = vmatpush2.bf16.msra.mxu0 %v3270
    %3474 = vmatprep.subr.bf16.mxu0 %v3269
    %3475 = vmatpush2.bf16.msra.mxu0 %v3268
    %3476 = vmatprep.mubr.bf16.mxu0 %v2851
    %3477 = vmatmul.mubr.bf16.gmra.mxu0 %v2850
    %v3478 = vpop.f32.mrf.mxu0
    %v3479 = vadd.f32 %v2957, %v3478
    %v3480 = vpop.f32.mrf.mxu0
    %v3481 = vadd.f32 %v2961, %v3480
    %v3482 = vpop.f32.mrf.mxu0
    %v3483 = vpop.f32.mrf.mxu0
    %3484 = vdwg.mxu0
    %3485 = vmatprep.subr.bf16.mxu0 %v3299
    %3486 = vmatpush1.bf16.msra.mxu0 %v3298
    %3487 = vmatprep.subr.bf16.mxu0 %v3297
    %3488 = vmatpush1.bf16.msra.mxu0 %v3296
    %3489 = vmatprep.subr.bf16.mxu0 %v3295
    %3490 = vmatpush1.bf16.msra.mxu0 %v3294
    %3491 = vmatprep.subr.bf16.mxu0 %v3293
    %3492 = vmatpush1.bf16.msra.mxu0 %v3292
    %3493 = vmatprep.subr.bf16.mxu0 %v3291
    %3494 = vmatpush1.bf16.msra.mxu0 %v3290
    %3495 = vmatprep.subr.bf16.mxu0 %v3289
    %3496 = vmatpush1.bf16.msra.mxu0 %v3288
    %3497 = vmatprep.subr.bf16.mxu0 %v3287
    %3498 = vmatpush1.bf16.msra.mxu0 %v3286
    %3499 = vmatprep.subr.bf16.mxu0 %v3285
    %3500 = vmatpush1.bf16.msra.mxu0 %v3284
    %3501 = vmatprep.subr.bf16.mxu0 %v3315
    %3502 = vmatpush2.bf16.msra.mxu0 %v3314
    %3503 = vmatprep.subr.bf16.mxu0 %v3313
    %3504 = vmatpush2.bf16.msra.mxu0 %v3312
    %3505 = vmatprep.subr.bf16.mxu0 %v3311
    %3506 = vmatpush2.bf16.msra.mxu0 %v3310
    %3507 = vmatprep.subr.bf16.mxu0 %v3309
    %3508 = vmatpush2.bf16.msra.mxu0 %v3308
    %3509 = vmatprep.subr.bf16.mxu0 %v3307
    %3510 = vmatpush2.bf16.msra.mxu0 %v3306
    %3511 = vmatprep.subr.bf16.mxu0 %v3305
    %3512 = vmatpush2.bf16.msra.mxu0 %v3304
    %3513 = vmatprep.subr.bf16.mxu0 %v3303
    %3514 = vmatpush2.bf16.msra.mxu0 %v3302
    %3515 = vmatprep.subr.bf16.mxu0 %v3301
    %3516 = vmatpush2.bf16.msra.mxu0 %v3300
    %3517 = vmatprep.mubr.bf16.mxu0 %v2853
    %3518 = vmatmul.mubr.bf16.gmra.mxu0 %v2852
    %v3519 = vpop.f32.mrf.mxu0
    %v3520 = vadd.f32 %v3479, %v3519
    %v3521 = vpop.f32.mrf.mxu0
    %v3522 = vadd.f32 %v3481, %v3521
    %v3523 = vpop.f32.mrf.mxu0
    %v3524 = vpop.f32.mrf.mxu0
    %3525 = vdwg.mxu0
    %3526 = vmatprep.subr.bf16.mxu0 %v3331
    %3527 = vmatpush1.bf16.msra.mxu0 %v3330
    %3528 = vmatprep.subr.bf16.mxu0 %v3329
    %3529 = vmatpush1.bf16.msra.mxu0 %v3328
    %3530 = vmatprep.subr.bf16.mxu0 %v3327
    %3531 = vmatpush1.bf16.msra.mxu0 %v3326
    %3532 = vmatprep.subr.bf16.mxu0 %v3325
    %3533 = vmatpush1.bf16.msra.mxu0 %v3324
    %3534 = vmatprep.subr.bf16.mxu0 %v3323
    %3535 = vmatpush1.bf16.msra.mxu0 %v3322
    %3536 = vmatprep.subr.bf16.mxu0 %v3321
    %3537 = vmatpush1.bf16.msra.mxu0 %v3320
    %3538 = vmatprep.subr.bf16.mxu0 %v3319
    %3539 = vmatpush1.bf16.msra.mxu0 %v3318
    %3540 = vmatprep.subr.bf16.mxu0 %v3317
    %3541 = vmatpush1.bf16.msra.mxu0 %v3316
    %3542 = vmatprep.subr.bf16.mxu0 %v3347
    %3543 = vmatpush2.bf16.msra.mxu0 %v3346
    %3544 = vmatprep.subr.bf16.mxu0 %v3345
    %3545 = vmatpush2.bf16.msra.mxu0 %v3344
    %3546 = vmatprep.subr.bf16.mxu0 %v3343
    %3547 = vmatpush2.bf16.msra.mxu0 %v3342
    %3548 = vmatprep.subr.bf16.mxu0 %v3341
    %3549 = vmatpush2.bf16.msra.mxu0 %v3340
    %3550 = vmatprep.subr.bf16.mxu0 %v3339
    %3551 = vmatpush2.bf16.msra.mxu0 %v3338
    %3552 = vmatprep.subr.bf16.mxu0 %v3337
    %3553 = vmatpush2.bf16.msra.mxu0 %v3336
    %3554 = vmatprep.subr.bf16.mxu0 %v3335
    %3555 = vmatpush2.bf16.msra.mxu0 %v3334
    %3556 = vmatprep.subr.bf16.mxu0 %v3333
    %3557 = vmatpush2.bf16.msra.mxu0 %v3332
    %3558 = vmatprep.mubr.bf16.mxu0 %v2855
    %3559 = vmatmul.mubr.bf16.gmra.mxu0 %v2854
    %v3560 = vpop.f32.mrf.mxu0
    %v3561 = vadd.f32 %v3520, %v3560
    %v3562 = vpop.f32.mrf.mxu0
    %v3563 = vadd.f32 %v3522, %v3562
    %v3564 = vpop.f32.mrf.mxu0
    %v3565 = vpop.f32.mrf.mxu0
    %3566 = vdwg.mxu0
    %v3567 = vmax.f32 %v3563, -4.0
    %v3568 = vmin.f32 %v3567, 15.0
    %v3569 = vmul.f32 %v3568, 1.442695
    %v3570 = vpow.pop %v3569
    %v3571 = vld [vmem:[#allocation7] sm:$0xff]
    %v3572 = vmul.f32 %v3570, %v3571
    %v3573 = vadd.f32 %v3561, %v3572
    %v3574 = vld [vmem:[#allocation5] sm:$0xff]
    %v3575 = vpack.c.bf16 %v3574, %v3574
    %v3576 = vld [vmem:[#allocation17] sm:$0xff]
    %v3577 = vld [vmem:[#allocation17 + $0x8] sm:$0xff]
    %v3578 = vld [vmem:[#allocation17 + $0x10] sm:$0xff]
    %v3579 = vld [vmem:[#allocation17 + $0x18] sm:$0xff]
    %v3580 = vld [vmem:[#allocation17 + $0x20] sm:$0xff]
    %v3581 = vld [vmem:[#allocation17 + $0x28] sm:$0xff]
    %v3582 = vld [vmem:[#allocation17 + $0x30] sm:$0xff]
    %v3583 = vld [vmem:[#allocation17 + $0x38] sm:$0xff]
    %v3584 = vld [vmem:[#allocation17 + $0x40] sm:$0xff]
    %v3585 = vld [vmem:[#allocation17 + $0x48] sm:$0xff]
    %v3586 = vld [vmem:[#allocation17 + $0x50] sm:$0xff]
    %v3587 = vld [vmem:[#allocation17 + $0x58] sm:$0xff]
    %v3588 = vld [vmem:[#allocation17 + $0x60] sm:$0xff]
    %v3589 = vld [vmem:[#allocation17 + $0x68] sm:$0xff]
    %v3590 = vld [vmem:[#allocation17 + $0x70] sm:$0xff]
    %v3591 = vld [vmem:[#allocation17 + $0x78] sm:$0xff]
    %v3592 = vld [vmem:[#allocation17 + $0x80] sm:$0xff]
    %v3593 = vld [vmem:[#allocation17 + $0x88] sm:$0xff]
    %v3594 = vld [vmem:[#allocation17 + $0x90] sm:$0xff]
    %v3595 = vld [vmem:[#allocation17 + $0x98] sm:$0xff]
    %v3596 = vld [vmem:[#allocation17 + $0xa0] sm:$0xff]
    %v3597 = vld [vmem:[#allocation17 + $0xa8] sm:$0xff]
    %v3598 = vld [vmem:[#allocation17 + $0xb0] sm:$0xff]
    %v3599 = vld [vmem:[#allocation17 + $0xb8] sm:$0xff]
    %v3600 = vld [vmem:[#allocation17 + $0xc0] sm:$0xff]
    %v3601 = vld [vmem:[#allocation17 + $0xc8] sm:$0xff]
    %v3602 = vld [vmem:[#allocation17 + $0xd0] sm:$0xff]
    %v3603 = vld [vmem:[#allocation17 + $0xd8] sm:$0xff]
    %v3604 = vld [vmem:[#allocation17 + $0xe0] sm:$0xff]
    %v3605 = vld [vmem:[#allocation17 + $0xe8] sm:$0xff]
    %v3606 = vld [vmem:[#allocation17 + $0xf0] sm:$0xff]
    %v3607 = vld [vmem:[#allocation17 + $0xf8] sm:$0xff]
    %v3608 = vld [vmem:[#allocation17 + $0x100] sm:$0xff]
    %v3609 = vld [vmem:[#allocation17 + $0x108] sm:$0xff]
    %v3610 = vld [vmem:[#allocation17 + $0x110] sm:$0xff]
    %v3611 = vld [vmem:[#allocation17 + $0x118] sm:$0xff]
    %v3612 = vld [vmem:[#allocation17 + $0x120] sm:$0xff]
    %v3613 = vld [vmem:[#allocation17 + $0x128] sm:$0xff]
    %v3614 = vld [vmem:[#allocation17 + $0x130] sm:$0xff]
    %v3615 = vld [vmem:[#allocation17 + $0x138] sm:$0xff]
    %v3616 = vld [vmem:[#allocation17 + $0x140] sm:$0xff]
    %v3617 = vld [vmem:[#allocation17 + $0x148] sm:$0xff]
    %v3618 = vld [vmem:[#allocation17 + $0x150] sm:$0xff]
    %v3619 = vld [vmem:[#allocation17 + $0x158] sm:$0xff]
    %v3620 = vld [vmem:[#allocation17 + $0x160] sm:$0xff]
    %v3621 = vld [vmem:[#allocation17 + $0x168] sm:$0xff]
    %v3622 = vld [vmem:[#allocation17 + $0x170] sm:$0xff]
    %v3623 = vld [vmem:[#allocation17 + $0x178] sm:$0xff]
    %v3624 = vpack.c.bf16 %v3573, %v3573
    %v3625 = vld [vmem:[#allocation19] sm:$0xff]
    %v3626 = vld [vmem:[#allocation19 + $0x8] sm:$0xff]
    %v3627 = vld [vmem:[#allocation19 + $0x10] sm:$0xff]
    %v3628 = vld [vmem:[#allocation19 + $0x18] sm:$0xff]
    %v3629 = vld [vmem:[#allocation19 + $0x20] sm:$0xff]
    %v3630 = vld [vmem:[#allocation19 + $0x28] sm:$0xff]
    %v3631 = vld [vmem:[#allocation19 + $0x30] sm:$0xff]
    %v3632 = vld [vmem:[#allocation19 + $0x38] sm:$0xff]
    %v3633 = vld [vmem:[#allocation19 + $0x40] sm:$0xff]
    %v3634 = vld [vmem:[#allocation19 + $0x48] sm:$0xff]
    %v3635 = vld [vmem:[#allocation19 + $0x50] sm:$0xff]
    %v3636 = vld [vmem:[#allocation19 + $0x58] sm:$0xff]
    %v3637 = vld [vmem:[#allocation19 + $0x60] sm:$0xff]
    %v3638 = vld [vmem:[#allocation19 + $0x68] sm:$0xff]
    %v3639 = vld [vmem:[#allocation19 + $0x70] sm:$0xff]
    %v3640 = vld [vmem:[#allocation19 + $0x78] sm:$0xff]
    %v3641 = vld [vmem:[#allocation19 + $0x80] sm:$0xff]
    %v3642 = vld [vmem:[#allocation19 + $0x88] sm:$0xff]
    %v3643 = vld [vmem:[#allocation19 + $0x90] sm:$0xff]
    %v3644 = vld [vmem:[#allocation19 + $0x98] sm:$0xff]
    %v3645 = vld [vmem:[#allocation19 + $0xa0] sm:$0xff]
    %v3646 = vld [vmem:[#allocation19 + $0xa8] sm:$0xff]
    %v3647 = vld [vmem:[#allocation19 + $0xb0] sm:$0xff]
    %v3648 = vld [vmem:[#allocation19 + $0xb8] sm:$0xff]
    %v3649 = vld [vmem:[#allocation19 + $0xc0] sm:$0xff]
    %v3650 = vld [vmem:[#allocation19 + $0xc8] sm:$0xff]
    %v3651 = vld [vmem:[#allocation19 + $0xd0] sm:$0xff]
    %v3652 = vld [vmem:[#allocation19 + $0xd8] sm:$0xff]
    %v3653 = vld [vmem:[#allocation19 + $0xe0] sm:$0xff]
    %v3654 = vld [vmem:[#allocation19 + $0xe8] sm:$0xff]
    %v3655 = vld [vmem:[#allocation19 + $0xf0] sm:$0xff]
    %v3656 = vld [vmem:[#allocation19 + $0xf8] sm:$0xff]
    %v3657 = vld [vmem:[#allocation19 + $0x100] sm:$0xff]
    %v3658 = vld [vmem:[#allocation19 + $0x108] sm:$0xff]
    %v3659 = vld [vmem:[#allocation19 + $0x110] sm:$0xff]
    %v3660 = vld [vmem:[#allocation19 + $0x118] sm:$0xff]
    %v3661 = vld [vmem:[#allocation19 + $0x120] sm:$0xff]
    %v3662 = vld [vmem:[#allocation19 + $0x128] sm:$0xff]
    %v3663 = vld [vmem:[#allocation19 + $0x130] sm:$0xff]
    %v3664 = vld [vmem:[#allocation19 + $0x138] sm:$0xff]
    %v3665 = vld [vmem:[#allocation19 + $0x140] sm:$0xff]
    %v3666 = vld [vmem:[#allocation19 + $0x148] sm:$0xff]
    %v3667 = vld [vmem:[#allocation19 + $0x150] sm:$0xff]
    %v3668 = vld [vmem:[#allocation19 + $0x158] sm:$0xff]
    %v3669 = vld [vmem:[#allocation19 + $0x160] sm:$0xff]
    %v3670 = vld [vmem:[#allocation19 + $0x168] sm:$0xff]
    %v3671 = vld [vmem:[#allocation19 + $0x170] sm:$0xff]
    %v3672 = vld [vmem:[#allocation19 + $0x178] sm:$0xff]
    %v3721 = vunpack.c.l.b16 %v3625
    %v3722 = vunpack.c.h.b16 %v3625
    %v3723 = vunpack.c.l.b16 %v3626
    %v3724 = vunpack.c.h.b16 %v3626
    %v3725 = vunpack.c.l.b16 %v3627
    %v3726 = vunpack.c.h.b16 %v3627
    %v3727 = vunpack.c.l.b16 %v3628
    %v3728 = vunpack.c.h.b16 %v3628
    %v3729 = vunpack.c.l.b16 %v3629
    %v3730 = vunpack.c.h.b16 %v3629
    %v3731 = vunpack.c.l.b16 %v3630
    %v3732 = vunpack.c.h.b16 %v3630
    %v3733 = vunpack.c.l.b16 %v3631
    %v3734 = vunpack.c.h.b16 %v3631
    %v3735 = vunpack.c.l.b16 %v3632
    %v3736 = vunpack.c.h.b16 %v3632
    %v3737 = vunpack.c.l.b16 %v3633
    %v3738 = vunpack.c.h.b16 %v3633
    %v3739 = vunpack.c.l.b16 %v3634
    %v3740 = vunpack.c.h.b16 %v3634
    %v3741 = vunpack.c.l.b16 %v3635
    %v3742 = vunpack.c.h.b16 %v3635
    %v3743 = vunpack.c.l.b16 %v3636
    %v3744 = vunpack.c.h.b16 %v3636
    %v3745 = vunpack.c.l.b16 %v3637
    %v3746 = vunpack.c.h.b16 %v3637
    %v3747 = vunpack.c.l.b16 %v3638
    %v3748 = vunpack.c.h.b16 %v3638
    %v3749 = vunpack.c.l.b16 %v3639
    %v3750 = vunpack.c.h.b16 %v3639
    %v3751 = vunpack.c.l.b16 %v3640
    %v3752 = vunpack.c.h.b16 %v3640
    %v3753 = vunpack.c.l.b16 %v3641
    %v3754 = vunpack.c.h.b16 %v3641
    %v3755 = vunpack.c.l.b16 %v3642
    %v3756 = vunpack.c.h.b16 %v3642
    %v3757 = vunpack.c.l.b16 %v3643
    %v3758 = vunpack.c.h.b16 %v3643
    %v3759 = vunpack.c.l.b16 %v3644
    %v3760 = vunpack.c.h.b16 %v3644
    %v3761 = vunpack.c.l.b16 %v3645
    %v3762 = vunpack.c.h.b16 %v3645
    %v3763 = vunpack.c.l.b16 %v3646
    %v3764 = vunpack.c.h.b16 %v3646
    %v3765 = vunpack.c.l.b16 %v3647
    %v3766 = vunpack.c.h.b16 %v3647
    %v3767 = vunpack.c.l.b16 %v3648
    %v3768 = vunpack.c.h.b16 %v3648
    %v3769 = vunpack.c.l.b16 %v3649
    %v3770 = vunpack.c.h.b16 %v3649
    %v3771 = vunpack.c.l.b16 %v3650
    %v3772 = vunpack.c.h.b16 %v3650
    %v3773 = vunpack.c.l.b16 %v3651
    %v3774 = vunpack.c.h.b16 %v3651
    %v3775 = vunpack.c.l.b16 %v3652
    %v3776 = vunpack.c.h.b16 %v3652
    %v3777 = vunpack.c.l.b16 %v3653
    %v3778 = vunpack.c.h.b16 %v3653
    %v3779 = vunpack.c.l.b16 %v3654
    %v3780 = vunpack.c.h.b16 %v3654
    %v3781 = vunpack.c.l.b16 %v3655
    %v3782 = vunpack.c.h.b16 %v3655
    %v3783 = vunpack.c.l.b16 %v3656
    %v3784 = vunpack.c.h.b16 %v3656
    %v3785 = vunpack.c.l.b16 %v3657
    %v3786 = vunpack.c.h.b16 %v3657
    %v3787 = vunpack.c.l.b16 %v3658
    %v3788 = vunpack.c.h.b16 %v3658
    %v3789 = vunpack.c.l.b16 %v3659
    %v3790 = vunpack.c.h.b16 %v3659
    %v3791 = vunpack.c.l.b16 %v3660
    %v3792 = vunpack.c.h.b16 %v3660
    %v3793 = vunpack.c.l.b16 %v3661
    %v3794 = vunpack.c.h.b16 %v3661
    %v3795 = vunpack.c.l.b16 %v3662
    %v3796 = vunpack.c.h.b16 %v3662
    %v3797 = vunpack.c.l.b16 %v3663
    %v3798 = vunpack.c.h.b16 %v3663
    %v3799 = vunpack.c.l.b16 %v3664
    %v3800 = vunpack.c.h.b16 %v3664
    %v3801 = vunpack.c.l.b16 %v3665
    %v3802 = vunpack.c.h.b16 %v3665
    %v3803 = vunpack.c.l.b16 %v3666
    %v3804 = vunpack.c.h.b16 %v3666
    %v3805 = vunpack.c.l.b16 %v3667
    %v3806 = vunpack.c.h.b16 %v3667
    %v3807 = vunpack.c.l.b16 %v3668
    %v3808 = vunpack.c.h.b16 %v3668
    %v3809 = vunpack.c.l.b16 %v3669
    %v3810 = vunpack.c.h.b16 %v3669
    %v3811 = vunpack.c.l.b16 %v3670
    %v3812 = vunpack.c.h.b16 %v3670
    %v3813 = vunpack.c.l.b16 %v3671
    %v3814 = vunpack.c.h.b16 %v3671
    %v3815 = vunpack.c.l.b16 %v3672
    %v3816 = vunpack.c.h.b16 %v3672
    %v3817 = vpack.c.b16 %v3727, %v3721
    %v3818 = vpack.c.b16 %v3728, %v3722
    %v3819 = vpack.c.b16 %v3729, %v3723
    %v3820 = vpack.c.b16 %v3730, %v3724
    %v3821 = vpack.c.b16 %v3731, %v3725
    %v3822 = vpack.c.b16 %v3732, %v3726
    %v3823 = vpack.c.b16 %v3739, %v3733
    %v3824 = vpack.c.b16 %v3740, %v3734
    %v3825 = vpack.c.b16 %v3741, %v3735
    %v3826 = vpack.c.b16 %v3742, %v3736
    %v3827 = vpack.c.b16 %v3743, %v3737
    %v3828 = vpack.c.b16 %v3744, %v3738
    %v3829 = vpack.c.b16 %v3751, %v3745
    %v3830 = vpack.c.b16 %v3752, %v3746
    %v3831 = vpack.c.b16 %v3753, %v3747
    %v3832 = vpack.c.b16 %v3754, %v3748
    %v3833 = vpack.c.b16 %v3755, %v3749
    %v3834 = vpack.c.b16 %v3756, %v3750
    %v3835 = vpack.c.b16 %v3763, %v3757
    %v3836 = vpack.c.b16 %v3764, %v3758
    %v3837 = vpack.c.b16 %v3765, %v3759
    %v3838 = vpack.c.b16 %v3766, %v3760
    %v3839 = vpack.c.b16 %v3767, %v3761
    %v3840 = vpack.c.b16 %v3768, %v3762
    %v3841 = vpack.c.b16 %v3775, %v3769
    %v3842 = vpack.c.b16 %v3776, %v3770
    %v3843 = vpack.c.b16 %v3777, %v3771
    %v3844 = vpack.c.b16 %v3778, %v3772
    %v3845 = vpack.c.b16 %v3779, %v3773
    %v3846 = vpack.c.b16 %v3780, %v3774
    %v3847 = vpack.c.b16 %v3787, %v3781
    %v3848 = vpack.c.b16 %v3788, %v3782
    %v3849 = vpack.c.b16 %v3789, %v3783
    %v3850 = vpack.c.b16 %v3790, %v3784
    %v3851 = vpack.c.b16 %v3791, %v3785
    %v3852 = vpack.c.b16 %v3792, %v3786
    %v3853 = vpack.c.b16 %v3799, %v3793
    %v3854 = vpack.c.b16 %v3800, %v3794
    %v3855 = vpack.c.b16 %v3801, %v3795
    %v3856 = vpack.c.b16 %v3802, %v3796
    %v3857 = vpack.c.b16 %v3803, %v3797
    %v3858 = vpack.c.b16 %v3804, %v3798
    %v3859 = vpack.c.b16 %v3811, %v3805
    %v3860 = vpack.c.b16 %v3812, %v3806
    %v3861 = vpack.c.b16 %v3813, %v3807
    %v3862 = vpack.c.b16 %v3814, %v3808
    %v3863 = vpack.c.b16 %v3815, %v3809
    %v3864 = vpack.c.b16 %v3816, %v3810
    %3913 = vmatprep.subr.bf16.mxu0 %v3860
    %3914 = vmatpush1.bf16.msra.mxu0 %v3859
    %3915 = vmatprep.subr.bf16.mxu0 %v3854
    %3916 = vmatpush1.bf16.msra.mxu0 %v3853
    %3917 = vmatprep.subr.bf16.mxu0 %v3848
    %3918 = vmatpush1.bf16.msra.mxu0 %v3847
    %3919 = vmatprep.subr.bf16.mxu0 %v3842
    %3920 = vmatpush1.bf16.msra.mxu0 %v3841
    %3921 = vmatprep.subr.bf16.mxu0 %v3836
    %3922 = vmatpush1.bf16.msra.mxu0 %v3835
    %3923 = vmatprep.subr.bf16.mxu0 %v3830
    %3924 = vmatpush1.bf16.msra.mxu0 %v3829
    %3925 = vmatprep.subr.bf16.mxu0 %v3824
    %3926 = vmatpush1.bf16.msra.mxu0 %v3823
    %3927 = vmatprep.subr.bf16.mxu0 %v3818
    %3928 = vmatpush1.bf16.msra.mxu0 %v3817
    %3929 = vmatprep.subr.bf16.mxu0 0
    %3930 = vmatpush2.bf16.msra.mxu0 0
    %3931 = vmatprep.subr.bf16.mxu0 0
    %3932 = vmatpush2.bf16.msra.mxu0 0
    %3933 = vmatprep.subr.bf16.mxu0 0
    %3934 = vmatpush2.bf16.msra.mxu0 0
    %3935 = vmatprep.subr.bf16.mxu0 0
    %3936 = vmatpush2.bf16.msra.mxu0 0
    %3937 = vmatprep.subr.bf16.mxu0 0
    %3938 = vmatpush2.bf16.msra.mxu0 0
    %3939 = vmatprep.subr.bf16.mxu0 0
    %3940 = vmatpush2.bf16.msra.mxu0 0
    %3941 = vmatprep.subr.bf16.mxu0 0
    %3942 = vmatpush2.bf16.msra.mxu0 0
    %3943 = vmatprep.subr.bf16.mxu0 0
    %3944 = vmatpush2.bf16.msra.mxu0 0
    %3945 = vmatprep.mubr.bf16.mxu0 0
    %3946 = vmatmul.mubr.bf16.gmra.mxu0 %v3624
    %v3947 = vpop.f32.mrf.mxu0
    %v3948 = vadd.f32 0.0, %v3947
    %v3949 = vpop.f32.mrf.mxu0
    %v3950 = vadd.f32 0.0, %v3949
    %v3951 = vpop.f32.mrf.mxu0
    %v3952 = vpop.f32.mrf.mxu0
    %3953 = vdwg.mxu0
    %3954 = vmatprep.subr.bf16.mxu0 %v3862
    %3955 = vmatpush1.bf16.msra.mxu0 %v3861
    %3956 = vmatprep.subr.bf16.mxu0 %v3856
    %3957 = vmatpush1.bf16.msra.mxu0 %v3855
    %3958 = vmatprep.subr.bf16.mxu0 %v3850
    %3959 = vmatpush1.bf16.msra.mxu0 %v3849
    %3960 = vmatprep.subr.bf16.mxu0 %v3844
    %3961 = vmatpush1.bf16.msra.mxu0 %v3843
    %3962 = vmatprep.subr.bf16.mxu0 %v3838
    %3963 = vmatpush1.bf16.msra.mxu0 %v3837
    %3964 = vmatprep.subr.bf16.mxu0 %v3832
    %3965 = vmatpush1.bf16.msra.mxu0 %v3831
    %3966 = vmatprep.subr.bf16.mxu0 %v3826
    %3967 = vmatpush1.bf16.msra.mxu0 %v3825
    %3968 = vmatprep.subr.bf16.mxu0 %v3820
    %3969 = vmatpush1.bf16.msra.mxu0 %v3819
    %3970 = vmatprep.subr.bf16.mxu0 0
    %3971 = vmatpush2.bf16.msra.mxu0 0
    %3972 = vmatprep.subr.bf16.mxu0 0
    %3973 = vmatpush2.bf16.msra.mxu0 0
    %3974 = vmatprep.subr.bf16.mxu0 0
    %3975 = vmatpush2.bf16.msra.mxu0 0
    %3976 = vmatprep.subr.bf16.mxu0 0
    %3977 = vmatpush2.bf16.msra.mxu0 0
    %3978 = vmatprep.subr.bf16.mxu0 0
    %3979 = vmatpush2.bf16.msra.mxu0 0
    %3980 = vmatprep.subr.bf16.mxu0 0
    %3981 = vmatpush2.bf16.msra.mxu0 0
    %3982 = vmatprep.subr.bf16.mxu0 0
    %3983 = vmatpush2.bf16.msra.mxu0 0
    %3984 = vmatprep.subr.bf16.mxu0 0
    %3985 = vmatpush2.bf16.msra.mxu0 0
    %3986 = vmatprep.mubr.bf16.mxu0 0
    %3987 = vmatmul.mubr.bf16.gmra.mxu0 %v3624
    %v3988 = vpop.f32.mrf.mxu0
    %v3989 = vadd.f32 0.0, %v3988
    %v3990 = vpop.f32.mrf.mxu0
    %v3991 = vadd.f32 0.0, %v3990
    %v3992 = vpop.f32.mrf.mxu0
    %v3993 = vpop.f32.mrf.mxu0
    %3994 = vdwg.mxu0
    %3995 = vmatprep.subr.bf16.mxu0 %v3864
    %3996 = vmatpush1.bf16.msra.mxu0 %v3863
    %3997 = vmatprep.subr.bf16.mxu0 %v3858
    %3998 = vmatpush1.bf16.msra.mxu0 %v3857
    %3999 = vmatprep.subr.bf16.mxu0 %v3852
    %4000 = vmatpush1.bf16.msra.mxu0 %v3851
    %4001 = vmatprep.subr.bf16.mxu0 %v3846
    %4002 = vmatpush1.bf16.msra.mxu0 %v3845
    %4003 = vmatprep.subr.bf16.mxu0 %v3840
    %4004 = vmatpush1.bf16.msra.mxu0 %v3839
    %4005 = vmatprep.subr.bf16.mxu0 %v3834
    %4006 = vmatpush1.bf16.msra.mxu0 %v3833
    %4007 = vmatprep.subr.bf16.mxu0 %v3828
    %4008 = vmatpush1.bf16.msra.mxu0 %v3827
    %4009 = vmatprep.subr.bf16.mxu0 %v3822
    %4010 = vmatpush1.bf16.msra.mxu0 %v3821
    %4011 = vmatprep.subr.bf16.mxu0 0
    %4012 = vmatpush2.bf16.msra.mxu0 0
    %4013 = vmatprep.subr.bf16.mxu0 0
    %4014 = vmatpush2.bf16.msra.mxu0 0
    %4015 = vmatprep.subr.bf16.mxu0 0
    %4016 = vmatpush2.bf16.msra.mxu0 0
    %4017 = vmatprep.subr.bf16.mxu0 0
    %4018 = vmatpush2.bf16.msra.mxu0 0
    %4019 = vmatprep.subr.bf16.mxu0 0
    %4020 = vmatpush2.bf16.msra.mxu0 0
    %4021 = vmatprep.subr.bf16.mxu0 0
    %4022 = vmatpush2.bf16.msra.mxu0 0
    %4023 = vmatprep.subr.bf16.mxu0 0
    %4024 = vmatpush2.bf16.msra.mxu0 0
    %4025 = vmatprep.subr.bf16.mxu0 0
    %4026 = vmatpush2.bf16.msra.mxu0 0
    %4027 = vmatprep.mubr.bf16.mxu0 0
    %4028 = vmatmul.mubr.bf16.gmra.mxu0 %v3624
    %v4029 = vpop.f32.mrf.mxu0
    %v4030 = vadd.f32 0.0, %v4029
    %v4031 = vpop.f32.mrf.mxu0
    %v4032 = vadd.f32 0.0, %v4031
    %v4033 = vpop.f32.mrf.mxu0
    %v4034 = vpop.f32.mrf.mxu0
    %4035 = vdwg.mxu0
    %v4084 = vunpack.c.l.b16 %v3576
    %v4085 = vunpack.c.h.b16 %v3576
    %v4086 = vunpack.c.l.b16 %v3577
    %v4087 = vunpack.c.h.b16 %v3577
    %v4088 = vunpack.c.l.b16 %v3578
    %v4089 = vunpack.c.h.b16 %v3578
    %v4090 = vunpack.c.l.b16 %v3579
    %v4091 = vunpack.c.h.b16 %v3579
    %v4092 = vunpack.c.l.b16 %v3580
    %v4093 = vunpack.c.h.b16 %v3580
    %v4094 = vunpack.c.l.b16 %v3581
    %v4095 = vunpack.c.h.b16 %v3581
    %v4096 = vunpack.c.l.b16 %v3582
    %v4097 = vunpack.c.h.b16 %v3582
    %v4098 = vunpack.c.l.b16 %v3583
    %v4099 = vunpack.c.h.b16 %v3583
    %v4100 = vunpack.c.l.b16 %v3584
    %v4101 = vunpack.c.h.b16 %v3584
    %v4102 = vunpack.c.l.b16 %v3585
    %v4103 = vunpack.c.h.b16 %v3585
    %v4104 = vunpack.c.l.b16 %v3586
    %v4105 = vunpack.c.h.b16 %v3586
    %v4106 = vunpack.c.l.b16 %v3587
    %v4107 = vunpack.c.h.b16 %v3587
    %v4108 = vunpack.c.l.b16 %v3588
    %v4109 = vunpack.c.h.b16 %v3588
    %v4110 = vunpack.c.l.b16 %v3589
    %v4111 = vunpack.c.h.b16 %v3589
    %v4112 = vunpack.c.l.b16 %v3590
    %v4113 = vunpack.c.h.b16 %v3590
    %v4114 = vunpack.c.l.b16 %v3591
    %v4115 = vunpack.c.h.b16 %v3591
    %v4116 = vunpack.c.l.b16 %v3592
    %v4117 = vunpack.c.h.b16 %v3592
    %v4118 = vunpack.c.l.b16 %v3593
    %v4119 = vunpack.c.h.b16 %v3593
    %v4120 = vunpack.c.l.b16 %v3594
    %v4121 = vunpack.c.h.b16 %v3594
    %v4122 = vunpack.c.l.b16 %v3595
    %v4123 = vunpack.c.h.b16 %v3595
    %v4124 = vunpack.c.l.b16 %v3596
    %v4125 = vunpack.c.h.b16 %v3596
    %v4126 = vunpack.c.l.b16 %v3597
    %v4127 = vunpack.c.h.b16 %v3597
    %v4128 = vunpack.c.l.b16 %v3598
    %v4129 = vunpack.c.h.b16 %v3598
    %v4130 = vunpack.c.l.b16 %v3599
    %v4131 = vunpack.c.h.b16 %v3599
    %v4132 = vunpack.c.l.b16 %v3600
    %v4133 = vunpack.c.h.b16 %v3600
    %v4134 = vunpack.c.l.b16 %v3601
    %v4135 = vunpack.c.h.b16 %v3601
    %v4136 = vunpack.c.l.b16 %v3602
    %v4137 = vunpack.c.h.b16 %v3602
    %v4138 = vunpack.c.l.b16 %v3603
    %v4139 = vunpack.c.h.b16 %v3603
    %v4140 = vunpack.c.l.b16 %v3604
    %v4141 = vunpack.c.h.b16 %v3604
    %v4142 = vunpack.c.l.b16 %v3605
    %v4143 = vunpack.c.h.b16 %v3605
    %v4144 = vunpack.c.l.b16 %v3606
    %v4145 = vunpack.c.h.b16 %v3606
    %v4146 = vunpack.c.l.b16 %v3607
    %v4147 = vunpack.c.h.b16 %v3607
    %v4148 = vunpack.c.l.b16 %v3608
    %v4149 = vunpack.c.h.b16 %v3608
    %v4150 = vunpack.c.l.b16 %v3609
    %v4151 = vunpack.c.h.b16 %v3609
    %v4152 = vunpack.c.l.b16 %v3610
    %v4153 = vunpack.c.h.b16 %v3610
    %v4154 = vunpack.c.l.b16 %v3611
    %v4155 = vunpack.c.h.b16 %v3611
    %v4156 = vunpack.c.l.b16 %v3612
    %v4157 = vunpack.c.h.b16 %v3612
    %v4158 = vunpack.c.l.b16 %v3613
    %v4159 = vunpack.c.h.b16 %v3613
    %v4160 = vunpack.c.l.b16 %v3614
    %v4161 = vunpack.c.h.b16 %v3614
    %v4162 = vunpack.c.l.b16 %v3615
    %v4163 = vunpack.c.h.b16 %v3615
    %v4164 = vunpack.c.l.b16 %v3616
    %v4165 = vunpack.c.h.b16 %v3616
    %v4166 = vunpack.c.l.b16 %v3617
    %v4167 = vunpack.c.h.b16 %v3617
    %v4168 = vunpack.c.l.b16 %v3618
    %v4169 = vunpack.c.h.b16 %v3618
    %v4170 = vunpack.c.l.b16 %v3619
    %v4171 = vunpack.c.h.b16 %v3619
    %v4172 = vunpack.c.l.b16 %v3620
    %v4173 = vunpack.c.h.b16 %v3620
    %v4174 = vunpack.c.l.b16 %v3621
    %v4175 = vunpack.c.h.b16 %v3621
    %v4176 = vunpack.c.l.b16 %v3622
    %v4177 = vunpack.c.h.b16 %v3622
    %v4178 = vunpack.c.l.b16 %v3623
    %v4179 = vunpack.c.h.b16 %v3623
    %v4180 = vpack.c.b16 %v4090, %v4084
    %v4181 = vpack.c.b16 %v4091, %v4085
    %v4182 = vpack.c.b16 %v4092, %v4086
    %v4183 = vpack.c.b16 %v4093, %v4087
    %v4184 = vpack.c.b16 %v4094, %v4088
    %v4185 = vpack.c.b16 %v4095, %v4089
    %v4186 = vpack.c.b16 %v4102, %v4096
    %v4187 = vpack.c.b16 %v4103, %v4097
    %v4188 = vpack.c.b16 %v4104, %v4098
    %v4189 = vpack.c.b16 %v4105, %v4099
    %v4190 = vpack.c.b16 %v4106, %v4100
    %v4191 = vpack.c.b16 %v4107, %v4101
    %v4192 = vpack.c.b16 %v4114, %v4108
    %v4193 = vpack.c.b16 %v4115, %v4109
    %v4194 = vpack.c.b16 %v4116, %v4110
    %v4195 = vpack.c.b16 %v4117, %v4111
    %v4196 = vpack.c.b16 %v4118, %v4112
    %v4197 = vpack.c.b16 %v4119, %v4113
    %v4198 = vpack.c.b16 %v4126, %v4120
    %v4199 = vpack.c.b16 %v4127, %v4121
    %v4200 = vpack.c.b16 %v4128, %v4122
    %v4201 = vpack.c.b16 %v4129, %v4123
    %v4202 = vpack.c.b16 %v4130, %v4124
    %v4203 = vpack.c.b16 %v4131, %v4125
    %v4204 = vpack.c.b16 %v4138, %v4132
    %v4205 = vpack.c.b16 %v4139, %v4133
    %v4206 = vpack.c.b16 %v4140, %v4134
    %v4207 = vpack.c.b16 %v4141, %v4135
    %v4208 = vpack.c.b16 %v4142, %v4136
    %v4209 = vpack.c.b16 %v4143, %v4137
    %v4210 = vpack.c.b16 %v4150, %v4144
    %v4211 = vpack.c.b16 %v4151, %v4145
    %v4212 = vpack.c.b16 %v4152, %v4146
    %v4213 = vpack.c.b16 %v4153, %v4147
    %v4214 = vpack.c.b16 %v4154, %v4148
    %v4215 = vpack.c.b16 %v4155, %v4149
    %v4216 = vpack.c.b16 %v4162, %v4156
    %v4217 = vpack.c.b16 %v4163, %v4157
    %v4218 = vpack.c.b16 %v4164, %v4158
    %v4219 = vpack.c.b16 %v4165, %v4159
    %v4220 = vpack.c.b16 %v4166, %v4160
    %v4221 = vpack.c.b16 %v4167, %v4161
    %v4222 = vpack.c.b16 %v4174, %v4168
    %v4223 = vpack.c.b16 %v4175, %v4169
    %v4224 = vpack.c.b16 %v4176, %v4170
    %v4225 = vpack.c.b16 %v4177, %v4171
    %v4226 = vpack.c.b16 %v4178, %v4172
    %v4227 = vpack.c.b16 %v4179, %v4173
    %4276 = vmatprep.subr.bf16.mxu0 %v4223
    %4277 = vmatpush1.bf16.msra.mxu0 %v4222
    %4278 = vmatprep.subr.bf16.mxu0 %v4217
    %4279 = vmatpush1.bf16.msra.mxu0 %v4216
    %4280 = vmatprep.subr.bf16.mxu0 %v4211
    %4281 = vmatpush1.bf16.msra.mxu0 %v4210
    %4282 = vmatprep.subr.bf16.mxu0 %v4205
    %4283 = vmatpush1.bf16.msra.mxu0 %v4204
    %4284 = vmatprep.subr.bf16.mxu0 %v4199
    %4285 = vmatpush1.bf16.msra.mxu0 %v4198
    %4286 = vmatprep.subr.bf16.mxu0 %v4193
    %4287 = vmatpush1.bf16.msra.mxu0 %v4192
    %4288 = vmatprep.subr.bf16.mxu0 %v4187
    %4289 = vmatpush1.bf16.msra.mxu0 %v4186
    %4290 = vmatprep.subr.bf16.mxu0 %v4181
    %4291 = vmatpush1.bf16.msra.mxu0 %v4180
    %4292 = vmatprep.subr.bf16.mxu0 0
    %4293 = vmatpush2.bf16.msra.mxu0 0
    %4294 = vmatprep.subr.bf16.mxu0 0
    %4295 = vmatpush2.bf16.msra.mxu0 0
    %4296 = vmatprep.subr.bf16.mxu0 0
    %4297 = vmatpush2.bf16.msra.mxu0 0
    %4298 = vmatprep.subr.bf16.mxu0 0
    %4299 = vmatpush2.bf16.msra.mxu0 0
    %4300 = vmatprep.subr.bf16.mxu0 0
    %4301 = vmatpush2.bf16.msra.mxu0 0
    %4302 = vmatprep.subr.bf16.mxu0 0
    %4303 = vmatpush2.bf16.msra.mxu0 0
    %4304 = vmatprep.subr.bf16.mxu0 0
    %4305 = vmatpush2.bf16.msra.mxu0 0
    %4306 = vmatprep.subr.bf16.mxu0 0
    %4307 = vmatpush2.bf16.msra.mxu0 0
    %4308 = vmatprep.mubr.bf16.mxu0 0
    %4309 = vmatmul.mubr.bf16.gmra.mxu0 %v3575
    %v4310 = vpop.f32.mrf.mxu0
    %v4311 = vadd.f32 %v3948, %v4310
    %v4312 = vpop.f32.mrf.mxu0
    %v4313 = vadd.f32 %v3950, %v4312
    %v4314 = vpop.f32.mrf.mxu0
    %v4315 = vpop.f32.mrf.mxu0
    %4316 = vdwg.mxu0
    %4317 = vmatprep.subr.bf16.mxu0 %v4225
    %4318 = vmatpush1.bf16.msra.mxu0 %v4224
    %4319 = vmatprep.subr.bf16.mxu0 %v4219
    %4320 = vmatpush1.bf16.msra.mxu0 %v4218
    %4321 = vmatprep.subr.bf16.mxu0 %v4213
    %4322 = vmatpush1.bf16.msra.mxu0 %v4212
    %4323 = vmatprep.subr.bf16.mxu0 %v4207
    %4324 = vmatpush1.bf16.msra.mxu0 %v4206
    %4325 = vmatprep.subr.bf16.mxu0 %v4201
    %4326 = vmatpush1.bf16.msra.mxu0 %v4200
    %4327 = vmatprep.subr.bf16.mxu0 %v4195
    %4328 = vmatpush1.bf16.msra.mxu0 %v4194
    %4329 = vmatprep.subr.bf16.mxu0 %v4189
    %4330 = vmatpush1.bf16.msra.mxu0 %v4188
    %4331 = vmatprep.subr.bf16.mxu0 %v4183
    %4332 = vmatpush1.bf16.msra.mxu0 %v4182
    %4333 = vmatprep.subr.bf16.mxu0 0
    %4334 = vmatpush2.bf16.msra.mxu0 0
    %4335 = vmatprep.subr.bf16.mxu0 0
    %4336 = vmatpush2.bf16.msra.mxu0 0
    %4337 = vmatprep.subr.bf16.mxu0 0
    %4338 = vmatpush2.bf16.msra.mxu0 0
    %4339 = vmatprep.subr.bf16.mxu0 0
    %4340 = vmatpush2.bf16.msra.mxu0 0
    %4341 = vmatprep.subr.bf16.mxu0 0
    %4342 = vmatpush2.bf16.msra.mxu0 0
    %4343 = vmatprep.subr.bf16.mxu0 0
    %4344 = vmatpush2.bf16.msra.mxu0 0
    %4345 = vmatprep.subr.bf16.mxu0 0
    %4346 = vmatpush2.bf16.msra.mxu0 0
    %4347 = vmatprep.subr.bf16.mxu0 0
    %4348 = vmatpush2.bf16.msra.mxu0 0
    %4349 = vmatprep.mubr.bf16.mxu0 0
    %4350 = vmatmul.mubr.bf16.gmra.mxu0 %v3575
    %v4351 = vpop.f32.mrf.mxu0
    %v4352 = vadd.f32 %v3989, %v4351
    %v4353 = vpop.f32.mrf.mxu0
    %v4354 = vadd.f32 %v3991, %v4353
    %v4355 = vpop.f32.mrf.mxu0
    %v4356 = vpop.f32.mrf.mxu0
    %4357 = vdwg.mxu0
    %4358 = vmatprep.subr.bf16.mxu0 %v4227
    %4359 = vmatpush1.bf16.msra.mxu0 %v4226
    %4360 = vmatprep.subr.bf16.mxu0 %v4221
    %4361 = vmatpush1.bf16.msra.mxu0 %v4220
    %4362 = vmatprep.subr.bf16.mxu0 %v4215
    %4363 = vmatpush1.bf16.msra.mxu0 %v4214
    %4364 = vmatprep.subr.bf16.mxu0 %v4209
    %4365 = vmatpush1.bf16.msra.mxu0 %v4208
    %4366 = vmatprep.subr.bf16.mxu0 %v4203
    %4367 = vmatpush1.bf16.msra.mxu0 %v4202
    %4368 = vmatprep.subr.bf16.mxu0 %v4197
    %4369 = vmatpush1.bf16.msra.mxu0 %v4196
    %4370 = vmatprep.subr.bf16.mxu0 %v4191
    %4371 = vmatpush1.bf16.msra.mxu0 %v4190
    %4372 = vmatprep.subr.bf16.mxu0 %v4185
    %4373 = vmatpush1.bf16.msra.mxu0 %v4184
    %4374 = vmatprep.subr.bf16.mxu0 0
    %4375 = vmatpush2.bf16.msra.mxu0 0
    %4376 = vmatprep.subr.bf16.mxu0 0
    %4377 = vmatpush2.bf16.msra.mxu0 0
    %4378 = vmatprep.subr.bf16.mxu0 0
    %4379 = vmatpush2.bf16.msra.mxu0 0
    %4380 = vmatprep.subr.bf16.mxu0 0
    %4381 = vmatpush2.bf16.msra.mxu0 0
    %4382 = vmatprep.subr.bf16.mxu0 0
    %4383 = vmatpush2.bf16.msra.mxu0 0
    %4384 = vmatprep.subr.bf16.mxu0 0
    %4385 = vmatpush2.bf16.msra.mxu0 0
    %4386 = vmatprep.subr.bf16.mxu0 0
    %4387 = vmatpush2.bf16.msra.mxu0 0
    %4388 = vmatprep.subr.bf16.mxu0 0
    %4389 = vmatpush2.bf16.msra.mxu0 0
    %4390 = vmatprep.mubr.bf16.mxu0 0
    %4391 = vmatmul.mubr.bf16.gmra.mxu0 %v3575
    %v4392 = vpop.f32.mrf.mxu0
    %v4393 = vadd.f32 %v4030, %v4392
    %v4394 = vpop.f32.mrf.mxu0
    %v4395 = vadd.f32 %v4032, %v4394
    %v4396 = vpop.f32.mrf.mxu0
    %v4397 = vpop.f32.mrf.mxu0
    %4398 = vdwg.mxu0
    %v4399 = vld [vmem:[#allocation20] sm:$0x3f]
    %v4401 = vlaneseq
    %v4402 = vshrl.u32 %v4401, 7
    %v4403 = vsub.s32 0, %v4402
    %v4404 = vrot.slane %v4399, %v4403
    %v4405 = vlaneseq
    %v4406 = vshrl.u32 %v4405, 7
    %v4407 = vsub.s32 1, %v4406
    %v4408 = vrot.slane %v4399, %v4407
    %v4409 = vlaneseq
    %v4410 = vshrl.u32 %v4409, 7
    %v4411 = vsub.s32 2, %v4410
    %v4412 = vrot.slane %v4399, %v4411
    %v4413 = vlaneseq
    %v4414 = vshrl.u32 %v4413, 7
    %v4415 = vsub.s32 3, %v4414
    %v4416 = vrot.slane %v4399, %v4415
    %v4417 = vlaneseq
    %v4418 = vshrl.u32 %v4417, 7
    %v4419 = vsub.s32 4, %v4418
    %v4420 = vrot.slane %v4399, %v4419
    %v4421 = vlaneseq
    %v4422 = vshrl.u32 %v4421, 7
    %v4423 = vsub.s32 5, %v4422
    %v4424 = vrot.slane %v4399, %v4423
    %v4431 = vadd.f32 %v4311, %v4404
    %v4432 = vadd.f32 %v4313, %v4408
    %v4433 = vadd.f32 %v4352, %v4412
    %v4434 = vadd.f32 %v4354, %v4416
    %v4435 = vadd.f32 %v4393, %v4420
    %v4436 = vadd.f32 %v4395, %v4424
    %v4437 = vmax.f32 %v4431, 0.0
    %v4438 = vmax.f32 %v4432, 0.0
    %v4439 = vmax.f32 %v4433, 0.0
    %v4440 = vmax.f32 %v4434, 0.0
    %v4441 = vmax.f32 %v4435, 0.0
    %v4442 = vmax.f32 %v4436, 0.0
    %v4443 = vpack.c.bf16 %v4437, %v4437
    %v4444 = vpack.c.bf16 %v4438, %v4438
    %v4445 = vpack.c.bf16 %v4439, %v4439
    %v4446 = vpack.c.bf16 %v4440, %v4440
    %v4447 = vpack.c.bf16 %v4441, %v4441
    %v4448 = vpack.c.bf16 %v4442, %v4442
    %v4449 = vld [vmem:[#allocation22] sm:$0xff]
    %v4450 = vld [vmem:[#allocation22 + $0x8] sm:$0xff]
    %v4451 = vld [vmem:[#allocation22 + $0x10] sm:$0xff]
    %v4452 = vld [vmem:[#allocation22 + $0x18] sm:$0xff]
    %v4453 = vld [vmem:[#allocation22 + $0x20] sm:$0xff]
    %v4454 = vld [vmem:[#allocation22 + $0x28] sm:$0xff]
    %v4455 = vld [vmem:[#allocation22 + $0x30] sm:$0xff]
    %v4456 = vld [vmem:[#allocation22 + $0x38] sm:$0xff]
    %v4457 = vld [vmem:[#allocation22 + $0x40] sm:$0xff]
    %v4458 = vld [vmem:[#allocation22 + $0x48] sm:$0xff]
    %v4459 = vld [vmem:[#allocation22 + $0x50] sm:$0xff]
    %v4460 = vld [vmem:[#allocation22 + $0x58] sm:$0xff]
    %v4461 = vld [vmem:[#allocation22 + $0x60] sm:$0xff]
    %v4462 = vld [vmem:[#allocation22 + $0x68] sm:$0xff]
    %v4463 = vld [vmem:[#allocation22 + $0x70] sm:$0xff]
    %v4464 = vld [vmem:[#allocation22 + $0x78] sm:$0xff]
    %v4465 = vld [vmem:[#allocation22 + $0x80] sm:$0xff]
    %v4466 = vld [vmem:[#allocation22 + $0x88] sm:$0xff]
    %v4467 = vld [vmem:[#allocation22 + $0x90] sm:$0xff]
    %v4468 = vld [vmem:[#allocation22 + $0x98] sm:$0xff]
    %v4469 = vld [vmem:[#allocation22 + $0xa0] sm:$0xff]
    %v4470 = vld [vmem:[#allocation22 + $0xa8] sm:$0xff]
    %v4471 = vld [vmem:[#allocation22 + $0xb0] sm:$0xff]
    %v4472 = vld [vmem:[#allocation22 + $0xb8] sm:$0xff]
    %v4473 = vld [vmem:[#allocation22 + $0xc0] sm:$0xff]
    %v4474 = vld [vmem:[#allocation22 + $0xc8] sm:$0xff]
    %v4475 = vld [vmem:[#allocation22 + $0xd0] sm:$0xff]
    %v4476 = vld [vmem:[#allocation22 + $0xd8] sm:$0xff]
    %v4477 = vld [vmem:[#allocation22 + $0xe0] sm:$0xff]
    %v4478 = vld [vmem:[#allocation22 + $0xe8] sm:$0xff]
    %v4479 = vld [vmem:[#allocation22 + $0xf0] sm:$0xff]
    %v4480 = vld [vmem:[#allocation22 + $0xf8] sm:$0xff]
    %v4481 = vld [vmem:[#allocation22 + $0x100] sm:$0xff]
    %v4482 = vld [vmem:[#allocation22 + $0x108] sm:$0xff]
    %v4483 = vld [vmem:[#allocation22 + $0x110] sm:$0xff]
    %v4484 = vld [vmem:[#allocation22 + $0x118] sm:$0xff]
    %v4485 = vld [vmem:[#allocation22 + $0x120] sm:$0xff]
    %v4486 = vld [vmem:[#allocation22 + $0x128] sm:$0xff]
    %v4487 = vld [vmem:[#allocation22 + $0x130] sm:$0xff]
    %v4488 = vld [vmem:[#allocation22 + $0x138] sm:$0xff]
    %v4489 = vld [vmem:[#allocation22 + $0x140] sm:$0xff]
    %v4490 = vld [vmem:[#allocation22 + $0x148] sm:$0xff]
    %v4491 = vld [vmem:[#allocation22 + $0x150] sm:$0xff]
    %v4492 = vld [vmem:[#allocation22 + $0x158] sm:$0xff]
    %v4493 = vld [vmem:[#allocation22 + $0x160] sm:$0xff]
    %v4494 = vld [vmem:[#allocation22 + $0x168] sm:$0xff]
    %v4495 = vld [vmem:[#allocation22 + $0x170] sm:$0xff]
    %v4496 = vld [vmem:[#allocation22 + $0x178] sm:$0xff]
    %v4497 = vld [vmem:[#allocation22 + $0x180] sm:$0xff]
    %v4498 = vld [vmem:[#allocation22 + $0x188] sm:$0xff]
    %v4499 = vld [vmem:[#allocation22 + $0x190] sm:$0xff]
    %v4500 = vld [vmem:[#allocation22 + $0x198] sm:$0xff]
    %v4501 = vld [vmem:[#allocation22 + $0x1a0] sm:$0xff]
    %v4502 = vld [vmem:[#allocation22 + $0x1a8] sm:$0xff]
    %v4503 = vld [vmem:[#allocation22 + $0x1b0] sm:$0xff]
    %v4504 = vld [vmem:[#allocation22 + $0x1b8] sm:$0xff]
    %v4505 = vld [vmem:[#allocation22 + $0x1c0] sm:$0xff]
    %v4506 = vld [vmem:[#allocation22 + $0x1c8] sm:$0xff]
    %v4507 = vld [vmem:[#allocation22 + $0x1d0] sm:$0xff]
    %v4508 = vld [vmem:[#allocation22 + $0x1d8] sm:$0xff]
    %v4509 = vld [vmem:[#allocation22 + $0x1e0] sm:$0xff]
    %v4510 = vld [vmem:[#allocation22 + $0x1e8] sm:$0xff]
    %v4511 = vld [vmem:[#allocation22 + $0x1f0] sm:$0xff]
    %v4512 = vld [vmem:[#allocation22 + $0x1f8] sm:$0xff]
    %v4513 = vld [vmem:[#allocation22 + $0x200] sm:$0xff]
    %v4514 = vld [vmem:[#allocation22 + $0x208] sm:$0xff]
    %v4515 = vld [vmem:[#allocation22 + $0x210] sm:$0xff]
    %v4516 = vld [vmem:[#allocation22 + $0x218] sm:$0xff]
    %v4517 = vld [vmem:[#allocation22 + $0x220] sm:$0xff]
    %v4518 = vld [vmem:[#allocation22 + $0x228] sm:$0xff]
    %v4519 = vld [vmem:[#allocation22 + $0x230] sm:$0xff]
    %v4520 = vld [vmem:[#allocation22 + $0x238] sm:$0xff]
    %v4521 = vld [vmem:[#allocation22 + $0x240] sm:$0xff]
    %v4522 = vld [vmem:[#allocation22 + $0x248] sm:$0xff]
    %v4523 = vld [vmem:[#allocation22 + $0x250] sm:$0xff]
    %v4524 = vld [vmem:[#allocation22 + $0x258] sm:$0xff]
    %v4525 = vld [vmem:[#allocation22 + $0x260] sm:$0xff]
    %v4526 = vld [vmem:[#allocation22 + $0x268] sm:$0xff]
    %v4527 = vld [vmem:[#allocation22 + $0x270] sm:$0xff]
    %v4528 = vld [vmem:[#allocation22 + $0x278] sm:$0xff]
    %v4529 = vld [vmem:[#allocation22 + $0x280] sm:$0xff]
    %v4530 = vld [vmem:[#allocation22 + $0x288] sm:$0xff]
    %v4531 = vld [vmem:[#allocation22 + $0x290] sm:$0xff]
    %v4532 = vld [vmem:[#allocation22 + $0x298] sm:$0xff]
    %v4533 = vld [vmem:[#allocation22 + $0x2a0] sm:$0xff]
    %v4534 = vld [vmem:[#allocation22 + $0x2a8] sm:$0xff]
    %v4535 = vld [vmem:[#allocation22 + $0x2b0] sm:$0xff]
    %v4536 = vld [vmem:[#allocation22 + $0x2b8] sm:$0xff]
    %v4537 = vld [vmem:[#allocation22 + $0x2c0] sm:$0xff]
    %v4538 = vld [vmem:[#allocation22 + $0x2c8] sm:$0xff]
    %v4539 = vld [vmem:[#allocation22 + $0x2d0] sm:$0xff]
    %v4540 = vld [vmem:[#allocation22 + $0x2d8] sm:$0xff]
    %v4541 = vld [vmem:[#allocation22 + $0x2e0] sm:$0xff]
    %v4542 = vld [vmem:[#allocation22 + $0x2e8] sm:$0xff]
    %v4543 = vld [vmem:[#allocation22 + $0x2f0] sm:$0xff]
    %v4544 = vld [vmem:[#allocation22 + $0x2f8] sm:$0xff]
    %v4545 = vld [vmem:[#allocation22 + $0x300] sm:$0xff]
    %v4546 = vld [vmem:[#allocation22 + $0x308] sm:$0xff]
    %v4547 = vld [vmem:[#allocation22 + $0x310] sm:$0xff]
    %v4548 = vld [vmem:[#allocation22 + $0x318] sm:$0xff]
    %v4549 = vld [vmem:[#allocation22 + $0x320] sm:$0xff]
    %v4550 = vld [vmem:[#allocation22 + $0x328] sm:$0xff]
    %v4551 = vld [vmem:[#allocation22 + $0x330] sm:$0xff]
    %v4552 = vld [vmem:[#allocation22 + $0x338] sm:$0xff]
    %v4553 = vld [vmem:[#allocation22 + $0x340] sm:$0xff]
    %v4554 = vld [vmem:[#allocation22 + $0x348] sm:$0xff]
    %v4555 = vld [vmem:[#allocation22 + $0x350] sm:$0xff]
    %v4556 = vld [vmem:[#allocation22 + $0x358] sm:$0xff]
    %v4557 = vld [vmem:[#allocation22 + $0x360] sm:$0xff]
    %v4558 = vld [vmem:[#allocation22 + $0x368] sm:$0xff]
    %v4559 = vld [vmem:[#allocation22 + $0x370] sm:$0xff]
    %v4560 = vld [vmem:[#allocation22 + $0x378] sm:$0xff]
    %v4561 = vld [vmem:[#allocation22 + $0x380] sm:$0xff]
    %v4562 = vld [vmem:[#allocation22 + $0x388] sm:$0xff]
    %v4563 = vld [vmem:[#allocation22 + $0x390] sm:$0xff]
    %v4564 = vld [vmem:[#allocation22 + $0x398] sm:$0xff]
    %v4565 = vld [vmem:[#allocation22 + $0x3a0] sm:$0xff]
    %v4566 = vld [vmem:[#allocation22 + $0x3a8] sm:$0xff]
    %v4567 = vld [vmem:[#allocation22 + $0x3b0] sm:$0xff]
    %v4568 = vld [vmem:[#allocation22 + $0x3b8] sm:$0xff]
    %v4569 = vld [vmem:[#allocation22 + $0x3c0] sm:$0xff]
    %v4570 = vld [vmem:[#allocation22 + $0x3c8] sm:$0xff]
    %v4571 = vld [vmem:[#allocation22 + $0x3d0] sm:$0xff]
    %v4572 = vld [vmem:[#allocation22 + $0x3d8] sm:$0xff]
    %v4573 = vld [vmem:[#allocation22 + $0x3e0] sm:$0xff]
    %v4574 = vld [vmem:[#allocation22 + $0x3e8] sm:$0xff]
    %v4575 = vld [vmem:[#allocation22 + $0x3f0] sm:$0xff]
    %v4576 = vld [vmem:[#allocation22 + $0x3f8] sm:$0xff]
    %v4577 = vld [vmem:[#allocation22 + $0x400] sm:$0xff]
    %v4578 = vld [vmem:[#allocation22 + $0x408] sm:$0xff]
    %v4579 = vld [vmem:[#allocation22 + $0x410] sm:$0xff]
    %v4580 = vld [vmem:[#allocation22 + $0x418] sm:$0xff]
    %v4581 = vld [vmem:[#allocation22 + $0x420] sm:$0xff]
    %v4582 = vld [vmem:[#allocation22 + $0x428] sm:$0xff]
    %v4583 = vld [vmem:[#allocation22 + $0x430] sm:$0xff]
    %v4584 = vld [vmem:[#allocation22 + $0x438] sm:$0xff]
    %v4585 = vld [vmem:[#allocation22 + $0x440] sm:$0xff]
    %v4586 = vld [vmem:[#allocation22 + $0x448] sm:$0xff]
    %v4587 = vld [vmem:[#allocation22 + $0x450] sm:$0xff]
    %v4588 = vld [vmem:[#allocation22 + $0x458] sm:$0xff]
    %v4589 = vld [vmem:[#allocation22 + $0x460] sm:$0xff]
    %v4590 = vld [vmem:[#allocation22 + $0x468] sm:$0xff]
    %v4591 = vld [vmem:[#allocation22 + $0x470] sm:$0xff]
    %v4592 = vld [vmem:[#allocation22 + $0x478] sm:$0xff]
    %v4593 = vld [vmem:[#allocation22 + $0x480] sm:$0xff]
    %v4594 = vld [vmem:[#allocation22 + $0x488] sm:$0xff]
    %v4595 = vld [vmem:[#allocation22 + $0x490] sm:$0xff]
    %v4596 = vld [vmem:[#allocation22 + $0x498] sm:$0xff]
    %v4597 = vld [vmem:[#allocation22 + $0x4a0] sm:$0xff]
    %v4598 = vld [vmem:[#allocation22 + $0x4a8] sm:$0xff]
    %v4599 = vld [vmem:[#allocation22 + $0x4b0] sm:$0xff]
    %v4600 = vld [vmem:[#allocation22 + $0x4b8] sm:$0xff]
    %v4601 = vld [vmem:[#allocation22 + $0x4c0] sm:$0xff]
    %v4602 = vld [vmem:[#allocation22 + $0x4c8] sm:$0xff]
    %v4603 = vld [vmem:[#allocation22 + $0x4d0] sm:$0xff]
    %v4604 = vld [vmem:[#allocation22 + $0x4d8] sm:$0xff]
    %v4605 = vld [vmem:[#allocation22 + $0x4e0] sm:$0xff]
    %v4606 = vld [vmem:[#allocation22 + $0x4e8] sm:$0xff]
    %v4607 = vld [vmem:[#allocation22 + $0x4f0] sm:$0xff]
    %v4608 = vld [vmem:[#allocation22 + $0x4f8] sm:$0xff]
    %v4609 = vld [vmem:[#allocation22 + $0x500] sm:$0xff]
    %v4610 = vld [vmem:[#allocation22 + $0x508] sm:$0xff]
    %v4611 = vld [vmem:[#allocation22 + $0x510] sm:$0xff]
    %v4612 = vld [vmem:[#allocation22 + $0x518] sm:$0xff]
    %v4613 = vld [vmem:[#allocation22 + $0x520] sm:$0xff]
    %v4614 = vld [vmem:[#allocation22 + $0x528] sm:$0xff]
    %v4615 = vld [vmem:[#allocation22 + $0x530] sm:$0xff]
    %v4616 = vld [vmem:[#allocation22 + $0x538] sm:$0xff]
    %v4617 = vld [vmem:[#allocation22 + $0x540] sm:$0xff]
    %v4618 = vld [vmem:[#allocation22 + $0x548] sm:$0xff]
    %v4619 = vld [vmem:[#allocation22 + $0x550] sm:$0xff]
    %v4620 = vld [vmem:[#allocation22 + $0x558] sm:$0xff]
    %v4621 = vld [vmem:[#allocation22 + $0x560] sm:$0xff]
    %v4622 = vld [vmem:[#allocation22 + $0x568] sm:$0xff]
    %v4623 = vld [vmem:[#allocation22 + $0x570] sm:$0xff]
    %v4624 = vld [vmem:[#allocation22 + $0x578] sm:$0xff]
    %v4625 = vld [vmem:[#allocation22 + $0x580] sm:$0xff]
    %v4626 = vld [vmem:[#allocation22 + $0x588] sm:$0xff]
    %v4627 = vld [vmem:[#allocation22 + $0x590] sm:$0xff]
    %v4628 = vld [vmem:[#allocation22 + $0x598] sm:$0xff]
    %v4629 = vld [vmem:[#allocation22 + $0x5a0] sm:$0xff]
    %v4630 = vld [vmem:[#allocation22 + $0x5a8] sm:$0xff]
    %v4631 = vld [vmem:[#allocation22 + $0x5b0] sm:$0xff]
    %v4632 = vld [vmem:[#allocation22 + $0x5b8] sm:$0xff]
    %v4633 = vld [vmem:[#allocation22 + $0x5c0] sm:$0xff]
    %v4634 = vld [vmem:[#allocation22 + $0x5c8] sm:$0xff]
    %v4635 = vld [vmem:[#allocation22 + $0x5d0] sm:$0xff]
    %v4636 = vld [vmem:[#allocation22 + $0x5d8] sm:$0xff]
    %v4637 = vld [vmem:[#allocation22 + $0x5e0] sm:$0xff]
    %v4638 = vld [vmem:[#allocation22 + $0x5e8] sm:$0xff]
    %v4639 = vld [vmem:[#allocation22 + $0x5f0] sm:$0xff]
    %v4640 = vld [vmem:[#allocation22 + $0x5f8] sm:$0xff]
    %v4641 = vld [vmem:[#allocation22 + $0x600] sm:$0xff]
    %v4642 = vld [vmem:[#allocation22 + $0x608] sm:$0xff]
    %v4643 = vld [vmem:[#allocation22 + $0x610] sm:$0xff]
    %v4644 = vld [vmem:[#allocation22 + $0x618] sm:$0xff]
    %v4645 = vld [vmem:[#allocation22 + $0x620] sm:$0xff]
    %v4646 = vld [vmem:[#allocation22 + $0x628] sm:$0xff]
    %v4647 = vld [vmem:[#allocation22 + $0x630] sm:$0xff]
    %v4648 = vld [vmem:[#allocation22 + $0x638] sm:$0xff]
    %v4649 = vld [vmem:[#allocation22 + $0x640] sm:$0xff]
    %v4650 = vld [vmem:[#allocation22 + $0x648] sm:$0xff]
    %v4651 = vld [vmem:[#allocation22 + $0x650] sm:$0xff]
    %v4652 = vld [vmem:[#allocation22 + $0x658] sm:$0xff]
    %v4653 = vld [vmem:[#allocation22 + $0x660] sm:$0xff]
    %v4654 = vld [vmem:[#allocation22 + $0x668] sm:$0xff]
    %v4655 = vld [vmem:[#allocation22 + $0x670] sm:$0xff]
    %v4656 = vld [vmem:[#allocation22 + $0x678] sm:$0xff]
    %v4657 = vld [vmem:[#allocation22 + $0x680] sm:$0xff]
    %v4658 = vld [vmem:[#allocation22 + $0x688] sm:$0xff]
    %v4659 = vld [vmem:[#allocation22 + $0x690] sm:$0xff]
    %v4660 = vld [vmem:[#allocation22 + $0x698] sm:$0xff]
    %v4661 = vld [vmem:[#allocation22 + $0x6a0] sm:$0xff]
    %v4662 = vld [vmem:[#allocation22 + $0x6a8] sm:$0xff]
    %v4663 = vld [vmem:[#allocation22 + $0x6b0] sm:$0xff]
    %v4664 = vld [vmem:[#allocation22 + $0x6b8] sm:$0xff]
    %v4665 = vld [vmem:[#allocation22 + $0x6c0] sm:$0xff]
    %v4666 = vld [vmem:[#allocation22 + $0x6c8] sm:$0xff]
    %v4667 = vld [vmem:[#allocation22 + $0x6d0] sm:$0xff]
    %v4668 = vld [vmem:[#allocation22 + $0x6d8] sm:$0xff]
    %v4669 = vld [vmem:[#allocation22 + $0x6e0] sm:$0xff]
    %v4670 = vld [vmem:[#allocation22 + $0x6e8] sm:$0xff]
    %v4671 = vld [vmem:[#allocation22 + $0x6f0] sm:$0xff]
    %v4672 = vld [vmem:[#allocation22 + $0x6f8] sm:$0xff]
    %v4673 = vld [vmem:[#allocation22 + $0x700] sm:$0xff]
    %v4674 = vld [vmem:[#allocation22 + $0x708] sm:$0xff]
    %v4675 = vld [vmem:[#allocation22 + $0x710] sm:$0xff]
    %v4676 = vld [vmem:[#allocation22 + $0x718] sm:$0xff]
    %v4677 = vld [vmem:[#allocation22 + $0x720] sm:$0xff]
    %v4678 = vld [vmem:[#allocation22 + $0x728] sm:$0xff]
    %v4679 = vld [vmem:[#allocation22 + $0x730] sm:$0xff]
    %v4680 = vld [vmem:[#allocation22 + $0x738] sm:$0xff]
    %v4681 = vld [vmem:[#allocation22 + $0x740] sm:$0xff]
    %v4682 = vld [vmem:[#allocation22 + $0x748] sm:$0xff]
    %v4683 = vld [vmem:[#allocation22 + $0x750] sm:$0xff]
    %v4684 = vld [vmem:[#allocation22 + $0x758] sm:$0xff]
    %v4685 = vld [vmem:[#allocation22 + $0x760] sm:$0xff]
    %v4686 = vld [vmem:[#allocation22 + $0x768] sm:$0xff]
    %v4687 = vld [vmem:[#allocation22 + $0x770] sm:$0xff]
    %v4688 = vld [vmem:[#allocation22 + $0x778] sm:$0xff]
    %v4689 = vld [vmem:[#allocation22 + $0x780] sm:$0xff]
    %v4690 = vld [vmem:[#allocation22 + $0x788] sm:$0xff]
    %v4691 = vld [vmem:[#allocation22 + $0x790] sm:$0xff]
    %v4692 = vld [vmem:[#allocation22 + $0x798] sm:$0xff]
    %v4693 = vld [vmem:[#allocation22 + $0x7a0] sm:$0xff]
    %v4694 = vld [vmem:[#allocation22 + $0x7a8] sm:$0xff]
    %v4695 = vld [vmem:[#allocation22 + $0x7b0] sm:$0xff]
    %v4696 = vld [vmem:[#allocation22 + $0x7b8] sm:$0xff]
    %v4697 = vld [vmem:[#allocation22 + $0x7c0] sm:$0xff]
    %v4698 = vld [vmem:[#allocation22 + $0x7c8] sm:$0xff]
    %v4699 = vld [vmem:[#allocation22 + $0x7d0] sm:$0xff]
    %v4700 = vld [vmem:[#allocation22 + $0x7d8] sm:$0xff]
    %v4701 = vld [vmem:[#allocation22 + $0x7e0] sm:$0xff]
    %v4702 = vld [vmem:[#allocation22 + $0x7e8] sm:$0xff]
    %v4703 = vld [vmem:[#allocation22 + $0x7f0] sm:$0xff]
    %v4704 = vld [vmem:[#allocation22 + $0x7f8] sm:$0xff]
    %v4705 = vld [vmem:[#allocation22 + $0x800] sm:$0xff]
    %v4706 = vld [vmem:[#allocation22 + $0x808] sm:$0xff]
    %v4707 = vld [vmem:[#allocation22 + $0x810] sm:$0xff]
    %v4708 = vld [vmem:[#allocation22 + $0x818] sm:$0xff]
    %v4709 = vld [vmem:[#allocation22 + $0x820] sm:$0xff]
    %v4710 = vld [vmem:[#allocation22 + $0x828] sm:$0xff]
    %v4711 = vld [vmem:[#allocation22 + $0x830] sm:$0xff]
    %v4712 = vld [vmem:[#allocation22 + $0x838] sm:$0xff]
    %v4713 = vld [vmem:[#allocation22 + $0x840] sm:$0xff]
    %v4714 = vld [vmem:[#allocation22 + $0x848] sm:$0xff]
    %v4715 = vld [vmem:[#allocation22 + $0x850] sm:$0xff]
    %v4716 = vld [vmem:[#allocation22 + $0x858] sm:$0xff]
    %v4717 = vld [vmem:[#allocation22 + $0x860] sm:$0xff]
    %v4718 = vld [vmem:[#allocation22 + $0x868] sm:$0xff]
    %v4719 = vld [vmem:[#allocation22 + $0x870] sm:$0xff]
    %v4720 = vld [vmem:[#allocation22 + $0x878] sm:$0xff]
    %v4721 = vld [vmem:[#allocation22 + $0x880] sm:$0xff]
    %v4722 = vld [vmem:[#allocation22 + $0x888] sm:$0xff]
    %v4723 = vld [vmem:[#allocation22 + $0x890] sm:$0xff]
    %v4724 = vld [vmem:[#allocation22 + $0x898] sm:$0xff]
    %v4725 = vld [vmem:[#allocation22 + $0x8a0] sm:$0xff]
    %v4726 = vld [vmem:[#allocation22 + $0x8a8] sm:$0xff]
    %v4727 = vld [vmem:[#allocation22 + $0x8b0] sm:$0xff]
    %v4728 = vld [vmem:[#allocation22 + $0x8b8] sm:$0xff]
    %v4729 = vld [vmem:[#allocation22 + $0x8c0] sm:$0xff]
    %v4730 = vld [vmem:[#allocation22 + $0x8c8] sm:$0xff]
    %v4731 = vld [vmem:[#allocation22 + $0x8d0] sm:$0xff]
    %v4732 = vld [vmem:[#allocation22 + $0x8d8] sm:$0xff]
    %v4733 = vld [vmem:[#allocation22 + $0x8e0] sm:$0xff]
    %v4734 = vld [vmem:[#allocation22 + $0x8e8] sm:$0xff]
    %v4735 = vld [vmem:[#allocation22 + $0x8f0] sm:$0xff]
    %v4736 = vld [vmem:[#allocation22 + $0x8f8] sm:$0xff]
    %v4737 = vld [vmem:[#allocation23] sm:$0x3f]
    %v4739 = vlaneseq
    %v4740 = vshrl.u32 %v4739, 7
    %v4741 = vsub.s32 0, %v4740
    %v4742 = vrot.slane %v4737, %v4741
    %v4743 = vlaneseq
    %v4744 = vshrl.u32 %v4743, 7
    %v4745 = vsub.s32 1, %v4744
    %v4746 = vrot.slane %v4737, %v4745
    %v4747 = vlaneseq
    %v4748 = vshrl.u32 %v4747, 7
    %v4749 = vsub.s32 2, %v4748
    %v4750 = vrot.slane %v4737, %v4749
    %v4751 = vlaneseq
    %v4752 = vshrl.u32 %v4751, 7
    %v4753 = vsub.s32 3, %v4752
    %v4754 = vrot.slane %v4737, %v4753
    %v4755 = vlaneseq
    %v4756 = vshrl.u32 %v4755, 7
    %v4757 = vsub.s32 4, %v4756
    %v4758 = vrot.slane %v4737, %v4757
    %v4759 = vlaneseq
    %v4760 = vshrl.u32 %v4759, 7
    %v4761 = vsub.s32 5, %v4760
    %v4762 = vrot.slane %v4737, %v4761
    %v5057 = vunpack.c.l.b16 %v4449
    %v5058 = vunpack.c.h.b16 %v4449
    %v5059 = vunpack.c.l.b16 %v4450
    %v5060 = vunpack.c.h.b16 %v4450
    %v5061 = vunpack.c.l.b16 %v4451
    %v5062 = vunpack.c.h.b16 %v4451
    %v5063 = vunpack.c.l.b16 %v4452
    %v5064 = vunpack.c.h.b16 %v4452
    %v5065 = vunpack.c.l.b16 %v4453
    %v5066 = vunpack.c.h.b16 %v4453
    %v5067 = vunpack.c.l.b16 %v4454
    %v5068 = vunpack.c.h.b16 %v4454
    %v5069 = vunpack.c.l.b16 %v4455
    %v5070 = vunpack.c.h.b16 %v4455
    %v5071 = vunpack.c.l.b16 %v4456
    %v5072 = vunpack.c.h.b16 %v4456
    %v5073 = vunpack.c.l.b16 %v4457
    %v5074 = vunpack.c.h.b16 %v4457
    %v5075 = vunpack.c.l.b16 %v4458
    %v5076 = vunpack.c.h.b16 %v4458
    %v5077 = vunpack.c.l.b16 %v4459
    %v5078 = vunpack.c.h.b16 %v4459
    %v5079 = vunpack.c.l.b16 %v4460
    %v5080 = vunpack.c.h.b16 %v4460
    %v5081 = vunpack.c.l.b16 %v4461
    %v5082 = vunpack.c.h.b16 %v4461
    %v5083 = vunpack.c.l.b16 %v4462
    %v5084 = vunpack.c.h.b16 %v4462
    %v5085 = vunpack.c.l.b16 %v4463
    %v5086 = vunpack.c.h.b16 %v4463
    %v5087 = vunpack.c.l.b16 %v4464
    %v5088 = vunpack.c.h.b16 %v4464
    %v5089 = vunpack.c.l.b16 %v4465
    %v5090 = vunpack.c.h.b16 %v4465
    %v5091 = vunpack.c.l.b16 %v4466
    %v5092 = vunpack.c.h.b16 %v4466
    %v5093 = vunpack.c.l.b16 %v4467
    %v5094 = vunpack.c.h.b16 %v4467
    %v5095 = vunpack.c.l.b16 %v4468
    %v5096 = vunpack.c.h.b16 %v4468
    %v5097 = vunpack.c.l.b16 %v4469
    %v5098 = vunpack.c.h.b16 %v4469
    %v5099 = vunpack.c.l.b16 %v4470
    %v5100 = vunpack.c.h.b16 %v4470
    %v5101 = vunpack.c.l.b16 %v4471
    %v5102 = vunpack.c.h.b16 %v4471
    %v5103 = vunpack.c.l.b16 %v4472
    %v5104 = vunpack.c.h.b16 %v4472
    %v5105 = vunpack.c.l.b16 %v4473
    %v5106 = vunpack.c.h.b16 %v4473
    %v5107 = vunpack.c.l.b16 %v4474
    %v5108 = vunpack.c.h.b16 %v4474
    %v5109 = vunpack.c.l.b16 %v4475
    %v5110 = vunpack.c.h.b16 %v4475
    %v5111 = vunpack.c.l.b16 %v4476
    %v5112 = vunpack.c.h.b16 %v4476
    %v5113 = vunpack.c.l.b16 %v4477
    %v5114 = vunpack.c.h.b16 %v4477
    %v5115 = vunpack.c.l.b16 %v4478
    %v5116 = vunpack.c.h.b16 %v4478
    %v5117 = vunpack.c.l.b16 %v4479
    %v5118 = vunpack.c.h.b16 %v4479
    %v5119 = vunpack.c.l.b16 %v4480
    %v5120 = vunpack.c.h.b16 %v4480
    %v5121 = vunpack.c.l.b16 %v4481
    %v5122 = vunpack.c.h.b16 %v4481
    %v5123 = vunpack.c.l.b16 %v4482
    %v5124 = vunpack.c.h.b16 %v4482
    %v5125 = vunpack.c.l.b16 %v4483
    %v5126 = vunpack.c.h.b16 %v4483
    %v5127 = vunpack.c.l.b16 %v4484
    %v5128 = vunpack.c.h.b16 %v4484
    %v5129 = vunpack.c.l.b16 %v4485
    %v5130 = vunpack.c.h.b16 %v4485
    %v5131 = vunpack.c.l.b16 %v4486
    %v5132 = vunpack.c.h.b16 %v4486
    %v5133 = vunpack.c.l.b16 %v4487
    %v5134 = vunpack.c.h.b16 %v4487
    %v5135 = vunpack.c.l.b16 %v4488
    %v5136 = vunpack.c.h.b16 %v4488
    %v5137 = vunpack.c.l.b16 %v4489
    %v5138 = vunpack.c.h.b16 %v4489
    %v5139 = vunpack.c.l.b16 %v4490
    %v5140 = vunpack.c.h.b16 %v4490
    %v5141 = vunpack.c.l.b16 %v4491
    %v5142 = vunpack.c.h.b16 %v4491
    %v5143 = vunpack.c.l.b16 %v4492
    %v5144 = vunpack.c.h.b16 %v4492
    %v5145 = vunpack.c.l.b16 %v4493
    %v5146 = vunpack.c.h.b16 %v4493
    %v5147 = vunpack.c.l.b16 %v4494
    %v5148 = vunpack.c.h.b16 %v4494
    %v5149 = vunpack.c.l.b16 %v4495
    %v5150 = vunpack.c.h.b16 %v4495
    %v5151 = vunpack.c.l.b16 %v4496
    %v5152 = vunpack.c.h.b16 %v4496
    %v5153 = vunpack.c.l.b16 %v4497
    %v5154 = vunpack.c.h.b16 %v4497
    %v5155 = vunpack.c.l.b16 %v4498
    %v5156 = vunpack.c.h.b16 %v4498
    %v5157 = vunpack.c.l.b16 %v4499
    %v5158 = vunpack.c.h.b16 %v4499
    %v5159 = vunpack.c.l.b16 %v4500
    %v5160 = vunpack.c.h.b16 %v4500
    %v5161 = vunpack.c.l.b16 %v4501
    %v5162 = vunpack.c.h.b16 %v4501
    %v5163 = vunpack.c.l.b16 %v4502
    %v5164 = vunpack.c.h.b16 %v4502
    %v5165 = vunpack.c.l.b16 %v4503
    %v5166 = vunpack.c.h.b16 %v4503
    %v5167 = vunpack.c.l.b16 %v4504
    %v5168 = vunpack.c.h.b16 %v4504
    %v5169 = vunpack.c.l.b16 %v4505
    %v5170 = vunpack.c.h.b16 %v4505
    %v5171 = vunpack.c.l.b16 %v4506
    %v5172 = vunpack.c.h.b16 %v4506
    %v5173 = vunpack.c.l.b16 %v4507
    %v5174 = vunpack.c.h.b16 %v4507
    %v5175 = vunpack.c.l.b16 %v4508
    %v5176 = vunpack.c.h.b16 %v4508
    %v5177 = vunpack.c.l.b16 %v4509
    %v5178 = vunpack.c.h.b16 %v4509
    %v5179 = vunpack.c.l.b16 %v4510
    %v5180 = vunpack.c.h.b16 %v4510
    %v5181 = vunpack.c.l.b16 %v4511
    %v5182 = vunpack.c.h.b16 %v4511
    %v5183 = vunpack.c.l.b16 %v4512
    %v5184 = vunpack.c.h.b16 %v4512
    %v5185 = vunpack.c.l.b16 %v4513
    %v5186 = vunpack.c.h.b16 %v4513
    %v5187 = vunpack.c.l.b16 %v4514
    %v5188 = vunpack.c.h.b16 %v4514
    %v5189 = vunpack.c.l.b16 %v4515
    %v5190 = vunpack.c.h.b16 %v4515
    %v5191 = vunpack.c.l.b16 %v4516
    %v5192 = vunpack.c.h.b16 %v4516
    %v5193 = vunpack.c.l.b16 %v4517
    %v5194 = vunpack.c.h.b16 %v4517
    %v5195 = vunpack.c.l.b16 %v4518
    %v5196 = vunpack.c.h.b16 %v4518
    %v5197 = vunpack.c.l.b16 %v4519
    %v5198 = vunpack.c.h.b16 %v4519
    %v5199 = vunpack.c.l.b16 %v4520
    %v5200 = vunpack.c.h.b16 %v4520
    %v5201 = vunpack.c.l.b16 %v4521
    %v5202 = vunpack.c.h.b16 %v4521
    %v5203 = vunpack.c.l.b16 %v4522
    %v5204 = vunpack.c.h.b16 %v4522
    %v5205 = vunpack.c.l.b16 %v4523
    %v5206 = vunpack.c.h.b16 %v4523
    %v5207 = vunpack.c.l.b16 %v4524
    %v5208 = vunpack.c.h.b16 %v4524
    %v5209 = vunpack.c.l.b16 %v4525
    %v5210 = vunpack.c.h.b16 %v4525
    %v5211 = vunpack.c.l.b16 %v4526
    %v5212 = vunpack.c.h.b16 %v4526
    %v5213 = vunpack.c.l.b16 %v4527
    %v5214 = vunpack.c.h.b16 %v4527
    %v5215 = vunpack.c.l.b16 %v4528
    %v5216 = vunpack.c.h.b16 %v4528
    %v5217 = vunpack.c.l.b16 %v4529
    %v5218 = vunpack.c.h.b16 %v4529
    %v5219 = vunpack.c.l.b16 %v4530
    %v5220 = vunpack.c.h.b16 %v4530
    %v5221 = vunpack.c.l.b16 %v4531
    %v5222 = vunpack.c.h.b16 %v4531
    %v5223 = vunpack.c.l.b16 %v4532
    %v5224 = vunpack.c.h.b16 %v4532
    %v5225 = vunpack.c.l.b16 %v4533
    %v5226 = vunpack.c.h.b16 %v4533
    %v5227 = vunpack.c.l.b16 %v4534
    %v5228 = vunpack.c.h.b16 %v4534
    %v5229 = vunpack.c.l.b16 %v4535
    %v5230 = vunpack.c.h.b16 %v4535
    %v5231 = vunpack.c.l.b16 %v4536
    %v5232 = vunpack.c.h.b16 %v4536
    %v5233 = vunpack.c.l.b16 %v4537
    %v5234 = vunpack.c.h.b16 %v4537
    %v5235 = vunpack.c.l.b16 %v4538
    %v5236 = vunpack.c.h.b16 %v4538
    %v5237 = vunpack.c.l.b16 %v4539
    %v5238 = vunpack.c.h.b16 %v4539
    %v5239 = vunpack.c.l.b16 %v4540
    %v5240 = vunpack.c.h.b16 %v4540
    %v5241 = vunpack.c.l.b16 %v4541
    %v5242 = vunpack.c.h.b16 %v4541
    %v5243 = vunpack.c.l.b16 %v4542
    %v5244 = vunpack.c.h.b16 %v4542
    %v5245 = vunpack.c.l.b16 %v4543
    %v5246 = vunpack.c.h.b16 %v4543
    %v5247 = vunpack.c.l.b16 %v4544
    %v5248 = vunpack.c.h.b16 %v4544
    %v5249 = vunpack.c.l.b16 %v4545
    %v5250 = vunpack.c.h.b16 %v4545
    %v5251 = vunpack.c.l.b16 %v4546
    %v5252 = vunpack.c.h.b16 %v4546
    %v5253 = vunpack.c.l.b16 %v4547
    %v5254 = vunpack.c.h.b16 %v4547
    %v5255 = vunpack.c.l.b16 %v4548
    %v5256 = vunpack.c.h.b16 %v4548
    %v5257 = vunpack.c.l.b16 %v4549
    %v5258 = vunpack.c.h.b16 %v4549
    %v5259 = vunpack.c.l.b16 %v4550
    %v5260 = vunpack.c.h.b16 %v4550
    %v5261 = vunpack.c.l.b16 %v4551
    %v5262 = vunpack.c.h.b16 %v4551
    %v5263 = vunpack.c.l.b16 %v4552
    %v5264 = vunpack.c.h.b16 %v4552
    %v5265 = vunpack.c.l.b16 %v4553
    %v5266 = vunpack.c.h.b16 %v4553
    %v5267 = vunpack.c.l.b16 %v4554
    %v5268 = vunpack.c.h.b16 %v4554
    %v5269 = vunpack.c.l.b16 %v4555
    %v5270 = vunpack.c.h.b16 %v4555
    %v5271 = vunpack.c.l.b16 %v4556
    %v5272 = vunpack.c.h.b16 %v4556
    %v5273 = vunpack.c.l.b16 %v4557
    %v5274 = vunpack.c.h.b16 %v4557
    %v5275 = vunpack.c.l.b16 %v4558
    %v5276 = vunpack.c.h.b16 %v4558
    %v5277 = vunpack.c.l.b16 %v4559
    %v5278 = vunpack.c.h.b16 %v4559
    %v5279 = vunpack.c.l.b16 %v4560
    %v5280 = vunpack.c.h.b16 %v4560
    %v5281 = vunpack.c.l.b16 %v4561
    %v5282 = vunpack.c.h.b16 %v4561
    %v5283 = vunpack.c.l.b16 %v4562
    %v5284 = vunpack.c.h.b16 %v4562
    %v5285 = vunpack.c.l.b16 %v4563
    %v5286 = vunpack.c.h.b16 %v4563
    %v5287 = vunpack.c.l.b16 %v4564
    %v5288 = vunpack.c.h.b16 %v4564
    %v5289 = vunpack.c.l.b16 %v4565
    %v5290 = vunpack.c.h.b16 %v4565
    %v5291 = vunpack.c.l.b16 %v4566
    %v5292 = vunpack.c.h.b16 %v4566
    %v5293 = vunpack.c.l.b16 %v4567
    %v5294 = vunpack.c.h.b16 %v4567
    %v5295 = vunpack.c.l.b16 %v4568
    %v5296 = vunpack.c.h.b16 %v4568
    %v5297 = vunpack.c.l.b16 %v4569
    %v5298 = vunpack.c.h.b16 %v4569
    %v5299 = vunpack.c.l.b16 %v4570
    %v5300 = vunpack.c.h.b16 %v4570
    %v5301 = vunpack.c.l.b16 %v4571
    %v5302 = vunpack.c.h.b16 %v4571
    %v5303 = vunpack.c.l.b16 %v4572
    %v5304 = vunpack.c.h.b16 %v4572
    %v5305 = vunpack.c.l.b16 %v4573
    %v5306 = vunpack.c.h.b16 %v4573
    %v5307 = vunpack.c.l.b16 %v4574
    %v5308 = vunpack.c.h.b16 %v4574
    %v5309 = vunpack.c.l.b16 %v4575
    %v5310 = vunpack.c.h.b16 %v4575
    %v5311 = vunpack.c.l.b16 %v4576
    %v5312 = vunpack.c.h.b16 %v4576
    %v5313 = vunpack.c.l.b16 %v4577
    %v5314 = vunpack.c.h.b16 %v4577
    %v5315 = vunpack.c.l.b16 %v4578
    %v5316 = vunpack.c.h.b16 %v4578
    %v5317 = vunpack.c.l.b16 %v4579
    %v5318 = vunpack.c.h.b16 %v4579
    %v5319 = vunpack.c.l.b16 %v4580
    %v5320 = vunpack.c.h.b16 %v4580
    %v5321 = vunpack.c.l.b16 %v4581
    %v5322 = vunpack.c.h.b16 %v4581
    %v5323 = vunpack.c.l.b16 %v4582
    %v5324 = vunpack.c.h.b16 %v4582
    %v5325 = vunpack.c.l.b16 %v4583
    %v5326 = vunpack.c.h.b16 %v4583
    %v5327 = vunpack.c.l.b16 %v4584
    %v5328 = vunpack.c.h.b16 %v4584
    %v5329 = vunpack.c.l.b16 %v4585
    %v5330 = vunpack.c.h.b16 %v4585
    %v5331 = vunpack.c.l.b16 %v4586
    %v5332 = vunpack.c.h.b16 %v4586
    %v5333 = vunpack.c.l.b16 %v4587
    %v5334 = vunpack.c.h.b16 %v4587
    %v5335 = vunpack.c.l.b16 %v4588
    %v5336 = vunpack.c.h.b16 %v4588
    %v5337 = vunpack.c.l.b16 %v4589
    %v5338 = vunpack.c.h.b16 %v4589
    %v5339 = vunpack.c.l.b16 %v4590
    %v5340 = vunpack.c.h.b16 %v4590
    %v5341 = vunpack.c.l.b16 %v4591
    %v5342 = vunpack.c.h.b16 %v4591
    %v5343 = vunpack.c.l.b16 %v4592
    %v5344 = vunpack.c.h.b16 %v4592
    %v5345 = vunpack.c.l.b16 %v4593
    %v5346 = vunpack.c.h.b16 %v4593
    %v5347 = vunpack.c.l.b16 %v4594
    %v5348 = vunpack.c.h.b16 %v4594
    %v5349 = vunpack.c.l.b16 %v4595
    %v5350 = vunpack.c.h.b16 %v4595
    %v5351 = vunpack.c.l.b16 %v4596
    %v5352 = vunpack.c.h.b16 %v4596
    %v5353 = vunpack.c.l.b16 %v4597
    %v5354 = vunpack.c.h.b16 %v4597
    %v5355 = vunpack.c.l.b16 %v4598
    %v5356 = vunpack.c.h.b16 %v4598
    %v5357 = vunpack.c.l.b16 %v4599
    %v5358 = vunpack.c.h.b16 %v4599
    %v5359 = vunpack.c.l.b16 %v4600
    %v5360 = vunpack.c.h.b16 %v4600
    %v5361 = vunpack.c.l.b16 %v4601
    %v5362 = vunpack.c.h.b16 %v4601
    %v5363 = vunpack.c.l.b16 %v4602
    %v5364 = vunpack.c.h.b16 %v4602
    %v5365 = vunpack.c.l.b16 %v4603
    %v5366 = vunpack.c.h.b16 %v4603
    %v5367 = vunpack.c.l.b16 %v4604
    %v5368 = vunpack.c.h.b16 %v4604
    %v5369 = vunpack.c.l.b16 %v4605
    %v5370 = vunpack.c.h.b16 %v4605
    %v5371 = vunpack.c.l.b16 %v4606
    %v5372 = vunpack.c.h.b16 %v4606
    %v5373 = vunpack.c.l.b16 %v4607
    %v5374 = vunpack.c.h.b16 %v4607
    %v5375 = vunpack.c.l.b16 %v4608
    %v5376 = vunpack.c.h.b16 %v4608
    %v5377 = vunpack.c.l.b16 %v4609
    %v5378 = vunpack.c.h.b16 %v4609
    %v5379 = vunpack.c.l.b16 %v4610
    %v5380 = vunpack.c.h.b16 %v4610
    %v5381 = vunpack.c.l.b16 %v4611
    %v5382 = vunpack.c.h.b16 %v4611
    %v5383 = vunpack.c.l.b16 %v4612
    %v5384 = vunpack.c.h.b16 %v4612
    %v5385 = vunpack.c.l.b16 %v4613
    %v5386 = vunpack.c.h.b16 %v4613
    %v5387 = vunpack.c.l.b16 %v4614
    %v5388 = vunpack.c.h.b16 %v4614
    %v5389 = vunpack.c.l.b16 %v4615
    %v5390 = vunpack.c.h.b16 %v4615
    %v5391 = vunpack.c.l.b16 %v4616
    %v5392 = vunpack.c.h.b16 %v4616
    %v5393 = vunpack.c.l.b16 %v4617
    %v5394 = vunpack.c.h.b16 %v4617
    %v5395 = vunpack.c.l.b16 %v4618
    %v5396 = vunpack.c.h.b16 %v4618
    %v5397 = vunpack.c.l.b16 %v4619
    %v5398 = vunpack.c.h.b16 %v4619
    %v5399 = vunpack.c.l.b16 %v4620
    %v5400 = vunpack.c.h.b16 %v4620
    %v5401 = vunpack.c.l.b16 %v4621
    %v5402 = vunpack.c.h.b16 %v4621
    %v5403 = vunpack.c.l.b16 %v4622
    %v5404 = vunpack.c.h.b16 %v4622
    %v5405 = vunpack.c.l.b16 %v4623
    %v5406 = vunpack.c.h.b16 %v4623
    %v5407 = vunpack.c.l.b16 %v4624
    %v5408 = vunpack.c.h.b16 %v4624
    %v5409 = vunpack.c.l.b16 %v4625
    %v5410 = vunpack.c.h.b16 %v4625
    %v5411 = vunpack.c.l.b16 %v4626
    %v5412 = vunpack.c.h.b16 %v4626
    %v5413 = vunpack.c.l.b16 %v4627
    %v5414 = vunpack.c.h.b16 %v4627
    %v5415 = vunpack.c.l.b16 %v4628
    %v5416 = vunpack.c.h.b16 %v4628
    %v5417 = vunpack.c.l.b16 %v4629
    %v5418 = vunpack.c.h.b16 %v4629
    %v5419 = vunpack.c.l.b16 %v4630
    %v5420 = vunpack.c.h.b16 %v4630
    %v5421 = vunpack.c.l.b16 %v4631
    %v5422 = vunpack.c.h.b16 %v4631
    %v5423 = vunpack.c.l.b16 %v4632
    %v5424 = vunpack.c.h.b16 %v4632
    %v5425 = vunpack.c.l.b16 %v4633
    %v5426 = vunpack.c.h.b16 %v4633
    %v5427 = vunpack.c.l.b16 %v4634
    %v5428 = vunpack.c.h.b16 %v4634
    %v5429 = vunpack.c.l.b16 %v4635
    %v5430 = vunpack.c.h.b16 %v4635
    %v5431 = vunpack.c.l.b16 %v4636
    %v5432 = vunpack.c.h.b16 %v4636
    %v5433 = vunpack.c.l.b16 %v4637
    %v5434 = vunpack.c.h.b16 %v4637
    %v5435 = vunpack.c.l.b16 %v4638
    %v5436 = vunpack.c.h.b16 %v4638
    %v5437 = vunpack.c.l.b16 %v4639
    %v5438 = vunpack.c.h.b16 %v4639
    %v5439 = vunpack.c.l.b16 %v4640
    %v5440 = vunpack.c.h.b16 %v4640
    %v5441 = vunpack.c.l.b16 %v4641
    %v5442 = vunpack.c.h.b16 %v4641
    %v5443 = vunpack.c.l.b16 %v4642
    %v5444 = vunpack.c.h.b16 %v4642
    %v5445 = vunpack.c.l.b16 %v4643
    %v5446 = vunpack.c.h.b16 %v4643
    %v5447 = vunpack.c.l.b16 %v4644
    %v5448 = vunpack.c.h.b16 %v4644
    %v5449 = vunpack.c.l.b16 %v4645
    %v5450 = vunpack.c.h.b16 %v4645
    %v5451 = vunpack.c.l.b16 %v4646
    %v5452 = vunpack.c.h.b16 %v4646
    %v5453 = vunpack.c.l.b16 %v4647
    %v5454 = vunpack.c.h.b16 %v4647
    %v5455 = vunpack.c.l.b16 %v4648
    %v5456 = vunpack.c.h.b16 %v4648
    %v5457 = vunpack.c.l.b16 %v4649
    %v5458 = vunpack.c.h.b16 %v4649
    %v5459 = vunpack.c.l.b16 %v4650
    %v5460 = vunpack.c.h.b16 %v4650
    %v5461 = vunpack.c.l.b16 %v4651
    %v5462 = vunpack.c.h.b16 %v4651
    %v5463 = vunpack.c.l.b16 %v4652
    %v5464 = vunpack.c.h.b16 %v4652
    %v5465 = vunpack.c.l.b16 %v4653
    %v5466 = vunpack.c.h.b16 %v4653
    %v5467 = vunpack.c.l.b16 %v4654
    %v5468 = vunpack.c.h.b16 %v4654
    %v5469 = vunpack.c.l.b16 %v4655
    %v5470 = vunpack.c.h.b16 %v4655
    %v5471 = vunpack.c.l.b16 %v4656
    %v5472 = vunpack.c.h.b16 %v4656
    %v5473 = vunpack.c.l.b16 %v4657
    %v5474 = vunpack.c.h.b16 %v4657
    %v5475 = vunpack.c.l.b16 %v4658
    %v5476 = vunpack.c.h.b16 %v4658
    %v5477 = vunpack.c.l.b16 %v4659
    %v5478 = vunpack.c.h.b16 %v4659
    %v5479 = vunpack.c.l.b16 %v4660
    %v5480 = vunpack.c.h.b16 %v4660
    %v5481 = vunpack.c.l.b16 %v4661
    %v5482 = vunpack.c.h.b16 %v4661
    %v5483 = vunpack.c.l.b16 %v4662
    %v5484 = vunpack.c.h.b16 %v4662
    %v5485 = vunpack.c.l.b16 %v4663
    %v5486 = vunpack.c.h.b16 %v4663
    %v5487 = vunpack.c.l.b16 %v4664
    %v5488 = vunpack.c.h.b16 %v4664
    %v5489 = vunpack.c.l.b16 %v4665
    %v5490 = vunpack.c.h.b16 %v4665
    %v5491 = vunpack.c.l.b16 %v4666
    %v5492 = vunpack.c.h.b16 %v4666
    %v5493 = vunpack.c.l.b16 %v4667
    %v5494 = vunpack.c.h.b16 %v4667
    %v5495 = vunpack.c.l.b16 %v4668
    %v5496 = vunpack.c.h.b16 %v4668
    %v5497 = vunpack.c.l.b16 %v4669
    %v5498 = vunpack.c.h.b16 %v4669
    %v5499 = vunpack.c.l.b16 %v4670
    %v5500 = vunpack.c.h.b16 %v4670
    %v5501 = vunpack.c.l.b16 %v4671
    %v5502 = vunpack.c.h.b16 %v4671
    %v5503 = vunpack.c.l.b16 %v4672
    %v5504 = vunpack.c.h.b16 %v4672
    %v5505 = vunpack.c.l.b16 %v4673
    %v5506 = vunpack.c.h.b16 %v4673
    %v5507 = vunpack.c.l.b16 %v4674
    %v5508 = vunpack.c.h.b16 %v4674
    %v5509 = vunpack.c.l.b16 %v4675
    %v5510 = vunpack.c.h.b16 %v4675
    %v5511 = vunpack.c.l.b16 %v4676
    %v5512 = vunpack.c.h.b16 %v4676
    %v5513 = vunpack.c.l.b16 %v4677
    %v5514 = vunpack.c.h.b16 %v4677
    %v5515 = vunpack.c.l.b16 %v4678
    %v5516 = vunpack.c.h.b16 %v4678
    %v5517 = vunpack.c.l.b16 %v4679
    %v5518 = vunpack.c.h.b16 %v4679
    %v5519 = vunpack.c.l.b16 %v4680
    %v5520 = vunpack.c.h.b16 %v4680
    %v5521 = vunpack.c.l.b16 %v4681
    %v5522 = vunpack.c.h.b16 %v4681
    %v5523 = vunpack.c.l.b16 %v4682
    %v5524 = vunpack.c.h.b16 %v4682
    %v5525 = vunpack.c.l.b16 %v4683
    %v5526 = vunpack.c.h.b16 %v4683
    %v5527 = vunpack.c.l.b16 %v4684
    %v5528 = vunpack.c.h.b16 %v4684
    %v5529 = vunpack.c.l.b16 %v4685
    %v5530 = vunpack.c.h.b16 %v4685
    %v5531 = vunpack.c.l.b16 %v4686
    %v5532 = vunpack.c.h.b16 %v4686
    %v5533 = vunpack.c.l.b16 %v4687
    %v5534 = vunpack.c.h.b16 %v4687
    %v5535 = vunpack.c.l.b16 %v4688
    %v5536 = vunpack.c.h.b16 %v4688
    %v5537 = vunpack.c.l.b16 %v4689
    %v5538 = vunpack.c.h.b16 %v4689
    %v5539 = vunpack.c.l.b16 %v4690
    %v5540 = vunpack.c.h.b16 %v4690
    %v5541 = vunpack.c.l.b16 %v4691
    %v5542 = vunpack.c.h.b16 %v4691
    %v5543 = vunpack.c.l.b16 %v4692
    %v5544 = vunpack.c.h.b16 %v4692
    %v5545 = vunpack.c.l.b16 %v4693
    %v5546 = vunpack.c.h.b16 %v4693
    %v5547 = vunpack.c.l.b16 %v4694
    %v5548 = vunpack.c.h.b16 %v4694
    %v5549 = vunpack.c.l.b16 %v4695
    %v5550 = vunpack.c.h.b16 %v4695
    %v5551 = vunpack.c.l.b16 %v4696
    %v5552 = vunpack.c.h.b16 %v4696
    %v5553 = vunpack.c.l.b16 %v4697
    %v5554 = vunpack.c.h.b16 %v4697
    %v5555 = vunpack.c.l.b16 %v4698
    %v5556 = vunpack.c.h.b16 %v4698
    %v5557 = vunpack.c.l.b16 %v4699
    %v5558 = vunpack.c.h.b16 %v4699
    %v5559 = vunpack.c.l.b16 %v4700
    %v5560 = vunpack.c.h.b16 %v4700
    %v5561 = vunpack.c.l.b16 %v4701
    %v5562 = vunpack.c.h.b16 %v4701
    %v5563 = vunpack.c.l.b16 %v4702
    %v5564 = vunpack.c.h.b16 %v4702
    %v5565 = vunpack.c.l.b16 %v4703
    %v5566 = vunpack.c.h.b16 %v4703
    %v5567 = vunpack.c.l.b16 %v4704
    %v5568 = vunpack.c.h.b16 %v4704
    %v5569 = vunpack.c.l.b16 %v4705
    %v5570 = vunpack.c.h.b16 %v4705
    %v5571 = vunpack.c.l.b16 %v4706
    %v5572 = vunpack.c.h.b16 %v4706
    %v5573 = vunpack.c.l.b16 %v4707
    %v5574 = vunpack.c.h.b16 %v4707
    %v5575 = vunpack.c.l.b16 %v4708
    %v5576 = vunpack.c.h.b16 %v4708
    %v5577 = vunpack.c.l.b16 %v4709
    %v5578 = vunpack.c.h.b16 %v4709
    %v5579 = vunpack.c.l.b16 %v4710
    %v5580 = vunpack.c.h.b16 %v4710
    %v5581 = vunpack.c.l.b16 %v4711
    %v5582 = vunpack.c.h.b16 %v4711
    %v5583 = vunpack.c.l.b16 %v4712
    %v5584 = vunpack.c.h.b16 %v4712
    %v5585 = vunpack.c.l.b16 %v4713
    %v5586 = vunpack.c.h.b16 %v4713
    %v5587 = vunpack.c.l.b16 %v4714
    %v5588 = vunpack.c.h.b16 %v4714
    %v5589 = vunpack.c.l.b16 %v4715
    %v5590 = vunpack.c.h.b16 %v4715
    %v5591 = vunpack.c.l.b16 %v4716
    %v5592 = vunpack.c.h.b16 %v4716
    %v5593 = vunpack.c.l.b16 %v4717
    %v5594 = vunpack.c.h.b16 %v4717
    %v5595 = vunpack.c.l.b16 %v4718
    %v5596 = vunpack.c.h.b16 %v4718
    %v5597 = vunpack.c.l.b16 %v4719
    %v5598 = vunpack.c.h.b16 %v4719
    %v5599 = vunpack.c.l.b16 %v4720
    %v5600 = vunpack.c.h.b16 %v4720
    %v5601 = vunpack.c.l.b16 %v4721
    %v5602 = vunpack.c.h.b16 %v4721
    %v5603 = vunpack.c.l.b16 %v4722
    %v5604 = vunpack.c.h.b16 %v4722
    %v5605 = vunpack.c.l.b16 %v4723
    %v5606 = vunpack.c.h.b16 %v4723
    %v5607 = vunpack.c.l.b16 %v4724
    %v5608 = vunpack.c.h.b16 %v4724
    %v5609 = vunpack.c.l.b16 %v4725
    %v5610 = vunpack.c.h.b16 %v4725
    %v5611 = vunpack.c.l.b16 %v4726
    %v5612 = vunpack.c.h.b16 %v4726
    %v5613 = vunpack.c.l.b16 %v4727
    %v5614 = vunpack.c.h.b16 %v4727
    %v5615 = vunpack.c.l.b16 %v4728
    %v5616 = vunpack.c.h.b16 %v4728
    %v5617 = vunpack.c.l.b16 %v4729
    %v5618 = vunpack.c.h.b16 %v4729
    %v5619 = vunpack.c.l.b16 %v4730
    %v5620 = vunpack.c.h.b16 %v4730
    %v5621 = vunpack.c.l.b16 %v4731
    %v5622 = vunpack.c.h.b16 %v4731
    %v5623 = vunpack.c.l.b16 %v4732
    %v5624 = vunpack.c.h.b16 %v4732
    %v5625 = vunpack.c.l.b16 %v4733
    %v5626 = vunpack.c.h.b16 %v4733
    %v5627 = vunpack.c.l.b16 %v4734
    %v5628 = vunpack.c.h.b16 %v4734
    %v5629 = vunpack.c.l.b16 %v4735
    %v5630 = vunpack.c.h.b16 %v4735
    %v5631 = vunpack.c.l.b16 %v4736
    %v5632 = vunpack.c.h.b16 %v4736
    %v5633 = vpack.c.b16 %v5063, %v5057
    %v5634 = vpack.c.b16 %v5064, %v5058
    %v5635 = vpack.c.b16 %v5065, %v5059
    %v5636 = vpack.c.b16 %v5066, %v5060
    %v5637 = vpack.c.b16 %v5067, %v5061
    %v5638 = vpack.c.b16 %v5068, %v5062
    %v5639 = vpack.c.b16 %v5075, %v5069
    %v5640 = vpack.c.b16 %v5076, %v5070
    %v5641 = vpack.c.b16 %v5077, %v5071
    %v5642 = vpack.c.b16 %v5078, %v5072
    %v5643 = vpack.c.b16 %v5079, %v5073
    %v5644 = vpack.c.b16 %v5080, %v5074
    %v5645 = vpack.c.b16 %v5087, %v5081
    %v5646 = vpack.c.b16 %v5088, %v5082
    %v5647 = vpack.c.b16 %v5089, %v5083
    %v5648 = vpack.c.b16 %v5090, %v5084
    %v5649 = vpack.c.b16 %v5091, %v5085
    %v5650 = vpack.c.b16 %v5092, %v5086
    %v5651 = vpack.c.b16 %v5099, %v5093
    %v5652 = vpack.c.b16 %v5100, %v5094
    %v5653 = vpack.c.b16 %v5101, %v5095
    %v5654 = vpack.c.b16 %v5102, %v5096
    %v5655 = vpack.c.b16 %v5103, %v5097
    %v5656 = vpack.c.b16 %v5104, %v5098
    %v5657 = vpack.c.b16 %v5111, %v5105
    %v5658 = vpack.c.b16 %v5112, %v5106
    %v5659 = vpack.c.b16 %v5113, %v5107
    %v5660 = vpack.c.b16 %v5114, %v5108
    %v5661 = vpack.c.b16 %v5115, %v5109
    %v5662 = vpack.c.b16 %v5116, %v5110
    %v5663 = vpack.c.b16 %v5123, %v5117
    %v5664 = vpack.c.b16 %v5124, %v5118
    %v5665 = vpack.c.b16 %v5125, %v5119
    %v5666 = vpack.c.b16 %v5126, %v5120
    %v5667 = vpack.c.b16 %v5127, %v5121
    %v5668 = vpack.c.b16 %v5128, %v5122
    %v5669 = vpack.c.b16 %v5135, %v5129
    %v5670 = vpack.c.b16 %v5136, %v5130
    %v5671 = vpack.c.b16 %v5137, %v5131
    %v5672 = vpack.c.b16 %v5138, %v5132
    %v5673 = vpack.c.b16 %v5139, %v5133
    %v5674 = vpack.c.b16 %v5140, %v5134
    %v5675 = vpack.c.b16 %v5147, %v5141
    %v5676 = vpack.c.b16 %v5148, %v5142
    %v5677 = vpack.c.b16 %v5149, %v5143
    %v5678 = vpack.c.b16 %v5150, %v5144
    %v5679 = vpack.c.b16 %v5151, %v5145
    %v5680 = vpack.c.b16 %v5152, %v5146
    %v5681 = vpack.c.b16 %v5159, %v5153
    %v5682 = vpack.c.b16 %v5160, %v5154
    %v5683 = vpack.c.b16 %v5161, %v5155
    %v5684 = vpack.c.b16 %v5162, %v5156
    %v5685 = vpack.c.b16 %v5163, %v5157
    %v5686 = vpack.c.b16 %v5164, %v5158
    %v5687 = vpack.c.b16 %v5171, %v5165
    %v5688 = vpack.c.b16 %v5172, %v5166
    %v5689 = vpack.c.b16 %v5173, %v5167
    %v5690 = vpack.c.b16 %v5174, %v5168
    %v5691 = vpack.c.b16 %v5175, %v5169
    %v5692 = vpack.c.b16 %v5176, %v5170
    %v5693 = vpack.c.b16 %v5183, %v5177
    %v5694 = vpack.c.b16 %v5184, %v5178
    %v5695 = vpack.c.b16 %v5185, %v5179
    %v5696 = vpack.c.b16 %v5186, %v5180
    %v5697 = vpack.c.b16 %v5187, %v5181
    %v5698 = vpack.c.b16 %v5188, %v5182
    %v5699 = vpack.c.b16 %v5195, %v5189
    %v5700 = vpack.c.b16 %v5196, %v5190
    %v5701 = vpack.c.b16 %v5197, %v5191
    %v5702 = vpack.c.b16 %v5198, %v5192
    %v5703 = vpack.c.b16 %v5199, %v5193
    %v5704 = vpack.c.b16 %v5200, %v5194
    %v5705 = vpack.c.b16 %v5207, %v5201
    %v5706 = vpack.c.b16 %v5208, %v5202
    %v5707 = vpack.c.b16 %v5209, %v5203
    %v5708 = vpack.c.b16 %v5210, %v5204
    %v5709 = vpack.c.b16 %v5211, %v5205
    %v5710 = vpack.c.b16 %v5212, %v5206
    %v5711 = vpack.c.b16 %v5219, %v5213
    %v5712 = vpack.c.b16 %v5220, %v5214
    %v5713 = vpack.c.b16 %v5221, %v5215
    %v5714 = vpack.c.b16 %v5222, %v5216
    %v5715 = vpack.c.b16 %v5223, %v5217
    %v5716 = vpack.c.b16 %v5224, %v5218
    %v5717 = vpack.c.b16 %v5231, %v5225
    %v5718 = vpack.c.b16 %v5232, %v5226
    %v5719 = vpack.c.b16 %v5233, %v5227
    %v5720 = vpack.c.b16 %v5234, %v5228
    %v5721 = vpack.c.b16 %v5235, %v5229
    %v5722 = vpack.c.b16 %v5236, %v5230
    %v5723 = vpack.c.b16 %v5243, %v5237
    %v5724 = vpack.c.b16 %v5244, %v5238
    %v5725 = vpack.c.b16 %v5245, %v5239
    %v5726 = vpack.c.b16 %v5246, %v5240
    %v5727 = vpack.c.b16 %v5247, %v5241
    %v5728 = vpack.c.b16 %v5248, %v5242
    %v5729 = vpack.c.b16 %v5255, %v5249
    %v5730 = vpack.c.b16 %v5256, %v5250
    %v5731 = vpack.c.b16 %v5257, %v5251
    %v5732 = vpack.c.b16 %v5258, %v5252
    %v5733 = vpack.c.b16 %v5259, %v5253
    %v5734 = vpack.c.b16 %v5260, %v5254
    %v5735 = vpack.c.b16 %v5267, %v5261
    %v5736 = vpack.c.b16 %v5268, %v5262
    %v5737 = vpack.c.b16 %v5269, %v5263
    %v5738 = vpack.c.b16 %v5270, %v5264
    %v5739 = vpack.c.b16 %v5271, %v5265
    %v5740 = vpack.c.b16 %v5272, %v5266
    %v5741 = vpack.c.b16 %v5279, %v5273
    %v5742 = vpack.c.b16 %v5280, %v5274
    %v5743 = vpack.c.b16 %v5281, %v5275
    %v5744 = vpack.c.b16 %v5282, %v5276
    %v5745 = vpack.c.b16 %v5283, %v5277
    %v5746 = vpack.c.b16 %v5284, %v5278
    %v5747 = vpack.c.b16 %v5291, %v5285
    %v5748 = vpack.c.b16 %v5292, %v5286
    %v5749 = vpack.c.b16 %v5293, %v5287
    %v5750 = vpack.c.b16 %v5294, %v5288
    %v5751 = vpack.c.b16 %v5295, %v5289
    %v5752 = vpack.c.b16 %v5296, %v5290
    %v5753 = vpack.c.b16 %v5303, %v5297
    %v5754 = vpack.c.b16 %v5304, %v5298
    %v5755 = vpack.c.b16 %v5305, %v5299
    %v5756 = vpack.c.b16 %v5306, %v5300
    %v5757 = vpack.c.b16 %v5307, %v5301
    %v5758 = vpack.c.b16 %v5308, %v5302
    %v5759 = vpack.c.b16 %v5315, %v5309
    %v5760 = vpack.c.b16 %v5316, %v5310
    %v5761 = vpack.c.b16 %v5317, %v5311
    %v5762 = vpack.c.b16 %v5318, %v5312
    %v5763 = vpack.c.b16 %v5319, %v5313
    %v5764 = vpack.c.b16 %v5320, %v5314
    %v5765 = vpack.c.b16 %v5327, %v5321
    %v5766 = vpack.c.b16 %v5328, %v5322
    %v5767 = vpack.c.b16 %v5329, %v5323
    %v5768 = vpack.c.b16 %v5330, %v5324
    %v5769 = vpack.c.b16 %v5331, %v5325
    %v5770 = vpack.c.b16 %v5332, %v5326
    %v5771 = vpack.c.b16 %v5339, %v5333
    %v5772 = vpack.c.b16 %v5340, %v5334
    %v5773 = vpack.c.b16 %v5341, %v5335
    %v5774 = vpack.c.b16 %v5342, %v5336
    %v5775 = vpack.c.b16 %v5343, %v5337
    %v5776 = vpack.c.b16 %v5344, %v5338
    %v5777 = vpack.c.b16 %v5351, %v5345
    %v5778 = vpack.c.b16 %v5352, %v5346
    %v5779 = vpack.c.b16 %v5353, %v5347
    %v5780 = vpack.c.b16 %v5354, %v5348
    %v5781 = vpack.c.b16 %v5355, %v5349
    %v5782 = vpack.c.b16 %v5356, %v5350
    %v5783 = vpack.c.b16 %v5363, %v5357
    %v5784 = vpack.c.b16 %v5364, %v5358
    %v5785 = vpack.c.b16 %v5365, %v5359
    %v5786 = vpack.c.b16 %v5366, %v5360
    %v5787 = vpack.c.b16 %v5367, %v5361
    %v5788 = vpack.c.b16 %v5368, %v5362
    %v5789 = vpack.c.b16 %v5375, %v5369
    %v5790 = vpack.c.b16 %v5376, %v5370
    %v5791 = vpack.c.b16 %v5377, %v5371
    %v5792 = vpack.c.b16 %v5378, %v5372
    %v5793 = vpack.c.b16 %v5379, %v5373
    %v5794 = vpack.c.b16 %v5380, %v5374
    %v5795 = vpack.c.b16 %v5387, %v5381
    %v5796 = vpack.c.b16 %v5388, %v5382
    %v5797 = vpack.c.b16 %v5389, %v5383
    %v5798 = vpack.c.b16 %v5390, %v5384
    %v5799 = vpack.c.b16 %v5391, %v5385
    %v5800 = vpack.c.b16 %v5392, %v5386
    %v5801 = vpack.c.b16 %v5399, %v5393
    %v5802 = vpack.c.b16 %v5400, %v5394
    %v5803 = vpack.c.b16 %v5401, %v5395
    %v5804 = vpack.c.b16 %v5402, %v5396
    %v5805 = vpack.c.b16 %v5403, %v5397
    %v5806 = vpack.c.b16 %v5404, %v5398
    %v5807 = vpack.c.b16 %v5411, %v5405
    %v5808 = vpack.c.b16 %v5412, %v5406
    %v5809 = vpack.c.b16 %v5413, %v5407
    %v5810 = vpack.c.b16 %v5414, %v5408
    %v5811 = vpack.c.b16 %v5415, %v5409
    %v5812 = vpack.c.b16 %v5416, %v5410
    %v5813 = vpack.c.b16 %v5423, %v5417
    %v5814 = vpack.c.b16 %v5424, %v5418
    %v5815 = vpack.c.b16 %v5425, %v5419
    %v5816 = vpack.c.b16 %v5426, %v5420
    %v5817 = vpack.c.b16 %v5427, %v5421
    %v5818 = vpack.c.b16 %v5428, %v5422
    %v5819 = vpack.c.b16 %v5435, %v5429
    %v5820 = vpack.c.b16 %v5436, %v5430
    %v5821 = vpack.c.b16 %v5437, %v5431
    %v5822 = vpack.c.b16 %v5438, %v5432
    %v5823 = vpack.c.b16 %v5439, %v5433
    %v5824 = vpack.c.b16 %v5440, %v5434
    %v5825 = vpack.c.b16 %v5447, %v5441
    %v5826 = vpack.c.b16 %v5448, %v5442
    %v5827 = vpack.c.b16 %v5449, %v5443
    %v5828 = vpack.c.b16 %v5450, %v5444
    %v5829 = vpack.c.b16 %v5451, %v5445
    %v5830 = vpack.c.b16 %v5452, %v5446
    %v5831 = vpack.c.b16 %v5459, %v5453
    %v5832 = vpack.c.b16 %v5460, %v5454
    %v5833 = vpack.c.b16 %v5461, %v5455
    %v5834 = vpack.c.b16 %v5462, %v5456
    %v5835 = vpack.c.b16 %v5463, %v5457
    %v5836 = vpack.c.b16 %v5464, %v5458
    %v5837 = vpack.c.b16 %v5471, %v5465
    %v5838 = vpack.c.b16 %v5472, %v5466
    %v5839 = vpack.c.b16 %v5473, %v5467
    %v5840 = vpack.c.b16 %v5474, %v5468
    %v5841 = vpack.c.b16 %v5475, %v5469
    %v5842 = vpack.c.b16 %v5476, %v5470
    %v5843 = vpack.c.b16 %v5483, %v5477
    %v5844 = vpack.c.b16 %v5484, %v5478
    %v5845 = vpack.c.b16 %v5485, %v5479
    %v5846 = vpack.c.b16 %v5486, %v5480
    %v5847 = vpack.c.b16 %v5487, %v5481
    %v5848 = vpack.c.b16 %v5488, %v5482
    %v5849 = vpack.c.b16 %v5495, %v5489
    %v5850 = vpack.c.b16 %v5496, %v5490
    %v5851 = vpack.c.b16 %v5497, %v5491
    %v5852 = vpack.c.b16 %v5498, %v5492
    %v5853 = vpack.c.b16 %v5499, %v5493
    %v5854 = vpack.c.b16 %v5500, %v5494
    %v5855 = vpack.c.b16 %v5507, %v5501
    %v5856 = vpack.c.b16 %v5508, %v5502
    %v5857 = vpack.c.b16 %v5509, %v5503
    %v5858 = vpack.c.b16 %v5510, %v5504
    %v5859 = vpack.c.b16 %v5511, %v5505
    %v5860 = vpack.c.b16 %v5512, %v5506
    %v5861 = vpack.c.b16 %v5519, %v5513
    %v5862 = vpack.c.b16 %v5520, %v5514
    %v5863 = vpack.c.b16 %v5521, %v5515
    %v5864 = vpack.c.b16 %v5522, %v5516
    %v5865 = vpack.c.b16 %v5523, %v5517
    %v5866 = vpack.c.b16 %v5524, %v5518
    %v5867 = vpack.c.b16 %v5531, %v5525
    %v5868 = vpack.c.b16 %v5532, %v5526
    %v5869 = vpack.c.b16 %v5533, %v5527
    %v5870 = vpack.c.b16 %v5534, %v5528
    %v5871 = vpack.c.b16 %v5535, %v5529
    %v5872 = vpack.c.b16 %v5536, %v5530
    %v5873 = vpack.c.b16 %v5543, %v5537
    %v5874 = vpack.c.b16 %v5544, %v5538
    %v5875 = vpack.c.b16 %v5545, %v5539
    %v5876 = vpack.c.b16 %v5546, %v5540
    %v5877 = vpack.c.b16 %v5547, %v5541
    %v5878 = vpack.c.b16 %v5548, %v5542
    %v5879 = vpack.c.b16 %v5555, %v5549
    %v5880 = vpack.c.b16 %v5556, %v5550
    %v5881 = vpack.c.b16 %v5557, %v5551
    %v5882 = vpack.c.b16 %v5558, %v5552
    %v5883 = vpack.c.b16 %v5559, %v5553
    %v5884 = vpack.c.b16 %v5560, %v5554
    %v5885 = vpack.c.b16 %v5567, %v5561
    %v5886 = vpack.c.b16 %v5568, %v5562
    %v5887 = vpack.c.b16 %v5569, %v5563
    %v5888 = vpack.c.b16 %v5570, %v5564
    %v5889 = vpack.c.b16 %v5571, %v5565
    %v5890 = vpack.c.b16 %v5572, %v5566
    %v5891 = vpack.c.b16 %v5579, %v5573
    %v5892 = vpack.c.b16 %v5580, %v5574
    %v5893 = vpack.c.b16 %v5581, %v5575
    %v5894 = vpack.c.b16 %v5582, %v5576
    %v5895 = vpack.c.b16 %v5583, %v5577
    %v5896 = vpack.c.b16 %v5584, %v5578
    %v5897 = vpack.c.b16 %v5591, %v5585
    %v5898 = vpack.c.b16 %v5592, %v5586
    %v5899 = vpack.c.b16 %v5593, %v5587
    %v5900 = vpack.c.b16 %v5594, %v5588
    %v5901 = vpack.c.b16 %v5595, %v5589
    %v5902 = vpack.c.b16 %v5596, %v5590
    %v5903 = vpack.c.b16 %v5603, %v5597
    %v5904 = vpack.c.b16 %v5604, %v5598
    %v5905 = vpack.c.b16 %v5605, %v5599
    %v5906 = vpack.c.b16 %v5606, %v5600
    %v5907 = vpack.c.b16 %v5607, %v5601
    %v5908 = vpack.c.b16 %v5608, %v5602
    %v5909 = vpack.c.b16 %v5615, %v5609
    %v5910 = vpack.c.b16 %v5616, %v5610
    %v5911 = vpack.c.b16 %v5617, %v5611
    %v5912 = vpack.c.b16 %v5618, %v5612
    %v5913 = vpack.c.b16 %v5619, %v5613
    %v5914 = vpack.c.b16 %v5620, %v5614
    %v5915 = vpack.c.b16 %v5627, %v5621
    %v5916 = vpack.c.b16 %v5628, %v5622
    %v5917 = vpack.c.b16 %v5629, %v5623
    %v5918 = vpack.c.b16 %v5630, %v5624
    %v5919 = vpack.c.b16 %v5631, %v5625
    %v5920 = vpack.c.b16 %v5632, %v5626
    %6209 = vmatprep.subr.bf16.mxu0 %v5676
    %6210 = vmatpush1.bf16.msra.mxu0 %v5675
    %6211 = vmatprep.subr.bf16.mxu0 %v5670
    %6212 = vmatpush1.bf16.msra.mxu0 %v5669
    %6213 = vmatprep.subr.bf16.mxu0 %v5664
    %6214 = vmatpush1.bf16.msra.mxu0 %v5663
    %6215 = vmatprep.subr.bf16.mxu0 %v5658
    %6216 = vmatpush1.bf16.msra.mxu0 %v5657
    %6217 = vmatprep.subr.bf16.mxu0 %v5652
    %6218 = vmatpush1.bf16.msra.mxu0 %v5651
    %6219 = vmatprep.subr.bf16.mxu0 %v5646
    %6220 = vmatpush1.bf16.msra.mxu0 %v5645
    %6221 = vmatprep.subr.bf16.mxu0 %v5640
    %6222 = vmatpush1.bf16.msra.mxu0 %v5639
    %6223 = vmatprep.subr.bf16.mxu0 %v5634
    %6224 = vmatpush1.bf16.msra.mxu0 %v5633
    %6225 = vmatprep.subr.bf16.mxu0 %v5724
    %6226 = vmatpush2.bf16.msra.mxu0 %v5723
    %6227 = vmatprep.subr.bf16.mxu0 %v5718
    %6228 = vmatpush2.bf16.msra.mxu0 %v5717
    %6229 = vmatprep.subr.bf16.mxu0 %v5712
    %6230 = vmatpush2.bf16.msra.mxu0 %v5711
    %6231 = vmatprep.subr.bf16.mxu0 %v5706
    %6232 = vmatpush2.bf16.msra.mxu0 %v5705
    %6233 = vmatprep.subr.bf16.mxu0 %v5700
    %6234 = vmatpush2.bf16.msra.mxu0 %v5699
    %6235 = vmatprep.subr.bf16.mxu0 %v5694
    %6236 = vmatpush2.bf16.msra.mxu0 %v5693
    %6237 = vmatprep.subr.bf16.mxu0 %v5688
    %6238 = vmatpush2.bf16.msra.mxu0 %v5687
    %6239 = vmatprep.subr.bf16.mxu0 %v5682
    %6240 = vmatpush2.bf16.msra.mxu0 %v5681
    %6241 = vmatprep.mubr.bf16.mxu0 %v4444
    %6242 = vmatmul.mubr.bf16.gmra.mxu0 %v4443
    %v6243 = vpop.f32.mrf.mxu0
    %v6244 = vadd.f32 %v4742, %v6243
    %v6245 = vpop.f32.mrf.mxu0
    %v6246 = vadd.f32 %v4746, %v6245
    %v6247 = vpop.f32.mrf.mxu0
    %v6248 = vpop.f32.mrf.mxu0
    %6249 = vdwg.mxu0
    %6250 = vmatprep.subr.bf16.mxu0 %v5772
    %6251 = vmatpush1.bf16.msra.mxu0 %v5771
    %6252 = vmatprep.subr.bf16.mxu0 %v5766
    %6253 = vmatpush1.bf16.msra.mxu0 %v5765
    %6254 = vmatprep.subr.bf16.mxu0 %v5760
    %6255 = vmatpush1.bf16.msra.mxu0 %v5759
    %6256 = vmatprep.subr.bf16.mxu0 %v5754
    %6257 = vmatpush1.bf16.msra.mxu0 %v5753
    %6258 = vmatprep.subr.bf16.mxu0 %v5748
    %6259 = vmatpush1.bf16.msra.mxu0 %v5747
    %6260 = vmatprep.subr.bf16.mxu0 %v5742
    %6261 = vmatpush1.bf16.msra.mxu0 %v5741
    %6262 = vmatprep.subr.bf16.mxu0 %v5736
    %6263 = vmatpush1.bf16.msra.mxu0 %v5735
    %6264 = vmatprep.subr.bf16.mxu0 %v5730
    %6265 = vmatpush1.bf16.msra.mxu0 %v5729
    %6266 = vmatprep.subr.bf16.mxu0 %v5820
    %6267 = vmatpush2.bf16.msra.mxu0 %v5819
    %6268 = vmatprep.subr.bf16.mxu0 %v5814
    %6269 = vmatpush2.bf16.msra.mxu0 %v5813
    %6270 = vmatprep.subr.bf16.mxu0 %v5808
    %6271 = vmatpush2.bf16.msra.mxu0 %v5807
    %6272 = vmatprep.subr.bf16.mxu0 %v5802
    %6273 = vmatpush2.bf16.msra.mxu0 %v5801
    %6274 = vmatprep.subr.bf16.mxu0 %v5796
    %6275 = vmatpush2.bf16.msra.mxu0 %v5795
    %6276 = vmatprep.subr.bf16.mxu0 %v5790
    %6277 = vmatpush2.bf16.msra.mxu0 %v5789
    %6278 = vmatprep.subr.bf16.mxu0 %v5784
    %6279 = vmatpush2.bf16.msra.mxu0 %v5783
    %6280 = vmatprep.subr.bf16.mxu0 %v5778
    %6281 = vmatpush2.bf16.msra.mxu0 %v5777
    %6282 = vmatprep.mubr.bf16.mxu0 %v4446
    %6283 = vmatmul.mubr.bf16.gmra.mxu0 %v4445
    %v6284 = vpop.f32.mrf.mxu0
    %v6285 = vadd.f32 %v6244, %v6284
    %v6286 = vpop.f32.mrf.mxu0
    %v6287 = vadd.f32 %v6246, %v6286
    %v6288 = vpop.f32.mrf.mxu0
    %v6289 = vpop.f32.mrf.mxu0
    %6290 = vdwg.mxu0
    %6291 = vmatprep.subr.bf16.mxu0 %v5868
    %6292 = vmatpush1.bf16.msra.mxu0 %v5867
    %6293 = vmatprep.subr.bf16.mxu0 %v5862
    %6294 = vmatpush1.bf16.msra.mxu0 %v5861
    %6295 = vmatprep.subr.bf16.mxu0 %v5856
    %6296 = vmatpush1.bf16.msra.mxu0 %v5855
    %6297 = vmatprep.subr.bf16.mxu0 %v5850
    %6298 = vmatpush1.bf16.msra.mxu0 %v5849
    %6299 = vmatprep.subr.bf16.mxu0 %v5844
    %6300 = vmatpush1.bf16.msra.mxu0 %v5843
    %6301 = vmatprep.subr.bf16.mxu0 %v5838
    %6302 = vmatpush1.bf16.msra.mxu0 %v5837
    %6303 = vmatprep.subr.bf16.mxu0 %v5832
    %6304 = vmatpush1.bf16.msra.mxu0 %v5831
    %6305 = vmatprep.subr.bf16.mxu0 %v5826
    %6306 = vmatpush1.bf16.msra.mxu0 %v5825
    %6307 = vmatprep.subr.bf16.mxu0 %v5916
    %6308 = vmatpush2.bf16.msra.mxu0 %v5915
    %6309 = vmatprep.subr.bf16.mxu0 %v5910
    %6310 = vmatpush2.bf16.msra.mxu0 %v5909
    %6311 = vmatprep.subr.bf16.mxu0 %v5904
    %6312 = vmatpush2.bf16.msra.mxu0 %v5903
    %6313 = vmatprep.subr.bf16.mxu0 %v5898
    %6314 = vmatpush2.bf16.msra.mxu0 %v5897
    %6315 = vmatprep.subr.bf16.mxu0 %v5892
    %6316 = vmatpush2.bf16.msra.mxu0 %v5891
    %6317 = vmatprep.subr.bf16.mxu0 %v5886
    %6318 = vmatpush2.bf16.msra.mxu0 %v5885
    %6319 = vmatprep.subr.bf16.mxu0 %v5880
    %6320 = vmatpush2.bf16.msra.mxu0 %v5879
    %6321 = vmatprep.subr.bf16.mxu0 %v5874
    %6322 = vmatpush2.bf16.msra.mxu0 %v5873
    %6323 = vmatprep.mubr.bf16.mxu0 %v4448
    %6324 = vmatmul.mubr.bf16.gmra.mxu0 %v4447
    %v6325 = vpop.f32.mrf.mxu0
    %v6326 = vadd.f32 %v6285, %v6325
    %v6327 = vpop.f32.mrf.mxu0
    %v6328 = vadd.f32 %v6287, %v6327
    %v6329 = vpop.f32.mrf.mxu0
    %v6330 = vpop.f32.mrf.mxu0
    %6331 = vdwg.mxu0
    %6332 = vmatprep.subr.bf16.mxu0 %v5678
    %6333 = vmatpush1.bf16.msra.mxu0 %v5677
    %6334 = vmatprep.subr.bf16.mxu0 %v5672
    %6335 = vmatpush1.bf16.msra.mxu0 %v5671
    %6336 = vmatprep.subr.bf16.mxu0 %v5666
    %6337 = vmatpush1.bf16.msra.mxu0 %v5665
    %6338 = vmatprep.subr.bf16.mxu0 %v5660
    %6339 = vmatpush1.bf16.msra.mxu0 %v5659
    %6340 = vmatprep.subr.bf16.mxu0 %v5654
    %6341 = vmatpush1.bf16.msra.mxu0 %v5653
    %6342 = vmatprep.subr.bf16.mxu0 %v5648
    %6343 = vmatpush1.bf16.msra.mxu0 %v5647
    %6344 = vmatprep.subr.bf16.mxu0 %v5642
    %6345 = vmatpush1.bf16.msra.mxu0 %v5641
    %6346 = vmatprep.subr.bf16.mxu0 %v5636
    %6347 = vmatpush1.bf16.msra.mxu0 %v5635
    %6348 = vmatprep.subr.bf16.mxu0 %v5726
    %6349 = vmatpush2.bf16.msra.mxu0 %v5725
    %6350 = vmatprep.subr.bf16.mxu0 %v5720
    %6351 = vmatpush2.bf16.msra.mxu0 %v5719
    %6352 = vmatprep.subr.bf16.mxu0 %v5714
    %6353 = vmatpush2.bf16.msra.mxu0 %v5713
    %6354 = vmatprep.subr.bf16.mxu0 %v5708
    %6355 = vmatpush2.bf16.msra.mxu0 %v5707
    %6356 = vmatprep.subr.bf16.mxu0 %v5702
    %6357 = vmatpush2.bf16.msra.mxu0 %v5701
    %6358 = vmatprep.subr.bf16.mxu0 %v5696
    %6359 = vmatpush2.bf16.msra.mxu0 %v5695
    %6360 = vmatprep.subr.bf16.mxu0 %v5690
    %6361 = vmatpush2.bf16.msra.mxu0 %v5689
    %6362 = vmatprep.subr.bf16.mxu0 %v5684
    %6363 = vmatpush2.bf16.msra.mxu0 %v5683
    %6364 = vmatprep.mubr.bf16.mxu0 %v4444
    %6365 = vmatmul.mubr.bf16.gmra.mxu0 %v4443
    %v6366 = vpop.f32.mrf.mxu0
    %v6367 = vadd.f32 %v4750, %v6366
    %v6368 = vpop.f32.mrf.mxu0
    %v6369 = vadd.f32 %v4754, %v6368
    %v6370 = vpop.f32.mrf.mxu0
    %v6371 = vpop.f32.mrf.mxu0
    %6372 = vdwg.mxu0
    %6373 = vmatprep.subr.bf16.mxu0 %v5774
    %6374 = vmatpush1.bf16.msra.mxu0 %v5773
    %6375 = vmatprep.subr.bf16.mxu0 %v5768
    %6376 = vmatpush1.bf16.msra.mxu0 %v5767
    %6377 = vmatprep.subr.bf16.mxu0 %v5762
    %6378 = vmatpush1.bf16.msra.mxu0 %v5761
    %6379 = vmatprep.subr.bf16.mxu0 %v5756
    %6380 = vmatpush1.bf16.msra.mxu0 %v5755
    %6381 = vmatprep.subr.bf16.mxu0 %v5750
    %6382 = vmatpush1.bf16.msra.mxu0 %v5749
    %6383 = vmatprep.subr.bf16.mxu0 %v5744
    %6384 = vmatpush1.bf16.msra.mxu0 %v5743
    %6385 = vmatprep.subr.bf16.mxu0 %v5738
    %6386 = vmatpush1.bf16.msra.mxu0 %v5737
    %6387 = vmatprep.subr.bf16.mxu0 %v5732
    %6388 = vmatpush1.bf16.msra.mxu0 %v5731
    %6389 = vmatprep.subr.bf16.mxu0 %v5822
    %6390 = vmatpush2.bf16.msra.mxu0 %v5821
    %6391 = vmatprep.subr.bf16.mxu0 %v5816
    %6392 = vmatpush2.bf16.msra.mxu0 %v5815
    %6393 = vmatprep.subr.bf16.mxu0 %v5810
    %6394 = vmatpush2.bf16.msra.mxu0 %v5809
    %6395 = vmatprep.subr.bf16.mxu0 %v5804
    %6396 = vmatpush2.bf16.msra.mxu0 %v5803
    %6397 = vmatprep.subr.bf16.mxu0 %v5798
    %6398 = vmatpush2.bf16.msra.mxu0 %v5797
    %6399 = vmatprep.subr.bf16.mxu0 %v5792
    %6400 = vmatpush2.bf16.msra.mxu0 %v5791
    %6401 = vmatprep.subr.bf16.mxu0 %v5786
    %6402 = vmatpush2.bf16.msra.mxu0 %v5785
    %6403 = vmatprep.subr.bf16.mxu0 %v5780
    %6404 = vmatpush2.bf16.msra.mxu0 %v5779
    %6405 = vmatprep.mubr.bf16.mxu0 %v4446
    %6406 = vmatmul.mubr.bf16.gmra.mxu0 %v4445
    %v6407 = vpop.f32.mrf.mxu0
    %v6408 = vadd.f32 %v6367, %v6407
    %v6409 = vpop.f32.mrf.mxu0
    %v6410 = vadd.f32 %v6369, %v6409
    %v6411 = vpop.f32.mrf.mxu0
    %v6412 = vpop.f32.mrf.mxu0
    %6413 = vdwg.mxu0
    %6414 = vmatprep.subr.bf16.mxu0 %v5870
    %6415 = vmatpush1.bf16.msra.mxu0 %v5869
    %6416 = vmatprep.subr.bf16.mxu0 %v5864
    %6417 = vmatpush1.bf16.msra.mxu0 %v5863
    %6418 = vmatprep.subr.bf16.mxu0 %v5858
    %6419 = vmatpush1.bf16.msra.mxu0 %v5857
    %6420 = vmatprep.subr.bf16.mxu0 %v5852
    %6421 = vmatpush1.bf16.msra.mxu0 %v5851
    %6422 = vmatprep.subr.bf16.mxu0 %v5846
    %6423 = vmatpush1.bf16.msra.mxu0 %v5845
    %6424 = vmatprep.subr.bf16.mxu0 %v5840
    %6425 = vmatpush1.bf16.msra.mxu0 %v5839
    %6426 = vmatprep.subr.bf16.mxu0 %v5834
    %6427 = vmatpush1.bf16.msra.mxu0 %v5833
    %6428 = vmatprep.subr.bf16.mxu0 %v5828
    %6429 = vmatpush1.bf16.msra.mxu0 %v5827
    %6430 = vmatprep.subr.bf16.mxu0 %v5918
    %6431 = vmatpush2.bf16.msra.mxu0 %v5917
    %6432 = vmatprep.subr.bf16.mxu0 %v5912
    %6433 = vmatpush2.bf16.msra.mxu0 %v5911
    %6434 = vmatprep.subr.bf16.mxu0 %v5906
    %6435 = vmatpush2.bf16.msra.mxu0 %v5905
    %6436 = vmatprep.subr.bf16.mxu0 %v5900
    %6437 = vmatpush2.bf16.msra.mxu0 %v5899
    %6438 = vmatprep.subr.bf16.mxu0 %v5894
    %6439 = vmatpush2.bf16.msra.mxu0 %v5893
    %6440 = vmatprep.subr.bf16.mxu0 %v5888
    %6441 = vmatpush2.bf16.msra.mxu0 %v5887
    %6442 = vmatprep.subr.bf16.mxu0 %v5882
    %6443 = vmatpush2.bf16.msra.mxu0 %v5881
    %6444 = vmatprep.subr.bf16.mxu0 %v5876
    %6445 = vmatpush2.bf16.msra.mxu0 %v5875
    %6446 = vmatprep.mubr.bf16.mxu0 %v4448
    %6447 = vmatmul.mubr.bf16.gmra.mxu0 %v4447
    %v6448 = vpop.f32.mrf.mxu0
    %v6449 = vadd.f32 %v6408, %v6448
    %v6450 = vpop.f32.mrf.mxu0
    %v6451 = vadd.f32 %v6410, %v6450
    %v6452 = vpop.f32.mrf.mxu0
    %v6453 = vpop.f32.mrf.mxu0
    %6454 = vdwg.mxu0
    %6455 = vmatprep.subr.bf16.mxu0 %v5680
    %6456 = vmatpush1.bf16.msra.mxu0 %v5679
    %6457 = vmatprep.subr.bf16.mxu0 %v5674
    %6458 = vmatpush1.bf16.msra.mxu0 %v5673
    %6459 = vmatprep.subr.bf16.mxu0 %v5668
    %6460 = vmatpush1.bf16.msra.mxu0 %v5667
    %6461 = vmatprep.subr.bf16.mxu0 %v5662
    %6462 = vmatpush1.bf16.msra.mxu0 %v5661
    %6463 = vmatprep.subr.bf16.mxu0 %v5656
    %6464 = vmatpush1.bf16.msra.mxu0 %v5655
    %6465 = vmatprep.subr.bf16.mxu0 %v5650
    %6466 = vmatpush1.bf16.msra.mxu0 %v5649
    %6467 = vmatprep.subr.bf16.mxu0 %v5644
    %6468 = vmatpush1.bf16.msra.mxu0 %v5643
    %6469 = vmatprep.subr.bf16.mxu0 %v5638
    %6470 = vmatpush1.bf16.msra.mxu0 %v5637
    %6471 = vmatprep.subr.bf16.mxu0 %v5728
    %6472 = vmatpush2.bf16.msra.mxu0 %v5727
    %6473 = vmatprep.subr.bf16.mxu0 %v5722
    %6474 = vmatpush2.bf16.msra.mxu0 %v5721
    %6475 = vmatprep.subr.bf16.mxu0 %v5716
    %6476 = vmatpush2.bf16.msra.mxu0 %v5715
    %6477 = vmatprep.subr.bf16.mxu0 %v5710
    %6478 = vmatpush2.bf16.msra.mxu0 %v5709
    %6479 = vmatprep.subr.bf16.mxu0 %v5704
    %6480 = vmatpush2.bf16.msra.mxu0 %v5703
    %6481 = vmatprep.subr.bf16.mxu0 %v5698
    %6482 = vmatpush2.bf16.msra.mxu0 %v5697
    %6483 = vmatprep.subr.bf16.mxu0 %v5692
    %6484 = vmatpush2.bf16.msra.mxu0 %v5691
    %6485 = vmatprep.subr.bf16.mxu0 %v5686
    %6486 = vmatpush2.bf16.msra.mxu0 %v5685
    %6487 = vmatprep.mubr.bf16.mxu0 %v4444
    %6488 = vmatmul.mubr.bf16.gmra.mxu0 %v4443
    %v6489 = vpop.f32.mrf.mxu0
    %v6490 = vadd.f32 %v4758, %v6489
    %v6491 = vpop.f32.mrf.mxu0
    %v6492 = vadd.f32 %v4762, %v6491
    %v6493 = vpop.f32.mrf.mxu0
    %v6494 = vpop.f32.mrf.mxu0
    %6495 = vdwg.mxu0
    %6496 = vmatprep.subr.bf16.mxu0 %v5776
    %6497 = vmatpush1.bf16.msra.mxu0 %v5775
    %6498 = vmatprep.subr.bf16.mxu0 %v5770
    %6499 = vmatpush1.bf16.msra.mxu0 %v5769
    %6500 = vmatprep.subr.bf16.mxu0 %v5764
    %6501 = vmatpush1.bf16.msra.mxu0 %v5763
    %6502 = vmatprep.subr.bf16.mxu0 %v5758
    %6503 = vmatpush1.bf16.msra.mxu0 %v5757
    %6504 = vmatprep.subr.bf16.mxu0 %v5752
    %6505 = vmatpush1.bf16.msra.mxu0 %v5751
    %6506 = vmatprep.subr.bf16.mxu0 %v5746
    %6507 = vmatpush1.bf16.msra.mxu0 %v5745
    %6508 = vmatprep.subr.bf16.mxu0 %v5740
    %6509 = vmatpush1.bf16.msra.mxu0 %v5739
    %6510 = vmatprep.subr.bf16.mxu0 %v5734
    %6511 = vmatpush1.bf16.msra.mxu0 %v5733
    %6512 = vmatprep.subr.bf16.mxu0 %v5824
    %6513 = vmatpush2.bf16.msra.mxu0 %v5823
    %6514 = vmatprep.subr.bf16.mxu0 %v5818
    %6515 = vmatpush2.bf16.msra.mxu0 %v5817
    %6516 = vmatprep.subr.bf16.mxu0 %v5812
    %6517 = vmatpush2.bf16.msra.mxu0 %v5811
    %6518 = vmatprep.subr.bf16.mxu0 %v5806
    %6519 = vmatpush2.bf16.msra.mxu0 %v5805
    %6520 = vmatprep.subr.bf16.mxu0 %v5800
    %6521 = vmatpush2.bf16.msra.mxu0 %v5799
    %6522 = vmatprep.subr.bf16.mxu0 %v5794
    %6523 = vmatpush2.bf16.msra.mxu0 %v5793
    %6524 = vmatprep.subr.bf16.mxu0 %v5788
    %6525 = vmatpush2.bf16.msra.mxu0 %v5787
    %6526 = vmatprep.subr.bf16.mxu0 %v5782
    %6527 = vmatpush2.bf16.msra.mxu0 %v5781
    %6528 = vmatprep.mubr.bf16.mxu0 %v4446
    %6529 = vmatmul.mubr.bf16.gmra.mxu0 %v4445
    %v6530 = vpop.f32.mrf.mxu0
    %v6531 = vadd.f32 %v6490, %v6530
    %v6532 = vpop.f32.mrf.mxu0
    %v6533 = vadd.f32 %v6492, %v6532
    %v6534 = vpop.f32.mrf.mxu0
    %v6535 = vpop.f32.mrf.mxu0
    %6536 = vdwg.mxu0
    %6537 = vmatprep.subr.bf16.mxu0 %v5872
    %6538 = vmatpush1.bf16.msra.mxu0 %v5871
    %6539 = vmatprep.subr.bf16.mxu0 %v5866
    %6540 = vmatpush1.bf16.msra.mxu0 %v5865
    %6541 = vmatprep.subr.bf16.mxu0 %v5860
    %6542 = vmatpush1.bf16.msra.mxu0 %v5859
    %6543 = vmatprep.subr.bf16.mxu0 %v5854
    %6544 = vmatpush1.bf16.msra.mxu0 %v5853
    %6545 = vmatprep.subr.bf16.mxu0 %v5848
    %6546 = vmatpush1.bf16.msra.mxu0 %v5847
    %6547 = vmatprep.subr.bf16.mxu0 %v5842
    %6548 = vmatpush1.bf16.msra.mxu0 %v5841
    %6549 = vmatprep.subr.bf16.mxu0 %v5836
    %6550 = vmatpush1.bf16.msra.mxu0 %v5835
    %6551 = vmatprep.subr.bf16.mxu0 %v5830
    %6552 = vmatpush1.bf16.msra.mxu0 %v5829
    %6553 = vmatprep.subr.bf16.mxu0 %v5920
    %6554 = vmatpush2.bf16.msra.mxu0 %v5919
    %6555 = vmatprep.subr.bf16.mxu0 %v5914
    %6556 = vmatpush2.bf16.msra.mxu0 %v5913
    %6557 = vmatprep.subr.bf16.mxu0 %v5908
    %6558 = vmatpush2.bf16.msra.mxu0 %v5907
    %6559 = vmatprep.subr.bf16.mxu0 %v5902
    %6560 = vmatpush2.bf16.msra.mxu0 %v5901
    %6561 = vmatprep.subr.bf16.mxu0 %v5896
    %6562 = vmatpush2.bf16.msra.mxu0 %v5895
    %6563 = vmatprep.subr.bf16.mxu0 %v5890
    %6564 = vmatpush2.bf16.msra.mxu0 %v5889
    %6565 = vmatprep.subr.bf16.mxu0 %v5884
    %6566 = vmatpush2.bf16.msra.mxu0 %v5883
    %6567 = vmatprep.subr.bf16.mxu0 %v5878
    %6568 = vmatpush2.bf16.msra.mxu0 %v5877
    %6569 = vmatprep.mubr.bf16.mxu0 %v4448
    %6570 = vmatmul.mubr.bf16.gmra.mxu0 %v4447
    %v6571 = vpop.f32.mrf.mxu0
    %v6572 = vadd.f32 %v6531, %v6571
    %v6573 = vpop.f32.mrf.mxu0
    %v6574 = vadd.f32 %v6533, %v6573
    %v6575 = vpop.f32.mrf.mxu0
    %v6576 = vpop.f32.mrf.mxu0
    %6577 = vdwg.mxu0
    %v6578 = vmax.f32 %v6326, 0.0
    %v6579 = vmax.f32 %v6328, 0.0
    %v6580 = vmax.f32 %v6449, 0.0
    %v6581 = vmax.f32 %v6451, 0.0
    %v6582 = vmax.f32 %v6572, 0.0
    %v6583 = vmax.f32 %v6574, 0.0
    %v6584 = vpack.c.bf16 %v6578, %v6578
    %v6585 = vpack.c.bf16 %v6579, %v6579
    %v6586 = vpack.c.bf16 %v6580, %v6580
    %v6587 = vpack.c.bf16 %v6581, %v6581
    %v6588 = vpack.c.bf16 %v6582, %v6582
    %v6589 = vpack.c.bf16 %v6583, %v6583
    %v6590 = vld [vmem:[#allocation25] sm:$0xf]
    %v6591 = vld [vmem:[#allocation25 + $0x4] sm:$0xf]
    %v6592 = vld [vmem:[#allocation25 + $0x8] sm:$0xf]
    %v6593 = vld [vmem:[#allocation25 + $0xc] sm:$0xf]
    %v6594 = vld [vmem:[#allocation25 + $0x10] sm:$0xf]
    %v6595 = vld [vmem:[#allocation25 + $0x14] sm:$0xf]
    %v6596 = vld [vmem:[#allocation25 + $0x18] sm:$0xf]
    %v6597 = vld [vmem:[#allocation25 + $0x1c] sm:$0xf]
    %v6598 = vld [vmem:[#allocation25 + $0x20] sm:$0xf]
    %v6599 = vld [vmem:[#allocation25 + $0x24] sm:$0xf]
    %v6600 = vld [vmem:[#allocation25 + $0x28] sm:$0xf]
    %v6601 = vld [vmem:[#allocation25 + $0x2c] sm:$0xf]
    %v6602 = vld [vmem:[#allocation25 + $0x30] sm:$0xf]
    %v6603 = vld [vmem:[#allocation25 + $0x34] sm:$0xf]
    %v6604 = vld [vmem:[#allocation25 + $0x38] sm:$0xf]
    %v6605 = vld [vmem:[#allocation25 + $0x3c] sm:$0xf]
    %v6606 = vld [vmem:[#allocation25 + $0x40] sm:$0xf]
    %v6607 = vld [vmem:[#allocation25 + $0x44] sm:$0xf]
    %v6608 = vld [vmem:[#allocation25 + $0x48] sm:$0xf]
    %v6609 = vld [vmem:[#allocation25 + $0x4c] sm:$0xf]
    %v6610 = vld [vmem:[#allocation25 + $0x50] sm:$0xf]
    %v6611 = vld [vmem:[#allocation25 + $0x54] sm:$0xf]
    %v6612 = vld [vmem:[#allocation25 + $0x58] sm:$0xf]
    %v6613 = vld [vmem:[#allocation25 + $0x5c] sm:$0xf]
    %v6614 = vld [vmem:[#allocation25 + $0x60] sm:$0xf]
    %v6615 = vld [vmem:[#allocation25 + $0x64] sm:$0xf]
    %v6616 = vld [vmem:[#allocation25 + $0x68] sm:$0xf]
    %v6617 = vld [vmem:[#allocation25 + $0x6c] sm:$0xf]
    %v6618 = vld [vmem:[#allocation25 + $0x70] sm:$0xf]
    %v6619 = vld [vmem:[#allocation25 + $0x74] sm:$0xf]
    %v6620 = vld [vmem:[#allocation25 + $0x78] sm:$0xf]
    %v6621 = vld [vmem:[#allocation25 + $0x7c] sm:$0xf]
    %v6622 = vld [vmem:[#allocation25 + $0x80] sm:$0xf]
    %v6623 = vld [vmem:[#allocation25 + $0x84] sm:$0xf]
    %v6624 = vld [vmem:[#allocation25 + $0x88] sm:$0xf]
    %v6625 = vld [vmem:[#allocation25 + $0x8c] sm:$0xf]
    %v6626 = vld [vmem:[#allocation25 + $0x90] sm:$0xf]
    %v6627 = vld [vmem:[#allocation25 + $0x94] sm:$0xf]
    %v6628 = vld [vmem:[#allocation25 + $0x98] sm:$0xf]
    %v6629 = vld [vmem:[#allocation25 + $0x9c] sm:$0xf]
    %v6630 = vld [vmem:[#allocation25 + $0xa0] sm:$0xf]
    %v6631 = vld [vmem:[#allocation25 + $0xa4] sm:$0xf]
    %v6632 = vld [vmem:[#allocation25 + $0xa8] sm:$0xf]
    %v6633 = vld [vmem:[#allocation25 + $0xac] sm:$0xf]
    %v6634 = vld [vmem:[#allocation25 + $0xb0] sm:$0xf]
    %v6635 = vld [vmem:[#allocation25 + $0xb4] sm:$0xf]
    %v6636 = vld [vmem:[#allocation25 + $0xb8] sm:$0xf]
    %v6637 = vld [vmem:[#allocation25 + $0xbc] sm:$0xf]
    %v6638 = vld [vmem:[#allocation25 + $0xc0] sm:$0xf]
    %v6639 = vld [vmem:[#allocation25 + $0xc4] sm:$0xf]
    %v6640 = vld [vmem:[#allocation25 + $0xc8] sm:$0xf]
    %v6641 = vld [vmem:[#allocation25 + $0xcc] sm:$0xf]
    %v6642 = vld [vmem:[#allocation25 + $0xd0] sm:$0xf]
    %v6643 = vld [vmem:[#allocation25 + $0xd4] sm:$0xf]
    %v6644 = vld [vmem:[#allocation25 + $0xd8] sm:$0xf]
    %v6645 = vld [vmem:[#allocation25 + $0xdc] sm:$0xf]
    %v6646 = vld [vmem:[#allocation25 + $0xe0] sm:$0xf]
    %v6647 = vld [vmem:[#allocation25 + $0xe4] sm:$0xf]
    %v6648 = vld [vmem:[#allocation25 + $0xe8] sm:$0xf]
    %v6649 = vld [vmem:[#allocation25 + $0xec] sm:$0xf]
    %v6650 = vld [vmem:[#allocation25 + $0xf0] sm:$0xf]
    %v6651 = vld [vmem:[#allocation25 + $0xf4] sm:$0xf]
    %v6652 = vld [vmem:[#allocation25 + $0xf8] sm:$0xf]
    %v6653 = vld [vmem:[#allocation25 + $0xfc] sm:$0xf]
    %v6654 = vld [vmem:[#allocation25 + $0x100] sm:$0xf]
    %v6655 = vld [vmem:[#allocation25 + $0x104] sm:$0xf]
    %v6656 = vld [vmem:[#allocation25 + $0x108] sm:$0xf]
    %v6657 = vld [vmem:[#allocation25 + $0x10c] sm:$0xf]
    %v6658 = vld [vmem:[#allocation25 + $0x110] sm:$0xf]
    %v6659 = vld [vmem:[#allocation25 + $0x114] sm:$0xf]
    %v6660 = vld [vmem:[#allocation25 + $0x118] sm:$0xf]
    %v6661 = vld [vmem:[#allocation25 + $0x11c] sm:$0xf]
    %v6662 = vld [vmem:[#allocation25 + $0x120] sm:$0xf]
    %v6663 = vld [vmem:[#allocation25 + $0x124] sm:$0xf]
    %v6664 = vld [vmem:[#allocation25 + $0x128] sm:$0xf]
    %v6665 = vld [vmem:[#allocation25 + $0x12c] sm:$0xf]
    %v6666 = vld [vmem:[#allocation25 + $0x130] sm:$0xf]
    %v6667 = vld [vmem:[#allocation25 + $0x134] sm:$0xf]
    %v6668 = vld [vmem:[#allocation25 + $0x138] sm:$0xf]
    %v6669 = vld [vmem:[#allocation25 + $0x13c] sm:$0xf]
    %v6670 = vld [vmem:[#allocation25 + $0x140] sm:$0xf]
    %v6671 = vld [vmem:[#allocation25 + $0x144] sm:$0xf]
    %v6672 = vld [vmem:[#allocation25 + $0x148] sm:$0xf]
    %v6673 = vld [vmem:[#allocation25 + $0x14c] sm:$0xf]
    %v6674 = vld [vmem:[#allocation25 + $0x150] sm:$0xf]
    %v6675 = vld [vmem:[#allocation25 + $0x154] sm:$0xf]
    %v6676 = vld [vmem:[#allocation25 + $0x158] sm:$0xf]
    %v6677 = vld [vmem:[#allocation25 + $0x15c] sm:$0xf]
    %v6678 = vld [vmem:[#allocation25 + $0x160] sm:$0xf]
    %v6679 = vld [vmem:[#allocation25 + $0x164] sm:$0xf]
    %v6680 = vld [vmem:[#allocation25 + $0x168] sm:$0xf]
    %v6681 = vld [vmem:[#allocation25 + $0x16c] sm:$0xf]
    %v6682 = vld [vmem:[#allocation25 + $0x170] sm:$0xf]
    %v6683 = vld [vmem:[#allocation25 + $0x174] sm:$0xf]
    %v6684 = vld [vmem:[#allocation25 + $0x178] sm:$0xf]
    %v6685 = vld [vmem:[#allocation25 + $0x17c] sm:$0xf]
    %v6686 = vld [vmem:[#allocation26] sm:$0x1]
    %v6688 = vlaneseq
    %v6689 = vshrl.u32 %v6688, 7
    %v6690 = vsub.s32 0, %v6689
    %v6691 = vrot.slane %v6686, %v6690
    %v6789 = vunpack.c.l.b16 %v6590
    %v6790 = vunpack.c.l.b16 %v6591
    %v6791 = vunpack.c.l.b16 %v6592
    %v6792 = vunpack.c.l.b16 %v6593
    %v6793 = vunpack.c.l.b16 %v6594
    %v6794 = vunpack.c.l.b16 %v6595
    %v6795 = vunpack.c.l.b16 %v6596
    %v6796 = vunpack.c.l.b16 %v6597
    %v6797 = vunpack.c.l.b16 %v6598
    %v6798 = vunpack.c.l.b16 %v6599
    %v6799 = vunpack.c.l.b16 %v6600
    %v6800 = vunpack.c.l.b16 %v6601
    %v6801 = vunpack.c.l.b16 %v6602
    %v6802 = vunpack.c.l.b16 %v6603
    %v6803 = vunpack.c.l.b16 %v6604
    %v6804 = vunpack.c.l.b16 %v6605
    %v6805 = vunpack.c.l.b16 %v6606
    %v6806 = vunpack.c.l.b16 %v6607
    %v6807 = vunpack.c.l.b16 %v6608
    %v6808 = vunpack.c.l.b16 %v6609
    %v6809 = vunpack.c.l.b16 %v6610
    %v6810 = vunpack.c.l.b16 %v6611
    %v6811 = vunpack.c.l.b16 %v6612
    %v6812 = vunpack.c.l.b16 %v6613
    %v6813 = vunpack.c.l.b16 %v6614
    %v6814 = vunpack.c.l.b16 %v6615
    %v6815 = vunpack.c.l.b16 %v6616
    %v6816 = vunpack.c.l.b16 %v6617
    %v6817 = vunpack.c.l.b16 %v6618
    %v6818 = vunpack.c.l.b16 %v6619
    %v6819 = vunpack.c.l.b16 %v6620
    %v6820 = vunpack.c.l.b16 %v6621
    %v6821 = vunpack.c.l.b16 %v6622
    %v6822 = vunpack.c.l.b16 %v6623
    %v6823 = vunpack.c.l.b16 %v6624
    %v6824 = vunpack.c.l.b16 %v6625
    %v6825 = vunpack.c.l.b16 %v6626
    %v6826 = vunpack.c.l.b16 %v6627
    %v6827 = vunpack.c.l.b16 %v6628
    %v6828 = vunpack.c.l.b16 %v6629
    %v6829 = vunpack.c.l.b16 %v6630
    %v6830 = vunpack.c.l.b16 %v6631
    %v6831 = vunpack.c.l.b16 %v6632
    %v6832 = vunpack.c.l.b16 %v6633
    %v6833 = vunpack.c.l.b16 %v6634
    %v6834 = vunpack.c.l.b16 %v6635
    %v6835 = vunpack.c.l.b16 %v6636
    %v6836 = vunpack.c.l.b16 %v6637
    %v6837 = vunpack.c.l.b16 %v6638
    %v6838 = vunpack.c.l.b16 %v6639
    %v6839 = vunpack.c.l.b16 %v6640
    %v6840 = vunpack.c.l.b16 %v6641
    %v6841 = vunpack.c.l.b16 %v6642
    %v6842 = vunpack.c.l.b16 %v6643
    %v6843 = vunpack.c.l.b16 %v6644
    %v6844 = vunpack.c.l.b16 %v6645
    %v6845 = vunpack.c.l.b16 %v6646
    %v6846 = vunpack.c.l.b16 %v6647
    %v6847 = vunpack.c.l.b16 %v6648
    %v6848 = vunpack.c.l.b16 %v6649
    %v6849 = vunpack.c.l.b16 %v6650
    %v6850 = vunpack.c.l.b16 %v6651
    %v6851 = vunpack.c.l.b16 %v6652
    %v6852 = vunpack.c.l.b16 %v6653
    %v6853 = vunpack.c.l.b16 %v6654
    %v6854 = vunpack.c.l.b16 %v6655
    %v6855 = vunpack.c.l.b16 %v6656
    %v6856 = vunpack.c.l.b16 %v6657
    %v6857 = vunpack.c.l.b16 %v6658
    %v6858 = vunpack.c.l.b16 %v6659
    %v6859 = vunpack.c.l.b16 %v6660
    %v6860 = vunpack.c.l.b16 %v6661
    %v6861 = vunpack.c.l.b16 %v6662
    %v6862 = vunpack.c.l.b16 %v6663
    %v6863 = vunpack.c.l.b16 %v6664
    %v6864 = vunpack.c.l.b16 %v6665
    %v6865 = vunpack.c.l.b16 %v6666
    %v6866 = vunpack.c.l.b16 %v6667
    %v6867 = vunpack.c.l.b16 %v6668
    %v6868 = vunpack.c.l.b16 %v6669
    %v6869 = vunpack.c.l.b16 %v6670
    %v6870 = vunpack.c.l.b16 %v6671
    %v6871 = vunpack.c.l.b16 %v6672
    %v6872 = vunpack.c.l.b16 %v6673
    %v6873 = vunpack.c.l.b16 %v6674
    %v6874 = vunpack.c.l.b16 %v6675
    %v6875 = vunpack.c.l.b16 %v6676
    %v6876 = vunpack.c.l.b16 %v6677
    %v6877 = vunpack.c.l.b16 %v6678
    %v6878 = vunpack.c.l.b16 %v6679
    %v6879 = vunpack.c.l.b16 %v6680
    %v6880 = vunpack.c.l.b16 %v6681
    %v6881 = vunpack.c.l.b16 %v6682
    %v6882 = vunpack.c.l.b16 %v6683
    %v6883 = vunpack.c.l.b16 %v6684
    %v6884 = vunpack.c.l.b16 %v6685
    %v6885 = vpack.c.b16 %v6790, %v6789
    %v6886 = vpack.c.b16 %v6792, %v6791
    %v6887 = vpack.c.b16 %v6794, %v6793
    %v6888 = vpack.c.b16 %v6796, %v6795
    %v6889 = vpack.c.b16 %v6798, %v6797
    %v6890 = vpack.c.b16 %v6800, %v6799
    %v6891 = vpack.c.b16 %v6802, %v6801
    %v6892 = vpack.c.b16 %v6804, %v6803
    %v6893 = vpack.c.b16 %v6806, %v6805
    %v6894 = vpack.c.b16 %v6808, %v6807
    %v6895 = vpack.c.b16 %v6810, %v6809
    %v6896 = vpack.c.b16 %v6812, %v6811
    %v6897 = vpack.c.b16 %v6814, %v6813
    %v6898 = vpack.c.b16 %v6816, %v6815
    %v6899 = vpack.c.b16 %v6818, %v6817
    %v6900 = vpack.c.b16 %v6820, %v6819
    %v6901 = vpack.c.b16 %v6822, %v6821
    %v6902 = vpack.c.b16 %v6824, %v6823
    %v6903 = vpack.c.b16 %v6826, %v6825
    %v6904 = vpack.c.b16 %v6828, %v6827
    %v6905 = vpack.c.b16 %v6830, %v6829
    %v6906 = vpack.c.b16 %v6832, %v6831
    %v6907 = vpack.c.b16 %v6834, %v6833
    %v6908 = vpack.c.b16 %v6836, %v6835
    %v6909 = vpack.c.b16 %v6838, %v6837
    %v6910 = vpack.c.b16 %v6840, %v6839
    %v6911 = vpack.c.b16 %v6842, %v6841
    %v6912 = vpack.c.b16 %v6844, %v6843
    %v6913 = vpack.c.b16 %v6846, %v6845
    %v6914 = vpack.c.b16 %v6848, %v6847
    %v6915 = vpack.c.b16 %v6850, %v6849
    %v6916 = vpack.c.b16 %v6852, %v6851
    %v6917 = vpack.c.b16 %v6854, %v6853
    %v6918 = vpack.c.b16 %v6856, %v6855
    %v6919 = vpack.c.b16 %v6858, %v6857
    %v6920 = vpack.c.b16 %v6860, %v6859
    %v6921 = vpack.c.b16 %v6862, %v6861
    %v6922 = vpack.c.b16 %v6864, %v6863
    %v6923 = vpack.c.b16 %v6866, %v6865
    %v6924 = vpack.c.b16 %v6868, %v6867
    %v6925 = vpack.c.b16 %v6870, %v6869
    %v6926 = vpack.c.b16 %v6872, %v6871
    %v6927 = vpack.c.b16 %v6874, %v6873
    %v6928 = vpack.c.b16 %v6876, %v6875
    %v6929 = vpack.c.b16 %v6878, %v6877
    %v6930 = vpack.c.b16 %v6880, %v6879
    %v6931 = vpack.c.b16 %v6882, %v6881
    %v6932 = vpack.c.b16 %v6884, %v6883
    %6981 = vmatprep.subr.bf16.mxu0 0
    %6982 = vmatpush1.bf16.msra.mxu0 %v6892
    %6983 = vmatprep.subr.bf16.mxu0 0
    %6984 = vmatpush1.bf16.msra.mxu0 %v6891
    %6985 = vmatprep.subr.bf16.mxu0 0
    %6986 = vmatpush1.bf16.msra.mxu0 %v6890
    %6987 = vmatprep.subr.bf16.mxu0 0
    %6988 = vmatpush1.bf16.msra.mxu0 %v6889
    %6989 = vmatprep.subr.bf16.mxu0 0
    %6990 = vmatpush1.bf16.msra.mxu0 %v6888
    %6991 = vmatprep.subr.bf16.mxu0 0
    %6992 = vmatpush1.bf16.msra.mxu0 %v6887
    %6993 = vmatprep.subr.bf16.mxu0 0
    %6994 = vmatpush1.bf16.msra.mxu0 %v6886
    %6995 = vmatprep.subr.bf16.mxu0 0
    %6996 = vmatpush1.bf16.msra.mxu0 %v6885
    %6997 = vmatprep.subr.bf16.mxu0 0
    %6998 = vmatpush2.bf16.msra.mxu0 %v6900
    %6999 = vmatprep.subr.bf16.mxu0 0
    %7000 = vmatpush2.bf16.msra.mxu0 %v6899
    %7001 = vmatprep.subr.bf16.mxu0 0
    %7002 = vmatpush2.bf16.msra.mxu0 %v6898
    %7003 = vmatprep.subr.bf16.mxu0 0
    %7004 = vmatpush2.bf16.msra.mxu0 %v6897
    %7005 = vmatprep.subr.bf16.mxu0 0
    %7006 = vmatpush2.bf16.msra.mxu0 %v6896
    %7007 = vmatprep.subr.bf16.mxu0 0
    %7008 = vmatpush2.bf16.msra.mxu0 %v6895
    %7009 = vmatprep.subr.bf16.mxu0 0
    %7010 = vmatpush2.bf16.msra.mxu0 %v6894
    %7011 = vmatprep.subr.bf16.mxu0 0
    %7012 = vmatpush2.bf16.msra.mxu0 %v6893
    %7013 = vmatprep.mubr.bf16.mxu0 %v6585
    %7014 = vmatmul.mubr.bf16.gmra.mxu0 %v6584
    %v7015 = vpop.f32.mrf.mxu0
    %v7016 = vadd.f32 %v6691, %v7015
    %v7017 = vpop.f32.mrf.mxu0
    %v7018 = vpop.f32.mrf.mxu0
    %v7019 = vpop.f32.mrf.mxu0
    %7020 = vdwg.mxu0
    %7021 = vmatprep.subr.bf16.mxu0 0
    %7022 = vmatpush1.bf16.msra.mxu0 %v6908
    %7023 = vmatprep.subr.bf16.mxu0 0
    %7024 = vmatpush1.bf16.msra.mxu0 %v6907
    %7025 = vmatprep.subr.bf16.mxu0 0
    %7026 = vmatpush1.bf16.msra.mxu0 %v6906
    %7027 = vmatprep.subr.bf16.mxu0 0
    %7028 = vmatpush1.bf16.msra.mxu0 %v6905
    %7029 = vmatprep.subr.bf16.mxu0 0
    %7030 = vmatpush1.bf16.msra.mxu0 %v6904
    %7031 = vmatprep.subr.bf16.mxu0 0
    %7032 = vmatpush1.bf16.msra.mxu0 %v6903
    %7033 = vmatprep.subr.bf16.mxu0 0
    %7034 = vmatpush1.bf16.msra.mxu0 %v6902
    %7035 = vmatprep.subr.bf16.mxu0 0
    %7036 = vmatpush1.bf16.msra.mxu0 %v6901
    %7037 = vmatprep.subr.bf16.mxu0 0
    %7038 = vmatpush2.bf16.msra.mxu0 %v6916
    %7039 = vmatprep.subr.bf16.mxu0 0
    %7040 = vmatpush2.bf16.msra.mxu0 %v6915
    %7041 = vmatprep.subr.bf16.mxu0 0
    %7042 = vmatpush2.bf16.msra.mxu0 %v6914
    %7043 = vmatprep.subr.bf16.mxu0 0
    %7044 = vmatpush2.bf16.msra.mxu0 %v6913
    %7045 = vmatprep.subr.bf16.mxu0 0
    %7046 = vmatpush2.bf16.msra.mxu0 %v6912
    %7047 = vmatprep.subr.bf16.mxu0 0
    %7048 = vmatpush2.bf16.msra.mxu0 %v6911
    %7049 = vmatprep.subr.bf16.mxu0 0
    %7050 = vmatpush2.bf16.msra.mxu0 %v6910
    %7051 = vmatprep.subr.bf16.mxu0 0
    %7052 = vmatpush2.bf16.msra.mxu0 %v6909
    %7053 = vmatprep.mubr.bf16.mxu0 %v6587
    %7054 = vmatmul.mubr.bf16.gmra.mxu0 %v6586
    %v7055 = vpop.f32.mrf.mxu0
    %v7056 = vadd.f32 %v7016, %v7055
    %v7057 = vpop.f32.mrf.mxu0
    %v7058 = vpop.f32.mrf.mxu0
    %v7059 = vpop.f32.mrf.mxu0
    %7060 = vdwg.mxu0
    %7061 = vmatprep.subr.bf16.mxu0 0
    %7062 = vmatpush1.bf16.msra.mxu0 %v6924
    %7063 = vmatprep.subr.bf16.mxu0 0
    %7064 = vmatpush1.bf16.msra.mxu0 %v6923
    %7065 = vmatprep.subr.bf16.mxu0 0
    %7066 = vmatpush1.bf16.msra.mxu0 %v6922
    %7067 = vmatprep.subr.bf16.mxu0 0
    %7068 = vmatpush1.bf16.msra.mxu0 %v6921
    %7069 = vmatprep.subr.bf16.mxu0 0
    %7070 = vmatpush1.bf16.msra.mxu0 %v6920
    %7071 = vmatprep.subr.bf16.mxu0 0
    %7072 = vmatpush1.bf16.msra.mxu0 %v6919
    %7073 = vmatprep.subr.bf16.mxu0 0
    %7074 = vmatpush1.bf16.msra.mxu0 %v6918
    %7075 = vmatprep.subr.bf16.mxu0 0
    %7076 = vmatpush1.bf16.msra.mxu0 %v6917
    %7077 = vmatprep.subr.bf16.mxu0 0
    %7078 = vmatpush2.bf16.msra.mxu0 %v6932
    %7079 = vmatprep.subr.bf16.mxu0 0
    %7080 = vmatpush2.bf16.msra.mxu0 %v6931
    %7081 = vmatprep.subr.bf16.mxu0 0
    %7082 = vmatpush2.bf16.msra.mxu0 %v6930
    %7083 = vmatprep.subr.bf16.mxu0 0
    %7084 = vmatpush2.bf16.msra.mxu0 %v6929
    %7085 = vmatprep.subr.bf16.mxu0 0
    %7086 = vmatpush2.bf16.msra.mxu0 %v6928
    %7087 = vmatprep.subr.bf16.mxu0 0
    %7088 = vmatpush2.bf16.msra.mxu0 %v6927
    %7089 = vmatprep.subr.bf16.mxu0 0
    %7090 = vmatpush2.bf16.msra.mxu0 %v6926
    %7091 = vmatprep.subr.bf16.mxu0 0
    %7092 = vmatpush2.bf16.msra.mxu0 %v6925
    %7093 = vmatprep.mubr.bf16.mxu0 %v6589
    %7094 = vmatmul.mubr.bf16.gmra.mxu0 %v6588
    %v7095 = vpop.f32.mrf.mxu0
    %v7096 = vadd.f32 %v7056, %v7095
    %v7097 = vpop.f32.mrf.mxu0
    %v7098 = vpop.f32.mrf.mxu0
    %v7099 = vpop.f32.mrf.mxu0
    %7100 = vdwg.mxu0
    %v7101 = vtanh.pop %v7096
    %7102 = vst [vmem:[#allocation28] sm:$0xff] %v7101
    %7103 = vst [vmem:[#allocation29] sm:$0xff] %v3561
    %7104 = vst [vmem:[#allocation31] sm:$0xff] %v3570
    // Predicated region
    $region130: #{tpu_custom_call.1} parent=1 // pred_check
      _
    $region131: #{tpu_custom_call.1} parent=1 // pred_check_branch
      %7106 = sbr.rel (0) target = $region133
    $region132: #{tpu_custom_call.1} parent=1 // pred_region
      %s7108 = ssub.s32 128, 128
      %7109 = vsyncadd [#allocation4], %s7108
      %s7111 = sshll.u32 [#allocation28], 4
      %s7112 = int_to_ptr.vmem [resolvable:$true] %s7111
      %7114 = dma.vmem_to_hbm [thread:$0]  %s7112, 128, %s16, [#allocation4]
    $region133: #{tpu_custom_call.1} parent=1 // pred_fallthru
      _
    // Predicated region
    $region134: #{tpu_custom_call.1} parent=1 // pred_check
      _
    $region135: #{tpu_custom_call.1} parent=1 // pred_check_branch
      %7116 = sbr.rel (0) target = $region137
    $region136: #{tpu_custom_call.1} parent=1 // pred_region
      %s7118 = ssub.s32 128, 128
      %7119 = vsyncadd [#allocation30], %s7118
      %s7121 = sshll.u32 [#allocation29], 4
      %s7122 = int_to_ptr.vmem [resolvable:$true] %s7121
      %7124 = dma.vmem_to_hbm [thread:$0]  %s7122, 128, %s17, [#allocation30]
    $region137: #{tpu_custom_call.1} parent=1 // pred_fallthru
      _
    // Predicated region
    $region138: #{tpu_custom_call.1} parent=1 // pred_check
      _
    $region139: #{tpu_custom_call.1} parent=1 // pred_check_branch
      %7126 = sbr.rel (0) target = $region141
    $region140: #{tpu_custom_call.1} parent=1 // pred_region
      %s7128 = ssub.s32 128, 128
      %7129 = vsyncadd [#allocation30], %s7128
      %s7131 = sshll.u32 [#allocation31], 4
      %s7132 = int_to_ptr.vmem [resolvable:$true] %s7131
      %7134 = dma.vmem_to_hbm [thread:$0]  %s7132, 128, %s18, [#allocation30]
    $region141: #{tpu_custom_call.1} parent=1 // pred_fallthru
      _
    // Predicated region
    $region142: #{tpu_custom_call.1} parent=1 // pred_check
      _
    $region143: #{tpu_custom_call.1} parent=1 // pred_check_branch
      %7136 = sbr.rel (0) target = $region145
    $region144: #{tpu_custom_call.1} parent=1 // pred_region
      %7137 = dma.done [#allocation4], 128
    $region145: #{tpu_custom_call.1} parent=1 // pred_fallthru
      _
    // Predicated region
    $region146: #{tpu_custom_call.1} parent=1 // pred_check
      _
    $region147: #{tpu_custom_call.1} parent=1 // pred_check_branch
      %7139 = sbr.rel (0) target = $region149
    $region148: #{tpu_custom_call.1} parent=1 // pred_region
      %7140 = dma.done [#allocation30], 128
    $region149: #{tpu_custom_call.1} parent=1 // pred_fallthru
      _
    // Predicated region
    $region150: #{tpu_custom_call.1} parent=1 // pred_check
      _
    $region151: #{tpu_custom_call.1} parent=1 // pred_check_branch
      %7142 = sbr.rel (0) target = $region153
    $region152: #{tpu_custom_call.1} parent=1 // pred_region
      %7143 = dma.done [#allocation30], 128
    $region153: #{tpu_custom_call.1} parent=1 // pred_fallthru
      _
    %7144 = vsyncpa [#allocation3], 1
    %7145 = vsyncpa [#allocation6], 1
    %7146 = vsyncpa [#allocation9], 1
    %7147 = vsyncpa [#allocation12], 1
    %7148 = vsyncpa [#allocation15], 1
    %7149 = vsyncpa [#allocation18], 1
    %7150 = vsyncpa [#allocation21], 1
    %7151 = vsyncpa [#allocation24], 1
    %7152 = vsyncpa [#allocation27], 1
    %7153 = vsyncpa [#allocation4], 1
    %7154 = vsyncpa [#allocation30], 1

</llo_original>
